<compile_context>
chip_gen: v5e
topology: v5e:2x2
jax: 0.10.0
libtpu: 0.0.40
codegen_flags: <defaults>
</compile_context>

<pallas_src>
import math

import jax
import jax.numpy as jnp
from jax.experimental import pallas as pl
from jax.experimental.pallas import tpu as pltpu

# Small, module-consistent hyperparameters.
D_MODEL = 32
D_FF = 64
NUM_HEADS = 4
DH = D_MODEL // NUM_HEADS
NUM_LAYERS = 2
MAX_LEN = 16
VOCAB = 50
VOCAB_PAD = 128          # embedding table / logits padded to a lane-dense width
PAD_ID = 0
EPS = 1e-5
NEG = -1e9
LANES = 128


# ----------------------------------------------------------------------------
# Slab packing (all parameters / constants ride in a few lane-dense slabs)
# ----------------------------------------------------------------------------
WSPEC = [                                 # bf16 weight slab (packed at init)
    ("emb",    (VOCAB_PAD, D_MODEL)),
    ("wqkv_e", (D_MODEL, 3 * D_MODEL)),
    ("wo_e",   (D_MODEL, D_MODEL)),
    ("wf1e",   (D_MODEL, D_FF)),
    ("wf2e",   (D_FF, D_MODEL)),
    ("wqkv_d", (D_MODEL, 3 * D_MODEL)),
    ("wo_sa",  (D_MODEL, D_MODEL)),
    ("wq_ca",  (D_MODEL, D_MODEL)),
    ("wkv_ca", (D_MODEL, 2 * D_MODEL)),
    ("wo_ca",  (D_MODEL, D_MODEL)),
    ("wf1d",   (D_MODEL, D_FF)),
    ("wf2d",   (D_FF, D_MODEL)),
]

PSPEC = [                                 # f32 bias / LayerNorm slab (packed at init)
    ("bqkv_e", (1, 3 * D_MODEL)), ("bo_e", (1, D_MODEL)),
    ("g1e", (1, D_MODEL)), ("be1e", (1, D_MODEL)),
    ("bf1e", (1, D_FF)), ("bf2e", (1, D_MODEL)),
    ("g2e", (1, D_MODEL)), ("be2e", (1, D_MODEL)),
    ("bqkv_d", (1, 3 * D_MODEL)), ("bo_sa", (1, D_MODEL)),
    ("g1d", (1, D_MODEL)), ("be1d", (1, D_MODEL)),
    ("bq_ca", (1, D_MODEL)), ("bkv_ca", (1, 2 * D_MODEL)), ("bo_ca", (1, D_MODEL)),
    ("g2d", (1, D_MODEL)), ("be2d", (1, D_MODEL)),
    ("bf1d", (1, D_FF)), ("bf2d", (1, D_MODEL)),
    ("g3d", (1, D_MODEL)), ("be3d", (1, D_MODEL)),
]


def _layout(spec, align):
    """Row offsets (aligned) for each named tensor inside a [rows, 128] slab."""
    lay, off = {}, 0
    for name, (r, c) in spec:
        lay[name] = (off, r, c)
        off += -(-r // align) * align
    return lay, off


def _pack(spec, arrays, dtype, align):
    lay, total = _layout(spec, align)
    slab = jnp.zeros((total, LANES), dtype)
    for name, (r, c) in spec:
        a = jnp.asarray(arrays[name], dtype)
        assert a.shape == (r, c), (name, a.shape, (r, c))
        off = lay[name][0]
        slab = slab.at[off:off + r, :c].set(a)
    return slab, lay


# ----------------------------------------------------------------------------
# In-kernel helpers
# ----------------------------------------------------------------------------
def _bf(x):
    return x.astype(jnp.bfloat16)


def _mm(x, w):
    """x @ w with bf16 operands at the MXU and f32 accumulation (w already bf16)."""
    return jnp.dot(_bf(x), w, preferred_element_type=jnp.float32)


def _mm_nt(x, w):
    """x @ w.T via dot_general contracting the feature axis (no explicit .T)."""
    return jax.lax.dot_general(
        _bf(x), w, (((1,), (1,)), ((), ())),
        preferred_element_type=jnp.float32)


def _layer_norm(x, g, b):
    mu = jnp.mean(x, axis=-1, keepdims=True)
    var = jnp.mean(jnp.square(x - mu), axis=-1, keepdims=True)
    return (x - mu) * jax.lax.rsqrt(var + EPS) * g + b


# ----------------------------------------------------------------------------
# The fused transformer kernel (single invocation, everything VMEM-resident)
# ----------------------------------------------------------------------------
def make_kernel(rows_s, rows_t, wlay, play, dlay):
    n_rows = rows_s + rows_t

    def kernel(tok_ref, wslab_ref, pslab_ref, dslab_ref, out_ref):
        # Use-site ref reads: static slices are free views; the load happens
        # right next to the dot that consumes it (bounded live ranges).
        def w(name):
            off, r, c = wlay[name]
            return wslab_ref[off:off + r, 0:c]            # bf16

        def p(name):
            off, r, c = play[name]
            return pslab_ref[off:off + r, 0:c]            # f32 [1, c]

        def d(name):
            off, r, c = dlay[name]
            return dslab_ref[off:off + r, 0:c]            # f32

        def block_kv(k, v, hmask_bf):
            # [rk, D] -> head-blocked [H*rk, D]; block h keeps only head h's
            # lanes (exact zeros elsewhere, so unmasked q contributes nothing).
            kb = jnp.concatenate([_bf(k)] * NUM_HEADS, axis=0) * hmask_bf
            vb = jnp.concatenate([_bf(v)] * NUM_HEADS, axis=0) * hmask_bf
            return kb, vb

        def attend(q, kb, vb, bias_t, seg):
            # Blocked multi-head attention: one score matmul over the
            # head-blocked key axis [rq, H*rk]; softmax on the full 64-lane
            # slab (row max is shift-invariant per segment); per-head segment
            # sums via one small matmul with the 0/1 block-diagonal matrix;
            # one output matmul.  1/sqrt(dh) is folded into Wq at init.
            s = _mm_nt(q, kb) + bias_t                      # [rq, H*rk] f32
            s = s - jnp.max(s, axis=-1, keepdims=True)
            e = jnp.exp(s)
            den = jnp.dot(e, seg, preferred_element_type=jnp.float32)
            den = jnp.maximum(den, 1e-30)                   # all-masked-row guard
            prob = e * pl.reciprocal(den, approx=True)      # EUP slot
            return _mm(prob, vb)                            # [rq, D]

        def encoder_layer(x):
            qkv = _mm(x, w("wqkv_e")) + p("bqkv_e")         # fused QKV
            kb, vb = block_kv(qkv[:, D_MODEL:2 * D_MODEL],
                              qkv[:, 2 * D_MODEL:3 * D_MODEL],
                              _bf(d("hmask_s")))
            a = attend(qkv[:, 0:D_MODEL], kb, vb, d("enc_bias"), d("seg_s"))
            x = _layer_norm(_mm(a, w("wo_e")) + p("bo_e") + x, p("g1e"), p("be1e"))
            h = jnp.maximum(_mm(x, w("wf1e")) + p("bf1e"), 0.0)
            return _layer_norm(_mm(h, w("wf2e")) + p("bf2e") + x, p("g2e"), p("be2e"))

        def decoder_layer(y, kb_x, vb_x):
            qkv = _mm(y, w("wqkv_d")) + p("bqkv_d")         # fused QKV (self)
            kb, vb = block_kv(qkv[:, D_MODEL:2 * D_MODEL],
                              qkv[:, 2 * D_MODEL:3 * D_MODEL],
                              _bf(d("hmask_t")))
            a = attend(qkv[:, 0:D_MODEL], kb, vb, d("dec_bias"), d("seg_t"))
            y = _layer_norm(_mm(a, w("wo_sa")) + p("bo_sa") + y, p("g1d"), p("be1d"))
            q = _mm(y, w("wq_ca")) + p("bq_ca")             # cross-attention
            c = attend(q, kb_x, vb_x, d("cross_bias"), d("seg_s"))
            y = _layer_norm(_mm(c, w("wo_ca")) + p("bo_ca") + y, p("g2d"), p("be2d"))
            h = jnp.maximum(_mm(y, w("wf1d")) + p("bf1d"), 0.0)
            return _layer_norm(_mm(h, w("wf2d")) + p("bf2d") + y, p("g3d"), p("be3d"))

        # ---- shared embedding lookup (src + tgt rows in ONE one-hot matmul) + PE ----
        tok = tok_ref[...]                                  # [N, 1] int32
        vid = jax.lax.broadcasted_iota(jnp.int32, (n_rows, VOCAB_PAD), 1)
        one_hot = (vid == tok).astype(jnp.bfloat16)         # [N, VOCAB_PAD]
        xy = jnp.dot(one_hot, w("emb"), preferred_element_type=jnp.float32) + d("pe")

        # -------------------------- encoder stack --------------------------
        x = xy[0:rows_s, :]
        for _ in range(NUM_LAYERS):     # ModuleList([Encoder]*N) => shared weights
            x = encoder_layer(x)

        # Cross-attention K/V: decoder layers share weights and the encoder
        # output is layer-invariant -> project and head-block ONCE.
        kv = _mm(x, w("wkv_ca")) + p("bkv_ca")
        kb_x, vb_x = block_kv(kv[:, 0:D_MODEL], kv[:, D_MODEL:2 * D_MODEL],
                              _bf(d("hmask_s")))

        # -------------------------- decoder stack --------------------------
        y = xy[rows_s:n_rows, :]
        for _ in range(NUM_LAYERS):     # ModuleList([Decoder]*N) => shared weights
            y = decoder_layer(y, kb_x, vb_x)

        # ---- tied output projection + log-softmax (lane-dense [B*Tt, 128]) ----
        logits = _mm_nt(y, w("emb"))                        # y @ emb.T
        logits = jnp.where(d("vmask") > 0.0, logits, NEG)   # mask padded vocab
        mx = jnp.max(logits, axis=-1, keepdims=True)
        ex = jnp.exp(logits - mx)
        out_ref[...] = logits - mx - jnp.log(jnp.sum(ex, axis=-1, keepdims=True))

    return kernel


# ----------------------------------------------------------------------------
# Parameters
# ----------------------------------------------------------------------------
def make_positional_encoding(d_model, max_len):
    pos = jnp.arange(max_len, dtype=jnp.float32)[:, None]
    i = jnp.arange(0, d_model, 2, dtype=jnp.float32)
    div = jnp.exp(-math.log(10000.0) * i / d_model)
    pe = jnp.zeros((max_len, d_model), dtype=jnp.float32)
    pe = pe.at[:, 0::2].set(jnp.sin(pos * div))
    pe = pe.at[:, 1::2].set(jnp.cos(pos * div))
    return pe


def init_params(key):
    keys = iter(jax.random.split(key, 32))
    std = 0.02

    def rnd(shape):
        return (std * jax.random.normal(next(keys), shape)).astype(jnp.float32)

    scale = 1.0 / math.sqrt(DH)          # folded into Wq at init (constant fold)

    def fused_qkv():
        wq = rnd((D_MODEL, D_MODEL))
        wk = rnd((D_MODEL, D_MODEL))
        wv = rnd((D_MODEL, D_MODEL))
        return jnp.concatenate([wq * scale, wk, wv], axis=1)        # [D, 3D]

    emb = jnp.zeros((VOCAB_PAD, D_MODEL), jnp.float32).at[:VOCAB].set(
        rnd((VOCAB, D_MODEL)))

    warrays = {
        "emb": emb,
        "wqkv_e": fused_qkv(), "wo_e": rnd((D_MODEL, D_MODEL)),
        "wf1e": rnd((D_MODEL, D_FF)), "wf2e": rnd((D_FF, D_MODEL)),
        "wqkv_d": fused_qkv(), "wo_sa": rnd((D_MODEL, D_MODEL)),
        "wq_ca": rnd((D_MODEL, D_MODEL)) * scale,
        "wkv_ca": jnp.concatenate([rnd((D_MODEL, D_MODEL)),
                                   rnd((D_MODEL, D_MODEL))], axis=1),
        "wo_ca": rnd((D_MODEL, D_MODEL)),
        "wf1d": rnd((D_MODEL, D_FF)), "wf2d": rnd((D_FF, D_MODEL)),
    }
    parrays = {}
    for name, (r, c) in PSPEC:
        fill = jnp.ones if name.startswith("g") else jnp.zeros     # LN gains=1, rest=0
        parrays[name] = fill((r, c), jnp.float32)

    wslab, _ = _pack(WSPEC, warrays, jnp.bfloat16, 16)   # weights pre-cast to bf16
    pslab, _ = _pack(PSPEC, parrays, jnp.float32, 8)     # biases / LN params in f32
    return {"wslab": wslab, "pslab": pslab,
            "pe": make_positional_encoding(D_MODEL, MAX_LEN)}


# ----------------------------------------------------------------------------
# Forward wrapper (is_predict=False path of Transformer.forward)
# ----------------------------------------------------------------------------
@jax.jit
def transformer_forward(src_tokens, tgt_tokens, future_mask,
                        src_pad_mask, tgt_pad_mask, params):
    """src/tgt tokens: [B, T] int32; future_mask: [B, Tt, Tt] (1 = attend);
    pad masks: [B, 1, T] (1 = keep). Returns log-probs [B, Tt, VOCAB]."""
    B, Ts = src_tokens.shape
    _, Tt = tgt_tokens.shape
    rows_s, rows_t = B * Ts, B * Tt
    n_rows = rows_s + rows_t
    # head-blocked key axis must fit one lane slab at this packing
    assert NUM_HEADS * rows_s <= LANES and NUM_HEADS * rows_t <= LANES

    # -- glue: turn the PyTorch-style mask arguments into additive score biases
    #    over the flattened [B*T] row axis (block-diagonal in batch so the
    #    kernel needs no batch grid / batch loop). --
    src_keep = src_pad_mask.reshape(rows_s) > 0
    tgt_keep = tgt_pad_mask.reshape(rows_t) > 0
    bid_s = jnp.repeat(jnp.arange(B), Ts)
    bid_t = jnp.repeat(jnp.arange(B), Tt)
    pos_t = jnp.tile(jnp.arange(Tt), B)

    enc_bias = jnp.where((bid_s[:, None] == bid_s[None, :]) & src_keep[None, :],
                         0.0, NEG).astype(jnp.float32)
    fut = future_mask[bid_t[:, None], pos_t[:, None], pos_t[None, :]] > 0
    dec_bias = jnp.where((bid_t[:, None] == bid_t[None, :]) & fut & tgt_keep[None, :],
                         0.0, NEG).astype(jnp.float32)
    cross_bias = jnp.where((bid_t[:, None] == bid_s[None, :]) & src_keep[None, :],
                           0.0, NEG).astype(jnp.float32)

    # Head-blocking constants: 0/1 lane masks for the blocked K/V, 0/1
    # block-diagonal segment matrix for the per-head softmax denominator,
    # and the score bias tiled head-major along the packed key axis.
    def head_mask(rk):
        lane = jnp.arange(D_MODEL)[None, :]
        head = (jnp.arange(NUM_HEADS * rk) // rk)[:, None]
        return ((lane >= head * DH) & (lane < (head + 1) * DH)).astype(jnp.float32)

    def seg_mat(rk):
        s = jnp.arange(NUM_HEADS * rk) // rk
        return (s[:, None] == s[None, :]).astype(jnp.float32)

    pe_all = jnp.concatenate([jnp.tile(params["pe"][:Ts], (B, 1)),
                              jnp.tile(params["pe"][:Tt], (B, 1))], axis=0)
    vmask = (jnp.arange(VOCAB_PAD) < VOCAB).astype(jnp.float32)[None, :]

    dspec = [
        ("pe",         (n_rows, D_MODEL)),
        ("vmask",      (1, VOCAB_PAD)),
        ("hmask_s",    (NUM_HEADS * rows_s, D_MODEL)),
        ("hmask_t",    (NUM_HEADS * rows_t, D_MODEL)),
        ("seg_s",      (NUM_HEADS * rows_s, NUM_HEADS * rows_s)),
        ("seg_t",      (NUM_HEADS * rows_t, NUM_HEADS * rows_t)),
        ("enc_bias",   (rows_s, NUM_HEADS * rows_s)),
        ("dec_bias",   (rows_t, NUM_HEADS * rows_t)),
        ("cross_bias", (rows_t, NUM_HEADS * rows_s)),
    ]
    darrays = {
        "pe": pe_all, "vmask": vmask,
        "hmask_s": head_mask(rows_s), "hmask_t": head_mask(rows_t),
        "seg_s": seg_mat(rows_s), "seg_t": seg_mat(rows_t),
        "enc_bias": jnp.tile(enc_bias, (1, NUM_HEADS)),
        "dec_bias": jnp.tile(dec_bias, (1, NUM_HEADS)),
        "cross_bias": jnp.tile(cross_bias, (1, NUM_HEADS)),
    }
    dslab, dlay = _pack(dspec, darrays, jnp.float32, 8)

    tok = jnp.concatenate([src_tokens.reshape(rows_s),
                           tgt_tokens.reshape(rows_t)]).astype(jnp.int32)[:, None]

    kernel = make_kernel(rows_s, rows_t,
                         _layout(WSPEC, 16)[0], _layout(PSPEC, 8)[0], dlay)

    vmem = pl.BlockSpec(memory_space=pltpu.MemorySpace.VMEM)
    logp = pl.pallas_call(
        kernel,
        out_shape=jax.ShapeDtypeStruct((rows_t, VOCAB_PAD), jnp.float32),
        in_specs=[vmem, vmem, vmem, vmem],
        out_specs=vmem,
    )(tok, params["wslab"], params["pslab"], dslab)

    # Drop the padded vocab lanes and restore [B, Tt, VOCAB].
    return logp[:, :VOCAB].reshape(B, Tt, VOCAB)


# ----------------------------------------------------------------------------
# Driver
# ----------------------------------------------------------------------------
if __name__ == "__main__":
    key = jax.random.PRNGKey(0)
    k_param, k_src, k_tgt = jax.random.split(key, 3)

    params = init_params(k_param)

    B, T = 2, 8
    src = jax.random.randint(k_src, (B, T), 1, VOCAB).astype(jnp.int32)
    tgt = jax.random.randint(k_tgt, (B, T), 1, VOCAB).astype(jnp.int32)
    # Pad the tails of the second sequences.
    src = src.at[1, -2:].set(PAD_ID)
    tgt = tgt.at[1, -3:].set(PAD_ID)

    src_pad_mask = (src != PAD_ID).astype(jnp.float32)[:, None, :]   # [B, 1, T]
    tgt_pad_mask = (tgt != PAD_ID).astype(jnp.float32)[:, None, :]   # [B, 1, T]
    future_mask = jnp.tile(jnp.tril(jnp.ones((T, T), jnp.float32))[None], (B, 1, 1))

    out = transformer_forward(src, tgt, future_mask, src_pad_mask, tgt_pad_mask, params)
    out = jax.block_until_ready(out)

    assert out.shape == (B, T, VOCAB)
    assert bool(jnp.all(jnp.isfinite(out)))
    # log-softmax sanity: probabilities over the real vocab sum to ~1.
    prob_sum = jnp.exp(out).sum(-1)
    assert bool(jnp.all(jnp.abs(prob_sum - 1.0) < 1e-2))
    print("KERNEL_OK")
</pallas_src>

<mosaic_0001>
module attributes {stable_mosaic.version = 11 : i64} {
  func.func @kernel(%arg0: memref<32x1xi32, #tpu.memory_space<vmem>>, %arg1: memref<544x128xbf16, #tpu.memory_space<vmem>>, %arg2: memref<168x128xf32, #tpu.memory_space<vmem>>, %arg3: memref<344x128xf32, #tpu.memory_space<vmem>>, %arg4: memref<16x128xf32, #tpu.memory_space<vmem>>) attributes {dimension_semantics = [], scalar_prefetch = 0 : i64, scratch_operands = 0 : i64, tpu.core_type = #tpu.core_type<tc>} {
    %c0 = arith.constant 0 : index
    %c0_0 = arith.constant 0 : index
    %0 = vector.load %arg0[%c0, %c0_0] : memref<32x1xi32, #tpu.memory_space<vmem>>, vector<32x1xi32>
    %1 = tpu.iota {dimensions = array<i32: 1>} : vector<32x128xi32>
    %2 = vector.broadcast %0 : vector<32x1xi32> to vector<32x128xi32>
    %3 = arith.cmpi eq, %1, %2 : vector<32x128xi32>
    %4 = arith.extui %3 : vector<32x128xi1> to vector<32x128xi32>
    %5 = arith.sitofp %4 : vector<32x128xi32> to vector<32x128xf32>
    %6 = arith.truncf %5 : vector<32x128xf32> to vector<32x128xbf16>
    %c0_1 = arith.constant 0 : index
    %c0_2 = arith.constant 0 : index
    %7 = vector.load %arg1[%c0_1, %c0_2] : memref<544x128xbf16, #tpu.memory_space<vmem>>, vector<128x32xbf16>
    %cst = arith.constant dense<0.000000e+00> : vector<32x32xf32>
    %8 = tpu.matmul %6, %7, %cst {dimension_numbers = #tpu.dot_dimension_numbers<[1], [0], [0], [1], [0, 0, 1, 1], [], []>} : vector<32x128xbf16>, vector<128x32xbf16>, vector<32x32xf32> -> vector<32x32xf32>
    %c0_3 = arith.constant 0 : index
    %c0_4 = arith.constant 0 : index
    %9 = vector.load %arg3[%c0_3, %c0_4] : memref<344x128xf32, #tpu.memory_space<vmem>>, vector<32x32xf32>
    %10 = arith.addf %8, %9 : vector<32x32xf32>
    %11 = vector.extract_strided_slice %10 {offsets = [0, 0], sizes = [16, 32], strides = [1, 1]} : vector<32x32xf32> to vector<16x32xf32>
    %c128 = arith.constant 128 : index
    %c0_5 = arith.constant 0 : index
    %12 = vector.load %arg1[%c128, %c0_5] : memref<544x128xbf16, #tpu.memory_space<vmem>>, vector<32x96xbf16>
    %13 = arith.truncf %11 : vector<16x32xf32> to vector<16x32xbf16>
    %cst_6 = arith.constant dense<0.000000e+00> : vector<16x96xf32>
    %14 = tpu.matmul %13, %12, %cst_6 {dimension_numbers = #tpu.dot_dimension_numbers<[1], [0], [0], [1], [0, 0, 1, 1], [], []>} : vector<16x32xbf16>, vector<32x96xbf16>, vector<16x96xf32> -> vector<16x96xf32>
    %c0_7 = arith.constant 0 : index
    %c0_8 = arith.constant 0 : index
    %15 = vector.load %arg2[%c0_7, %c0_8] : memref<168x128xf32, #tpu.memory_space<vmem>>, vector<1x96xf32>
    %16 = vector.broadcast %15 : vector<1x96xf32> to vector<16x96xf32>
    %17 = arith.addf %14, %16 : vector<16x96xf32>
    %18 = vector.extract_strided_slice %17 {offsets = [0, 32], sizes = [16, 32], strides = [1, 1]} : vector<16x96xf32> to vector<16x32xf32>
    %19 = vector.extract_strided_slice %17 {offsets = [0, 64], sizes = [16, 32], strides = [1, 1]} : vector<16x96xf32> to vector<16x32xf32>
    %c40 = arith.constant 40 : index
    %c0_9 = arith.constant 0 : index
    %20 = vector.load %arg3[%c40, %c0_9] : memref<344x128xf32, #tpu.memory_space<vmem>>, vector<64x32xf32>
    %21 = arith.truncf %20 : vector<64x32xf32> to vector<64x32xbf16>
    %22 = arith.truncf %18 : vector<16x32xf32> to vector<16x32xbf16>
    %23 = tpu.concatenate %22, %22, %22, %22 in 0 : vector<16x32xbf16>, vector<16x32xbf16>, vector<16x32xbf16>, vector<16x32xbf16> -> vector<64x32xbf16>
    %24 = arith.mulf %23, %21 : vector<64x32xbf16>
    %25 = arith.truncf %19 : vector<16x32xf32> to vector<16x32xbf16>
    %26 = tpu.concatenate %25, %25, %25, %25 in 0 : vector<16x32xbf16>, vector<16x32xbf16>, vector<16x32xbf16>, vector<16x32xbf16> -> vector<64x32xbf16>
    %27 = arith.mulf %26, %21 : vector<64x32xbf16>
    %28 = vector.extract_strided_slice %17 {offsets = [0, 0], sizes = [16, 32], strides = [1, 1]} : vector<16x96xf32> to vector<16x32xf32>
    %c296 = arith.constant 296 : index
    %c0_10 = arith.constant 0 : index
    %29 = vector.load %arg3[%c296, %c0_10] : memref<344x128xf32, #tpu.memory_space<vmem>>, vector<16x64xf32>
    %c168 = arith.constant 168 : index
    %c0_11 = arith.constant 0 : index
    %30 = vector.load %arg3[%c168, %c0_11] : memref<344x128xf32, #tpu.memory_space<vmem>>, vector<64x64xf32>
    %31 = arith.truncf %28 : vector<16x32xf32> to vector<16x32xbf16>
    %cst_12 = arith.constant dense<0.000000e+00> : vector<16x64xf32>
    %32 = tpu.matmul %31, %24, %cst_12 {dimension_numbers = #tpu.dot_dimension_numbers<[1], [1], [0], [0], [0, 0, 1, 0], [], []>} : vector<16x32xbf16>, vector<64x32xbf16>, vector<16x64xf32> -> vector<16x64xf32>
    %33 = arith.addf %32, %29 : vector<16x64xf32>
    %cst_13 = arith.constant dense<0xFF800000> : vector<16xf32>
    %34 = vector.multi_reduction <maximumf>, %33, %cst_13 [1] : vector<16x64xf32> to vector<16xf32>
    %35 = vector.shape_cast %34 : vector<16xf32> to vector<16x1xf32>
    %36 = vector.broadcast %35 : vector<16x1xf32> to vector<16x64xf32>
    %37 = arith.subf %33, %36 : vector<16x64xf32>
    %38 = math.exp %37 : vector<16x64xf32>
    %cst_14 = arith.constant dense<0.000000e+00> : vector<16x64xf32>
    %39 = tpu.matmul %38, %30, %cst_14 {dimension_numbers = #tpu.dot_dimension_numbers<[1], [0], [0], [1], [0, 0, 1, 1], [], []>} : vector<16x64xf32>, vector<64x64xf32>, vector<16x64xf32> -> vector<16x64xf32>
    %cst_15 = arith.constant 1.000000e-30 : f32
    %40 = vector.broadcast %cst_15 : f32 to vector<16x64xf32>
    %41 = arith.maximumf %39, %40 : vector<16x64xf32>
    %42 = tpu.reciprocal %41 {approx = true} : vector<16x64xf32> -> vector<16x64xf32>
    %43 = arith.mulf %38, %42 : vector<16x64xf32>
    %44 = arith.truncf %43 : vector<16x64xf32> to vector<16x64xbf16>
    %cst_16 = arith.constant dense<0.000000e+00> : vector<16x32xf32>
    %45 = tpu.matmul %44, %27, %cst_16 {dimension_numbers = #tpu.dot_dimension_numbers<[1], [0], [0], [1], [0, 0, 1, 1], [], []>} : vector<16x64xbf16>, vector<64x32xbf16>, vector<16x32xf32> -> vector<16x32xf32>
    %c160 = arith.constant 160 : index
    %c0_17 = arith.constant 0 : index
    %46 = vector.load %arg1[%c160, %c0_17] : memref<544x128xbf16, #tpu.memory_space<vmem>>, vector<32x32xbf16>
    %47 = arith.truncf %45 : vector<16x32xf32> to vector<16x32xbf16>
    %cst_18 = arith.constant dense<0.000000e+00> : vector<16x32xf32>
    %48 = tpu.matmul %47, %46, %cst_18 {dimension_numbers = #tpu.dot_dimension_numbers<[1], [0], [0], [1], [0, 0, 1, 1], [], []>} : vector<16x32xbf16>, vector<32x32xbf16>, vector<16x32xf32> -> vector<16x32xf32>
    %c8 = arith.constant 8 : index
    %c0_19 = arith.constant 0 : index
    %49 = vector.load %arg2[%c8, %c0_19] : memref<168x128xf32, #tpu.memory_space<vmem>>, vector<1x32xf32>
    %50 = vector.broadcast %49 : vector<1x32xf32> to vector<16x32xf32>
    %51 = arith.addf %48, %50 : vector<16x32xf32>
    %52 = arith.addf %51, %11 : vector<16x32xf32>
    %c16 = arith.constant 16 : index
    %c0_20 = arith.constant 0 : index
    %53 = vector.load %arg2[%c16, %c0_20] : memref<168x128xf32, #tpu.memory_space<vmem>>, vector<1x32xf32>
    %c24 = arith.constant 24 : index
    %c0_21 = arith.constant 0 : index
    %54 = vector.load %arg2[%c24, %c0_21] : memref<168x128xf32, #tpu.memory_space<vmem>>, vector<1x32xf32>
    %cst_22 = arith.constant dense<0.000000e+00> : vector<16xf32>
    %55 = vector.multi_reduction <add>, %52, %cst_22 [1] : vector<16x32xf32> to vector<16xf32>
    %56 = vector.shape_cast %55 : vector<16xf32> to vector<16x1xf32>
    %cst_23 = arith.constant 3.200000e+01 : f32
    %57 = vector.broadcast %cst_23 : f32 to vector<16x1xf32>
    %58 = arith.divf %56, %57 : vector<16x1xf32>
    %59 = vector.broadcast %58 : vector<16x1xf32> to vector<16x32xf32>
    %60 = arith.subf %52, %59 : vector<16x32xf32>
    %61 = arith.mulf %60, %60 : vector<16x32xf32>
    %cst_24 = arith.constant dense<0.000000e+00> : vector<16xf32>
    %62 = vector.multi_reduction <add>, %61, %cst_24 [1] : vector<16x32xf32> to vector<16xf32>
    %63 = vector.shape_cast %62 : vector<16xf32> to vector<16x1xf32>
    %cst_25 = arith.constant 3.200000e+01 : f32
    %64 = vector.broadcast %cst_25 : f32 to vector<16x1xf32>
    %65 = arith.divf %63, %64 : vector<16x1xf32>
    %66 = vector.broadcast %58 : vector<16x1xf32> to vector<16x32xf32>
    %67 = arith.subf %52, %66 : vector<16x32xf32>
    %cst_26 = arith.constant 9.99999974E-6 : f32
    %68 = vector.broadcast %cst_26 : f32 to vector<16x1xf32>
    %69 = arith.addf %65, %68 : vector<16x1xf32>
    %70 = math.rsqrt %69 : vector<16x1xf32>
    %71 = vector.broadcast %70 : vector<16x1xf32> to vector<16x32xf32>
    %72 = arith.mulf %67, %71 : vector<16x32xf32>
    %73 = vector.broadcast %53 : vector<1x32xf32> to vector<16x32xf32>
    %74 = arith.mulf %72, %73 : vector<16x32xf32>
    %75 = vector.broadcast %54 : vector<1x32xf32> to vector<16x32xf32>
    %76 = arith.addf %74, %75 : vector<16x32xf32>
    %c192 = arith.constant 192 : index
    %c0_27 = arith.constant 0 : index
    %77 = vector.load %arg1[%c192, %c0_27] : memref<544x128xbf16, #tpu.memory_space<vmem>>, vector<32x64xbf16>
    %78 = arith.truncf %76 : vector<16x32xf32> to vector<16x32xbf16>
    %cst_28 = arith.constant dense<0.000000e+00> : vector<16x64xf32>
    %79 = tpu.matmul %78, %77, %cst_28 {dimension_numbers = #tpu.dot_dimension_numbers<[1], [0], [0], [1], [0, 0, 1, 1], [], []>} : vector<16x32xbf16>, vector<32x64xbf16>, vector<16x64xf32> -> vector<16x64xf32>
    %c32 = arith.constant 32 : index
    %c0_29 = arith.constant 0 : index
    %80 = vector.load %arg2[%c32, %c0_29] : memref<168x128xf32, #tpu.memory_space<vmem>>, vector<1x64xf32>
    %81 = vector.broadcast %80 : vector<1x64xf32> to vector<16x64xf32>
    %82 = arith.addf %79, %81 : vector<16x64xf32>
    %cst_30 = arith.constant 0.000000e+00 : f32
    %83 = vector.broadcast %cst_30 : f32 to vector<16x64xf32>
    %84 = arith.maximumf %82, %83 : vector<16x64xf32>
    %c224 = arith.constant 224 : index
    %c0_31 = arith.constant 0 : index
    %85 = vector.load %arg1[%c224, %c0_31] : memref<544x128xbf16, #tpu.memory_space<vmem>>, vector<64x32xbf16>
    %86 = arith.truncf %84 : vector<16x64xf32> to vector<16x64xbf16>
    %cst_32 = arith.constant dense<0.000000e+00> : vector<16x32xf32>
    %87 = tpu.matmul %86, %85, %cst_32 {dimension_numbers = #tpu.dot_dimension_numbers<[1], [0], [0], [1], [0, 0, 1, 1], [], []>} : vector<16x64xbf16>, vector<64x32xbf16>, vector<16x32xf32> -> vector<16x32xf32>
    %c40_33 = arith.constant 40 : index
    %c0_34 = arith.constant 0 : index
    %88 = vector.load %arg2[%c40_33, %c0_34] : memref<168x128xf32, #tpu.memory_space<vmem>>, vector<1x32xf32>
    %89 = vector.broadcast %88 : vector<1x32xf32> to vector<16x32xf32>
    %90 = arith.addf %87, %89 : vector<16x32xf32>
    %91 = arith.addf %90, %76 : vector<16x32xf32>
    %c48 = arith.constant 48 : index
    %c0_35 = arith.constant 0 : index
    %92 = vector.load %arg2[%c48, %c0_35] : memref<168x128xf32, #tpu.memory_space<vmem>>, vector<1x32xf32>
    %c56 = arith.constant 56 : index
    %c0_36 = arith.constant 0 : index
    %93 = vector.load %arg2[%c56, %c0_36] : memref<168x128xf32, #tpu.memory_space<vmem>>, vector<1x32xf32>
    %cst_37 = arith.constant dense<0.000000e+00> : vector<16xf32>
    %94 = vector.multi_reduction <add>, %91, %cst_37 [1] : vector<16x32xf32> to vector<16xf32>
    %95 = vector.shape_cast %94 : vector<16xf32> to vector<16x1xf32>
    %cst_38 = arith.constant 3.200000e+01 : f32
    %96 = vector.broadcast %cst_38 : f32 to vector<16x1xf32>
    %97 = arith.divf %95, %96 : vector<16x1xf32>
    %98 = vector.broadcast %97 : vector<16x1xf32> to vector<16x32xf32>
    %99 = arith.subf %91, %98 : vector<16x32xf32>
    %100 = arith.mulf %99, %99 : vector<16x32xf32>
    %cst_39 = arith.constant dense<0.000000e+00> : vector<16xf32>
    %101 = vector.multi_reduction <add>, %100, %cst_39 [1] : vector<16x32xf32> to vector<16xf32>
    %102 = vector.shape_cast %101 : vector<16xf32> to vector<16x1xf32>
    %cst_40 = arith.constant 3.200000e+01 : f32
    %103 = vector.broadcast %cst_40 : f32 to vector<16x1xf32>
    %104 = arith.divf %102, %103 : vector<16x1xf32>
    %105 = vector.broadcast %97 : vector<16x1xf32> to vector<16x32xf32>
    %106 = arith.subf %91, %105 : vector<16x32xf32>
    %cst_41 = arith.constant 9.99999974E-6 : f32
    %107 = vector.broadcast %cst_41 : f32 to vector<16x1xf32>
    %108 = arith.addf %104, %107 : vector<16x1xf32>
    %109 = math.rsqrt %108 : vector<16x1xf32>
    %110 = vector.broadcast %109 : vector<16x1xf32> to vector<16x32xf32>
    %111 = arith.mulf %106, %110 : vector<16x32xf32>
    %112 = vector.broadcast %92 : vector<1x32xf32> to vector<16x32xf32>
    %113 = arith.mulf %111, %112 : vector<16x32xf32>
    %114 = vector.broadcast %93 : vector<1x32xf32> to vector<16x32xf32>
    %115 = arith.addf %113, %114 : vector<16x32xf32>
    %c128_42 = arith.constant 128 : index
    %c0_43 = arith.constant 0 : index
    %116 = vector.load %arg1[%c128_42, %c0_43] : memref<544x128xbf16, #tpu.memory_space<vmem>>, vector<32x96xbf16>
    %117 = arith.truncf %115 : vector<16x32xf32> to vector<16x32xbf16>
    %cst_44 = arith.constant dense<0.000000e+00> : vector<16x96xf32>
    %118 = tpu.matmul %117, %116, %cst_44 {dimension_numbers = #tpu.dot_dimension_numbers<[1], [0], [0], [1], [0, 0, 1, 1], [], []>} : vector<16x32xbf16>, vector<32x96xbf16>, vector<16x96xf32> -> vector<16x96xf32>
    %c0_45 = arith.constant 0 : index
    %c0_46 = arith.constant 0 : index
    %119 = vector.load %arg2[%c0_45, %c0_46] : memref<168x128xf32, #tpu.memory_space<vmem>>, vector<1x96xf32>
    %120 = vector.broadcast %119 : vector<1x96xf32> to vector<16x96xf32>
    %121 = arith.addf %118, %120 : vector<16x96xf32>
    %122 = vector.extract_strided_slice %121 {offsets = [0, 32], sizes = [16, 32], strides = [1, 1]} : vector<16x96xf32> to vector<16x32xf32>
    %123 = vector.extract_strided_slice %121 {offsets = [0, 64], sizes = [16, 32], strides = [1, 1]} : vector<16x96xf32> to vector<16x32xf32>
    %c40_47 = arith.constant 40 : index
    %c0_48 = arith.constant 0 : index
    %124 = vector.load %arg3[%c40_47, %c0_48] : memref<344x128xf32, #tpu.memory_space<vmem>>, vector<64x32xf32>
    %125 = arith.truncf %124 : vector<64x32xf32> to vector<64x32xbf16>
    %126 = arith.truncf %122 : vector<16x32xf32> to vector<16x32xbf16>
    %127 = tpu.concatenate %126, %126, %126, %126 in 0 : vector<16x32xbf16>, vector<16x32xbf16>, vector<16x32xbf16>, vector<16x32xbf16> -> vector<64x32xbf16>
    %128 = arith.mulf %127, %125 : vector<64x32xbf16>
    %129 = arith.truncf %123 : vector<16x32xf32> to vector<16x32xbf16>
    %130 = tpu.concatenate %129, %129, %129, %129 in 0 : vector<16x32xbf16>, vector<16x32xbf16>, vector<16x32xbf16>, vector<16x32xbf16> -> vector<64x32xbf16>
    %131 = arith.mulf %130, %125 : vector<64x32xbf16>
    %132 = vector.extract_strided_slice %121 {offsets = [0, 0], sizes = [16, 32], strides = [1, 1]} : vector<16x96xf32> to vector<16x32xf32>
    %c296_49 = arith.constant 296 : index
    %c0_50 = arith.constant 0 : index
    %133 = vector.load %arg3[%c296_49, %c0_50] : memref<344x128xf32, #tpu.memory_space<vmem>>, vector<16x64xf32>
    %c168_51 = arith.constant 168 : index
    %c0_52 = arith.constant 0 : index
    %134 = vector.load %arg3[%c168_51, %c0_52] : memref<344x128xf32, #tpu.memory_space<vmem>>, vector<64x64xf32>
    %135 = arith.truncf %132 : vector<16x32xf32> to vector<16x32xbf16>
    %cst_53 = arith.constant dense<0.000000e+00> : vector<16x64xf32>
    %136 = tpu.matmul %135, %128, %cst_53 {dimension_numbers = #tpu.dot_dimension_numbers<[1], [1], [0], [0], [0, 0, 1, 0], [], []>} : vector<16x32xbf16>, vector<64x32xbf16>, vector<16x64xf32> -> vector<16x64xf32>
    %137 = arith.addf %136, %133 : vector<16x64xf32>
    %cst_54 = arith.constant dense<0xFF800000> : vector<16xf32>
    %138 = vector.multi_reduction <maximumf>, %137, %cst_54 [1] : vector<16x64xf32> to vector<16xf32>
    %139 = vector.shape_cast %138 : vector<16xf32> to vector<16x1xf32>
    %140 = vector.broadcast %139 : vector<16x1xf32> to vector<16x64xf32>
    %141 = arith.subf %137, %140 : vector<16x64xf32>
    %142 = math.exp %141 : vector<16x64xf32>
    %cst_55 = arith.constant dense<0.000000e+00> : vector<16x64xf32>
    %143 = tpu.matmul %142, %134, %cst_55 {dimension_numbers = #tpu.dot_dimension_numbers<[1], [0], [0], [1], [0, 0, 1, 1], [], []>} : vector<16x64xf32>, vector<64x64xf32>, vector<16x64xf32> -> vector<16x64xf32>
    %cst_56 = arith.constant 1.000000e-30 : f32
    %144 = vector.broadcast %cst_56 : f32 to vector<16x64xf32>
    %145 = arith.maximumf %143, %144 : vector<16x64xf32>
    %146 = tpu.reciprocal %145 {approx = true} : vector<16x64xf32> -> vector<16x64xf32>
    %147 = arith.mulf %142, %146 : vector<16x64xf32>
    %148 = arith.truncf %147 : vector<16x64xf32> to vector<16x64xbf16>
    %cst_57 = arith.constant dense<0.000000e+00> : vector<16x32xf32>
    %149 = tpu.matmul %148, %131, %cst_57 {dimension_numbers = #tpu.dot_dimension_numbers<[1], [0], [0], [1], [0, 0, 1, 1], [], []>} : vector<16x64xbf16>, vector<64x32xbf16>, vector<16x32xf32> -> vector<16x32xf32>
    %c160_58 = arith.constant 160 : index
    %c0_59 = arith.constant 0 : index
    %150 = vector.load %arg1[%c160_58, %c0_59] : memref<544x128xbf16, #tpu.memory_space<vmem>>, vector<32x32xbf16>
    %151 = arith.truncf %149 : vector<16x32xf32> to vector<16x32xbf16>
    %cst_60 = arith.constant dense<0.000000e+00> : vector<16x32xf32>
    %152 = tpu.matmul %151, %150, %cst_60 {dimension_numbers = #tpu.dot_dimension_numbers<[1], [0], [0], [1], [0, 0, 1, 1], [], []>} : vector<16x32xbf16>, vector<32x32xbf16>, vector<16x32xf32> -> vector<16x32xf32>
    %c8_61 = arith.constant 8 : index
    %c0_62 = arith.constant 0 : index
    %153 = vector.load %arg2[%c8_61, %c0_62] : memref<168x128xf32, #tpu.memory_space<vmem>>, vector<1x32xf32>
    %154 = vector.broadcast %153 : vector<1x32xf32> to vector<16x32xf32>
    %155 = arith.addf %152, %154 : vector<16x32xf32>
    %156 = arith.addf %155, %115 : vector<16x32xf32>
    %c16_63 = arith.constant 16 : index
    %c0_64 = arith.constant 0 : index
    %157 = vector.load %arg2[%c16_63, %c0_64] : memref<168x128xf32, #tpu.memory_space<vmem>>, vector<1x32xf32>
    %c24_65 = arith.constant 24 : index
    %c0_66 = arith.constant 0 : index
    %158 = vector.load %arg2[%c24_65, %c0_66] : memref<168x128xf32, #tpu.memory_space<vmem>>, vector<1x32xf32>
    %cst_67 = arith.constant dense<0.000000e+00> : vector<16xf32>
    %159 = vector.multi_reduction <add>, %156, %cst_67 [1] : vector<16x32xf32> to vector<16xf32>
    %160 = vector.shape_cast %159 : vector<16xf32> to vector<16x1xf32>
    %cst_68 = arith.constant 3.200000e+01 : f32
    %161 = vector.broadcast %cst_68 : f32 to vector<16x1xf32>
    %162 = arith.divf %160, %161 : vector<16x1xf32>
    %163 = vector.broadcast %162 : vector<16x1xf32> to vector<16x32xf32>
    %164 = arith.subf %156, %163 : vector<16x32xf32>
    %165 = arith.mulf %164, %164 : vector<16x32xf32>
    %cst_69 = arith.constant dense<0.000000e+00> : vector<16xf32>
    %166 = vector.multi_reduction <add>, %165, %cst_69 [1] : vector<16x32xf32> to vector<16xf32>
    %167 = vector.shape_cast %166 : vector<16xf32> to vector<16x1xf32>
    %cst_70 = arith.constant 3.200000e+01 : f32
    %168 = vector.broadcast %cst_70 : f32 to vector<16x1xf32>
    %169 = arith.divf %167, %168 : vector<16x1xf32>
    %170 = vector.broadcast %162 : vector<16x1xf32> to vector<16x32xf32>
    %171 = arith.subf %156, %170 : vector<16x32xf32>
    %cst_71 = arith.constant 9.99999974E-6 : f32
    %172 = vector.broadcast %cst_71 : f32 to vector<16x1xf32>
    %173 = arith.addf %169, %172 : vector<16x1xf32>
    %174 = math.rsqrt %173 : vector<16x1xf32>
    %175 = vector.broadcast %174 : vector<16x1xf32> to vector<16x32xf32>
    %176 = arith.mulf %171, %175 : vector<16x32xf32>
    %177 = vector.broadcast %157 : vector<1x32xf32> to vector<16x32xf32>
    %178 = arith.mulf %176, %177 : vector<16x32xf32>
    %179 = vector.broadcast %158 : vector<1x32xf32> to vector<16x32xf32>
    %180 = arith.addf %178, %179 : vector<16x32xf32>
    %c192_72 = arith.constant 192 : index
    %c0_73 = arith.constant 0 : index
    %181 = vector.load %arg1[%c192_72, %c0_73] : memref<544x128xbf16, #tpu.memory_space<vmem>>, vector<32x64xbf16>
    %182 = arith.truncf %180 : vector<16x32xf32> to vector<16x32xbf16>
    %cst_74 = arith.constant dense<0.000000e+00> : vector<16x64xf32>
    %183 = tpu.matmul %182, %181, %cst_74 {dimension_numbers = #tpu.dot_dimension_numbers<[1], [0], [0], [1], [0, 0, 1, 1], [], []>} : vector<16x32xbf16>, vector<32x64xbf16>, vector<16x64xf32> -> vector<16x64xf32>
    %c32_75 = arith.constant 32 : index
    %c0_76 = arith.constant 0 : index
    %184 = vector.load %arg2[%c32_75, %c0_76] : memref<168x128xf32, #tpu.memory_space<vmem>>, vector<1x64xf32>
    %185 = vector.broadcast %184 : vector<1x64xf32> to vector<16x64xf32>
    %186 = arith.addf %183, %185 : vector<16x64xf32>
    %cst_77 = arith.constant 0.000000e+00 : f32
    %187 = vector.broadcast %cst_77 : f32 to vector<16x64xf32>
    %188 = arith.maximumf %186, %187 : vector<16x64xf32>
    %c224_78 = arith.constant 224 : index
    %c0_79 = arith.constant 0 : index
    %189 = vector.load %arg1[%c224_78, %c0_79] : memref<544x128xbf16, #tpu.memory_space<vmem>>, vector<64x32xbf16>
    %190 = arith.truncf %188 : vector<16x64xf32> to vector<16x64xbf16>
    %cst_80 = arith.constant dense<0.000000e+00> : vector<16x32xf32>
    %191 = tpu.matmul %190, %189, %cst_80 {dimension_numbers = #tpu.dot_dimension_numbers<[1], [0], [0], [1], [0, 0, 1, 1], [], []>} : vector<16x64xbf16>, vector<64x32xbf16>, vector<16x32xf32> -> vector<16x32xf32>
    %c40_81 = arith.constant 40 : index
    %c0_82 = arith.constant 0 : index
    %192 = vector.load %arg2[%c40_81, %c0_82] : memref<168x128xf32, #tpu.memory_space<vmem>>, vector<1x32xf32>
    %193 = vector.broadcast %192 : vector<1x32xf32> to vector<16x32xf32>
    %194 = arith.addf %191, %193 : vector<16x32xf32>
    %195 = arith.addf %194, %180 : vector<16x32xf32>
    %c48_83 = arith.constant 48 : index
    %c0_84 = arith.constant 0 : index
    %196 = vector.load %arg2[%c48_83, %c0_84] : memref<168x128xf32, #tpu.memory_space<vmem>>, vector<1x32xf32>
    %c56_85 = arith.constant 56 : index
    %c0_86 = arith.constant 0 : index
    %197 = vector.load %arg2[%c56_85, %c0_86] : memref<168x128xf32, #tpu.memory_space<vmem>>, vector<1x32xf32>
    %cst_87 = arith.constant dense<0.000000e+00> : vector<16xf32>
    %198 = vector.multi_reduction <add>, %195, %cst_87 [1] : vector<16x32xf32> to vector<16xf32>
    %199 = vector.shape_cast %198 : vector<16xf32> to vector<16x1xf32>
    %cst_88 = arith.constant 3.200000e+01 : f32
    %200 = vector.broadcast %cst_88 : f32 to vector<16x1xf32>
    %201 = arith.divf %199, %200 : vector<16x1xf32>
    %202 = vector.broadcast %201 : vector<16x1xf32> to vector<16x32xf32>
    %203 = arith.subf %195, %202 : vector<16x32xf32>
    %204 = arith.mulf %203, %203 : vector<16x32xf32>
    %cst_89 = arith.constant dense<0.000000e+00> : vector<16xf32>
    %205 = vector.multi_reduction <add>, %204, %cst_89 [1] : vector<16x32xf32> to vector<16xf32>
    %206 = vector.shape_cast %205 : vector<16xf32> to vector<16x1xf32>
    %cst_90 = arith.constant 3.200000e+01 : f32
    %207 = vector.broadcast %cst_90 : f32 to vector<16x1xf32>
    %208 = arith.divf %206, %207 : vector<16x1xf32>
    %209 = vector.broadcast %201 : vector<16x1xf32> to vector<16x32xf32>
    %210 = arith.subf %195, %209 : vector<16x32xf32>
    %cst_91 = arith.constant 9.99999974E-6 : f32
    %211 = vector.broadcast %cst_91 : f32 to vector<16x1xf32>
    %212 = arith.addf %208, %211 : vector<16x1xf32>
    %213 = math.rsqrt %212 : vector<16x1xf32>
    %214 = vector.broadcast %213 : vector<16x1xf32> to vector<16x32xf32>
    %215 = arith.mulf %210, %214 : vector<16x32xf32>
    %216 = vector.broadcast %196 : vector<1x32xf32> to vector<16x32xf32>
    %217 = arith.mulf %215, %216 : vector<16x32xf32>
    %218 = vector.broadcast %197 : vector<1x32xf32> to vector<16x32xf32>
    %219 = arith.addf %217, %218 : vector<16x32xf32>
    %c384 = arith.constant 384 : index
    %c0_92 = arith.constant 0 : index
    %220 = vector.load %arg1[%c384, %c0_92] : memref<544x128xbf16, #tpu.memory_space<vmem>>, vector<32x64xbf16>
    %221 = arith.truncf %219 : vector<16x32xf32> to vector<16x32xbf16>
    %cst_93 = arith.constant dense<0.000000e+00> : vector<16x64xf32>
    %222 = tpu.matmul %221, %220, %cst_93 {dimension_numbers = #tpu.dot_dimension_numbers<[1], [0], [0], [1], [0, 0, 1, 1], [], []>} : vector<16x32xbf16>, vector<32x64xbf16>, vector<16x64xf32> -> vector<16x64xf32>
    %c104 = arith.constant 104 : index
    %c0_94 = arith.constant 0 : index
    %223 = vector.load %arg2[%c104, %c0_94] : memref<168x128xf32, #tpu.memory_space<vmem>>, vector<1x64xf32>
    %224 = vector.broadcast %223 : vector<1x64xf32> to vector<16x64xf32>
    %225 = arith.addf %222, %224 : vector<16x64xf32>
    %226 = vector.extract_strided_slice %225 {offsets = [0, 0], sizes = [16, 32], strides = [1, 1]} : vector<16x64xf32> to vector<16x32xf32>
    %227 = vector.extract_strided_slice %225 {offsets = [0, 32], sizes = [16, 32], strides = [1, 1]} : vector<16x64xf32> to vector<16x32xf32>
    %c40_95 = arith.constant 40 : index
    %c0_96 = arith.constant 0 : index
    %228 = vector.load %arg3[%c40_95, %c0_96] : memref<344x128xf32, #tpu.memory_space<vmem>>, vector<64x32xf32>
    %229 = arith.truncf %228 : vector<64x32xf32> to vector<64x32xbf16>
    %230 = arith.truncf %226 : vector<16x32xf32> to vector<16x32xbf16>
    %231 = tpu.concatenate %230, %230, %230, %230 in 0 : vector<16x32xbf16>, vector<16x32xbf16>, vector<16x32xbf16>, vector<16x32xbf16> -> vector<64x32xbf16>
    %232 = arith.mulf %231, %229 : vector<64x32xbf16>
    %233 = arith.truncf %227 : vector<16x32xf32> to vector<16x32xbf16>
    %234 = tpu.concatenate %233, %233, %233, %233 in 0 : vector<16x32xbf16>, vector<16x32xbf16>, vector<16x32xbf16>, vector<16x32xbf16> -> vector<64x32xbf16>
    %235 = arith.mulf %234, %229 : vector<64x32xbf16>
    %236 = vector.extract_strided_slice %10 {offsets = [16, 0], sizes = [16, 32], strides = [1, 1]} : vector<32x32xf32> to vector<16x32xf32>
    %c288 = arith.constant 288 : index
    %c0_97 = arith.constant 0 : index
    %237 = vector.load %arg1[%c288, %c0_97] : memref<544x128xbf16, #tpu.memory_space<vmem>>, vector<32x96xbf16>
    %238 = arith.truncf %236 : vector<16x32xf32> to vector<16x32xbf16>
    %cst_98 = arith.constant dense<0.000000e+00> : vector<16x96xf32>
    %239 = tpu.matmul %238, %237, %cst_98 {dimension_numbers = #tpu.dot_dimension_numbers<[1], [0], [0], [1], [0, 0, 1, 1], [], []>} : vector<16x32xbf16>, vector<32x96xbf16>, vector<16x96xf32> -> vector<16x96xf32>
    %c64 = arith.constant 64 : index
    %c0_99 = arith.constant 0 : index
    %240 = vector.load %arg2[%c64, %c0_99] : memref<168x128xf32, #tpu.memory_space<vmem>>, vector<1x96xf32>
    %241 = vector.broadcast %240 : vector<1x96xf32> to vector<16x96xf32>
    %242 = arith.addf %239, %241 : vector<16x96xf32>
    %243 = vector.extract_strided_slice %242 {offsets = [0, 32], sizes = [16, 32], strides = [1, 1]} : vector<16x96xf32> to vector<16x32xf32>
    %244 = vector.extract_strided_slice %242 {offsets = [0, 64], sizes = [16, 32], strides = [1, 1]} : vector<16x96xf32> to vector<16x32xf32>
    %c104_100 = arith.constant 104 : index
    %c0_101 = arith.constant 0 : index
    %245 = vector.load %arg3[%c104_100, %c0_101] : memref<344x128xf32, #tpu.memory_space<vmem>>, vector<64x32xf32>
    %246 = arith.truncf %245 : vector<64x32xf32> to vector<64x32xbf16>
    %247 = arith.truncf %243 : vector<16x32xf32> to vector<16x32xbf16>
    %248 = tpu.concatenate %247, %247, %247, %247 in 0 : vector<16x32xbf16>, vector<16x32xbf16>, vector<16x32xbf16>, vector<16x32xbf16> -> vector<64x32xbf16>
    %249 = arith.mulf %248, %246 : vector<64x32xbf16>
    %250 = arith.truncf %244 : vector<16x32xf32> to vector<16x32xbf16>
    %251 = tpu.concatenate %250, %250, %250, %250 in 0 : vector<16x32xbf16>, vector<16x32xbf16>, vector<16x32xbf16>, vector<16x32xbf16> -> vector<64x32xbf16>
    %252 = arith.mulf %251, %246 : vector<64x32xbf16>
    %253 = vector.extract_strided_slice %242 {offsets = [0, 0], sizes = [16, 32], strides = [1, 1]} : vector<16x96xf32> to vector<16x32xf32>
    %c312 = arith.constant 312 : index
    %c0_102 = arith.constant 0 : index
    %254 = vector.load %arg3[%c312, %c0_102] : memref<344x128xf32, #tpu.memory_space<vmem>>, vector<16x64xf32>
    %c232 = arith.constant 232 : index
    %c0_103 = arith.constant 0 : index
    %255 = vector.load %arg3[%c232, %c0_103] : memref<344x128xf32, #tpu.memory_space<vmem>>, vector<64x64xf32>
    %256 = arith.truncf %253 : vector<16x32xf32> to vector<16x32xbf16>
    %cst_104 = arith.constant dense<0.000000e+00> : vector<16x64xf32>
    %257 = tpu.matmul %256, %249, %cst_104 {dimension_numbers = #tpu.dot_dimension_numbers<[1], [1], [0], [0], [0, 0, 1, 0], [], []>} : vector<16x32xbf16>, vector<64x32xbf16>, vector<16x64xf32> -> vector<16x64xf32>
    %258 = arith.addf %257, %254 : vector<16x64xf32>
    %cst_105 = arith.constant dense<0xFF800000> : vector<16xf32>
    %259 = vector.multi_reduction <maximumf>, %258, %cst_105 [1] : vector<16x64xf32> to vector<16xf32>
    %260 = vector.shape_cast %259 : vector<16xf32> to vector<16x1xf32>
    %261 = vector.broadcast %260 : vector<16x1xf32> to vector<16x64xf32>
    %262 = arith.subf %258, %261 : vector<16x64xf32>
    %263 = math.exp %262 : vector<16x64xf32>
    %cst_106 = arith.constant dense<0.000000e+00> : vector<16x64xf32>
    %264 = tpu.matmul %263, %255, %cst_106 {dimension_numbers = #tpu.dot_dimension_numbers<[1], [0], [0], [1], [0, 0, 1, 1], [], []>} : vector<16x64xf32>, vector<64x64xf32>, vector<16x64xf32> -> vector<16x64xf32>
    %cst_107 = arith.constant 1.000000e-30 : f32
    %265 = vector.broadcast %cst_107 : f32 to vector<16x64xf32>
    %266 = arith.maximumf %264, %265 : vector<16x64xf32>
    %267 = tpu.reciprocal %266 {approx = true} : vector<16x64xf32> -> vector<16x64xf32>
    %268 = arith.mulf %263, %267 : vector<16x64xf32>
    %269 = arith.truncf %268 : vector<16x64xf32> to vector<16x64xbf16>
    %cst_108 = arith.constant dense<0.000000e+00> : vector<16x32xf32>
    %270 = tpu.matmul %269, %252, %cst_108 {dimension_numbers = #tpu.dot_dimension_numbers<[1], [0], [0], [1], [0, 0, 1, 1], [], []>} : vector<16x64xbf16>, vector<64x32xbf16>, vector<16x32xf32> -> vector<16x32xf32>
    %c320 = arith.constant 320 : index
    %c0_109 = arith.constant 0 : index
    %271 = vector.load %arg1[%c320, %c0_109] : memref<544x128xbf16, #tpu.memory_space<vmem>>, vector<32x32xbf16>
    %272 = arith.truncf %270 : vector<16x32xf32> to vector<16x32xbf16>
    %cst_110 = arith.constant dense<0.000000e+00> : vector<16x32xf32>
    %273 = tpu.matmul %272, %271, %cst_110 {dimension_numbers = #tpu.dot_dimension_numbers<[1], [0], [0], [1], [0, 0, 1, 1], [], []>} : vector<16x32xbf16>, vector<32x32xbf16>, vector<16x32xf32> -> vector<16x32xf32>
    %c72 = arith.constant 72 : index
    %c0_111 = arith.constant 0 : index
    %274 = vector.load %arg2[%c72, %c0_111] : memref<168x128xf32, #tpu.memory_space<vmem>>, vector<1x32xf32>
    %275 = vector.broadcast %274 : vector<1x32xf32> to vector<16x32xf32>
    %276 = arith.addf %273, %275 : vector<16x32xf32>
    %277 = arith.addf %276, %236 : vector<16x32xf32>
    %c80 = arith.constant 80 : index
    %c0_112 = arith.constant 0 : index
    %278 = vector.load %arg2[%c80, %c0_112] : memref<168x128xf32, #tpu.memory_space<vmem>>, vector<1x32xf32>
    %c88 = arith.constant 88 : index
    %c0_113 = arith.constant 0 : index
    %279 = vector.load %arg2[%c88, %c0_113] : memref<168x128xf32, #tpu.memory_space<vmem>>, vector<1x32xf32>
    %cst_114 = arith.constant dense<0.000000e+00> : vector<16xf32>
    %280 = vector.multi_reduction <add>, %277, %cst_114 [1] : vector<16x32xf32> to vector<16xf32>
    %281 = vector.shape_cast %280 : vector<16xf32> to vector<16x1xf32>
    %cst_115 = arith.constant 3.200000e+01 : f32
    %282 = vector.broadcast %cst_115 : f32 to vector<16x1xf32>
    %283 = arith.divf %281, %282 : vector<16x1xf32>
    %284 = vector.broadcast %283 : vector<16x1xf32> to vector<16x32xf32>
    %285 = arith.subf %277, %284 : vector<16x32xf32>
    %286 = arith.mulf %285, %285 : vector<16x32xf32>
    %cst_116 = arith.constant dense<0.000000e+00> : vector<16xf32>
    %287 = vector.multi_reduction <add>, %286, %cst_116 [1] : vector<16x32xf32> to vector<16xf32>
    %288 = vector.shape_cast %287 : vector<16xf32> to vector<16x1xf32>
    %cst_117 = arith.constant 3.200000e+01 : f32
    %289 = vector.broadcast %cst_117 : f32 to vector<16x1xf32>
    %290 = arith.divf %288, %289 : vector<16x1xf32>
    %291 = vector.broadcast %283 : vector<16x1xf32> to vector<16x32xf32>
    %292 = arith.subf %277, %291 : vector<16x32xf32>
    %cst_118 = arith.constant 9.99999974E-6 : f32
    %293 = vector.broadcast %cst_118 : f32 to vector<16x1xf32>
    %294 = arith.addf %290, %293 : vector<16x1xf32>
    %295 = math.rsqrt %294 : vector<16x1xf32>
    %296 = vector.broadcast %295 : vector<16x1xf32> to vector<16x32xf32>
    %297 = arith.mulf %292, %296 : vector<16x32xf32>
    %298 = vector.broadcast %278 : vector<1x32xf32> to vector<16x32xf32>
    %299 = arith.mulf %297, %298 : vector<16x32xf32>
    %300 = vector.broadcast %279 : vector<1x32xf32> to vector<16x32xf32>
    %301 = arith.addf %299, %300 : vector<16x32xf32>
    %c352 = arith.constant 352 : index
    %c0_119 = arith.constant 0 : index
    %302 = vector.load %arg1[%c352, %c0_119] : memref<544x128xbf16, #tpu.memory_space<vmem>>, vector<32x32xbf16>
    %303 = arith.truncf %301 : vector<16x32xf32> to vector<16x32xbf16>
    %cst_120 = arith.constant dense<0.000000e+00> : vector<16x32xf32>
    %304 = tpu.matmul %303, %302, %cst_120 {dimension_numbers = #tpu.dot_dimension_numbers<[1], [0], [0], [1], [0, 0, 1, 1], [], []>} : vector<16x32xbf16>, vector<32x32xbf16>, vector<16x32xf32> -> vector<16x32xf32>
    %c96 = arith.constant 96 : index
    %c0_121 = arith.constant 0 : index
    %305 = vector.load %arg2[%c96, %c0_121] : memref<168x128xf32, #tpu.memory_space<vmem>>, vector<1x32xf32>
    %306 = vector.broadcast %305 : vector<1x32xf32> to vector<16x32xf32>
    %307 = arith.addf %304, %306 : vector<16x32xf32>
    %c328 = arith.constant 328 : index
    %c0_122 = arith.constant 0 : index
    %308 = vector.load %arg3[%c328, %c0_122] : memref<344x128xf32, #tpu.memory_space<vmem>>, vector<16x64xf32>
    %c168_123 = arith.constant 168 : index
    %c0_124 = arith.constant 0 : index
    %309 = vector.load %arg3[%c168_123, %c0_124] : memref<344x128xf32, #tpu.memory_space<vmem>>, vector<64x64xf32>
    %310 = arith.truncf %307 : vector<16x32xf32> to vector<16x32xbf16>
    %cst_125 = arith.constant dense<0.000000e+00> : vector<16x64xf32>
    %311 = tpu.matmul %310, %232, %cst_125 {dimension_numbers = #tpu.dot_dimension_numbers<[1], [1], [0], [0], [0, 0, 1, 0], [], []>} : vector<16x32xbf16>, vector<64x32xbf16>, vector<16x64xf32> -> vector<16x64xf32>
    %312 = arith.addf %311, %308 : vector<16x64xf32>
    %cst_126 = arith.constant dense<0xFF800000> : vector<16xf32>
    %313 = vector.multi_reduction <maximumf>, %312, %cst_126 [1] : vector<16x64xf32> to vector<16xf32>
    %314 = vector.shape_cast %313 : vector<16xf32> to vector<16x1xf32>
    %315 = vector.broadcast %314 : vector<16x1xf32> to vector<16x64xf32>
    %316 = arith.subf %312, %315 : vector<16x64xf32>
    %317 = math.exp %316 : vector<16x64xf32>
    %cst_127 = arith.constant dense<0.000000e+00> : vector<16x64xf32>
    %318 = tpu.matmul %317, %309, %cst_127 {dimension_numbers = #tpu.dot_dimension_numbers<[1], [0], [0], [1], [0, 0, 1, 1], [], []>} : vector<16x64xf32>, vector<64x64xf32>, vector<16x64xf32> -> vector<16x64xf32>
    %cst_128 = arith.constant 1.000000e-30 : f32
    %319 = vector.broadcast %cst_128 : f32 to vector<16x64xf32>
    %320 = arith.maximumf %318, %319 : vector<16x64xf32>
    %321 = tpu.reciprocal %320 {approx = true} : vector<16x64xf32> -> vector<16x64xf32>
    %322 = arith.mulf %317, %321 : vector<16x64xf32>
    %323 = arith.truncf %322 : vector<16x64xf32> to vector<16x64xbf16>
    %cst_129 = arith.constant dense<0.000000e+00> : vector<16x32xf32>
    %324 = tpu.matmul %323, %235, %cst_129 {dimension_numbers = #tpu.dot_dimension_numbers<[1], [0], [0], [1], [0, 0, 1, 1], [], []>} : vector<16x64xbf16>, vector<64x32xbf16>, vector<16x32xf32> -> vector<16x32xf32>
    %c416 = arith.constant 416 : index
    %c0_130 = arith.constant 0 : index
    %325 = vector.load %arg1[%c416, %c0_130] : memref<544x128xbf16, #tpu.memory_space<vmem>>, vector<32x32xbf16>
    %326 = arith.truncf %324 : vector<16x32xf32> to vector<16x32xbf16>
    %cst_131 = arith.constant dense<0.000000e+00> : vector<16x32xf32>
    %327 = tpu.matmul %326, %325, %cst_131 {dimension_numbers = #tpu.dot_dimension_numbers<[1], [0], [0], [1], [0, 0, 1, 1], [], []>} : vector<16x32xbf16>, vector<32x32xbf16>, vector<16x32xf32> -> vector<16x32xf32>
    %c112 = arith.constant 112 : index
    %c0_132 = arith.constant 0 : index
    %328 = vector.load %arg2[%c112, %c0_132] : memref<168x128xf32, #tpu.memory_space<vmem>>, vector<1x32xf32>
    %329 = vector.broadcast %328 : vector<1x32xf32> to vector<16x32xf32>
    %330 = arith.addf %327, %329 : vector<16x32xf32>
    %331 = arith.addf %330, %301 : vector<16x32xf32>
    %c120 = arith.constant 120 : index
    %c0_133 = arith.constant 0 : index
    %332 = vector.load %arg2[%c120, %c0_133] : memref<168x128xf32, #tpu.memory_space<vmem>>, vector<1x32xf32>
    %c128_134 = arith.constant 128 : index
    %c0_135 = arith.constant 0 : index
    %333 = vector.load %arg2[%c128_134, %c0_135] : memref<168x128xf32, #tpu.memory_space<vmem>>, vector<1x32xf32>
    %cst_136 = arith.constant dense<0.000000e+00> : vector<16xf32>
    %334 = vector.multi_reduction <add>, %331, %cst_136 [1] : vector<16x32xf32> to vector<16xf32>
    %335 = vector.shape_cast %334 : vector<16xf32> to vector<16x1xf32>
    %cst_137 = arith.constant 3.200000e+01 : f32
    %336 = vector.broadcast %cst_137 : f32 to vector<16x1xf32>
    %337 = arith.divf %335, %336 : vector<16x1xf32>
    %338 = vector.broadcast %337 : vector<16x1xf32> to vector<16x32xf32>
    %339 = arith.subf %331, %338 : vector<16x32xf32>
    %340 = arith.mulf %339, %339 : vector<16x32xf32>
    %cst_138 = arith.constant dense<0.000000e+00> : vector<16xf32>
    %341 = vector.multi_reduction <add>, %340, %cst_138 [1] : vector<16x32xf32> to vector<16xf32>
    %342 = vector.shape_cast %341 : vector<16xf32> to vector<16x1xf32>
    %cst_139 = arith.constant 3.200000e+01 : f32
    %343 = vector.broadcast %cst_139 : f32 to vector<16x1xf32>
    %344 = arith.divf %342, %343 : vector<16x1xf32>
    %345 = vector.broadcast %337 : vector<16x1xf32> to vector<16x32xf32>
    %346 = arith.subf %331, %345 : vector<16x32xf32>
    %cst_140 = arith.constant 9.99999974E-6 : f32
    %347 = vector.broadcast %cst_140 : f32 to vector<16x1xf32>
    %348 = arith.addf %344, %347 : vector<16x1xf32>
    %349 = math.rsqrt %348 : vector<16x1xf32>
    %350 = vector.broadcast %349 : vector<16x1xf32> to vector<16x32xf32>
    %351 = arith.mulf %346, %350 : vector<16x32xf32>
    %352 = vector.broadcast %332 : vector<1x32xf32> to vector<16x32xf32>
    %353 = arith.mulf %351, %352 : vector<16x32xf32>
    %354 = vector.broadcast %333 : vector<1x32xf32> to vector<16x32xf32>
    %355 = arith.addf %353, %354 : vector<16x32xf32>
    %c448 = arith.constant 448 : index
    %c0_141 = arith.constant 0 : index
    %356 = vector.load %arg1[%c448, %c0_141] : memref<544x128xbf16, #tpu.memory_space<vmem>>, vector<32x64xbf16>
    %357 = arith.truncf %355 : vector<16x32xf32> to vector<16x32xbf16>
    %cst_142 = arith.constant dense<0.000000e+00> : vector<16x64xf32>
    %358 = tpu.matmul %357, %356, %cst_142 {dimension_numbers = #tpu.dot_dimension_numbers<[1], [0], [0], [1], [0, 0, 1, 1], [], []>} : vector<16x32xbf16>, vector<32x64xbf16>, vector<16x64xf32> -> vector<16x64xf32>
    %c136 = arith.constant 136 : index
    %c0_143 = arith.constant 0 : index
    %359 = vector.load %arg2[%c136, %c0_143] : memref<168x128xf32, #tpu.memory_space<vmem>>, vector<1x64xf32>
    %360 = vector.broadcast %359 : vector<1x64xf32> to vector<16x64xf32>
    %361 = arith.addf %358, %360 : vector<16x64xf32>
    %cst_144 = arith.constant 0.000000e+00 : f32
    %362 = vector.broadcast %cst_144 : f32 to vector<16x64xf32>
    %363 = arith.maximumf %361, %362 : vector<16x64xf32>
    %c480 = arith.constant 480 : index
    %c0_145 = arith.constant 0 : index
    %364 = vector.load %arg1[%c480, %c0_145] : memref<544x128xbf16, #tpu.memory_space<vmem>>, vector<64x32xbf16>
    %365 = arith.truncf %363 : vector<16x64xf32> to vector<16x64xbf16>
    %cst_146 = arith.constant dense<0.000000e+00> : vector<16x32xf32>
    %366 = tpu.matmul %365, %364, %cst_146 {dimension_numbers = #tpu.dot_dimension_numbers<[1], [0], [0], [1], [0, 0, 1, 1], [], []>} : vector<16x64xbf16>, vector<64x32xbf16>, vector<16x32xf32> -> vector<16x32xf32>
    %c144 = arith.constant 144 : index
    %c0_147 = arith.constant 0 : index
    %367 = vector.load %arg2[%c144, %c0_147] : memref<168x128xf32, #tpu.memory_space<vmem>>, vector<1x32xf32>
    %368 = vector.broadcast %367 : vector<1x32xf32> to vector<16x32xf32>
    %369 = arith.addf %366, %368 : vector<16x32xf32>
    %370 = arith.addf %369, %355 : vector<16x32xf32>
    %c152 = arith.constant 152 : index
    %c0_148 = arith.constant 0 : index
    %371 = vector.load %arg2[%c152, %c0_148] : memref<168x128xf32, #tpu.memory_space<vmem>>, vector<1x32xf32>
    %c160_149 = arith.constant 160 : index
    %c0_150 = arith.constant 0 : index
    %372 = vector.load %arg2[%c160_149, %c0_150] : memref<168x128xf32, #tpu.memory_space<vmem>>, vector<1x32xf32>
    %cst_151 = arith.constant dense<0.000000e+00> : vector<16xf32>
    %373 = vector.multi_reduction <add>, %370, %cst_151 [1] : vector<16x32xf32> to vector<16xf32>
    %374 = vector.shape_cast %373 : vector<16xf32> to vector<16x1xf32>
    %cst_152 = arith.constant 3.200000e+01 : f32
    %375 = vector.broadcast %cst_152 : f32 to vector<16x1xf32>
    %376 = arith.divf %374, %375 : vector<16x1xf32>
    %377 = vector.broadcast %376 : vector<16x1xf32> to vector<16x32xf32>
    %378 = arith.subf %370, %377 : vector<16x32xf32>
    %379 = arith.mulf %378, %378 : vector<16x32xf32>
    %cst_153 = arith.constant dense<0.000000e+00> : vector<16xf32>
    %380 = vector.multi_reduction <add>, %379, %cst_153 [1] : vector<16x32xf32> to vector<16xf32>
    %381 = vector.shape_cast %380 : vector<16xf32> to vector<16x1xf32>
    %cst_154 = arith.constant 3.200000e+01 : f32
    %382 = vector.broadcast %cst_154 : f32 to vector<16x1xf32>
    %383 = arith.divf %381, %382 : vector<16x1xf32>
    %384 = vector.broadcast %376 : vector<16x1xf32> to vector<16x32xf32>
    %385 = arith.subf %370, %384 : vector<16x32xf32>
    %cst_155 = arith.constant 9.99999974E-6 : f32
    %386 = vector.broadcast %cst_155 : f32 to vector<16x1xf32>
    %387 = arith.addf %383, %386 : vector<16x1xf32>
    %388 = math.rsqrt %387 : vector<16x1xf32>
    %389 = vector.broadcast %388 : vector<16x1xf32> to vector<16x32xf32>
    %390 = arith.mulf %385, %389 : vector<16x32xf32>
    %391 = vector.broadcast %371 : vector<1x32xf32> to vector<16x32xf32>
    %392 = arith.mulf %390, %391 : vector<16x32xf32>
    %393 = vector.broadcast %372 : vector<1x32xf32> to vector<16x32xf32>
    %394 = arith.addf %392, %393 : vector<16x32xf32>
    %c288_156 = arith.constant 288 : index
    %c0_157 = arith.constant 0 : index
    %395 = vector.load %arg1[%c288_156, %c0_157] : memref<544x128xbf16, #tpu.memory_space<vmem>>, vector<32x96xbf16>
    %396 = arith.truncf %394 : vector<16x32xf32> to vector<16x32xbf16>
    %cst_158 = arith.constant dense<0.000000e+00> : vector<16x96xf32>
    %397 = tpu.matmul %396, %395, %cst_158 {dimension_numbers = #tpu.dot_dimension_numbers<[1], [0], [0], [1], [0, 0, 1, 1], [], []>} : vector<16x32xbf16>, vector<32x96xbf16>, vector<16x96xf32> -> vector<16x96xf32>
    %c64_159 = arith.constant 64 : index
    %c0_160 = arith.constant 0 : index
    %398 = vector.load %arg2[%c64_159, %c0_160] : memref<168x128xf32, #tpu.memory_space<vmem>>, vector<1x96xf32>
    %399 = vector.broadcast %398 : vector<1x96xf32> to vector<16x96xf32>
    %400 = arith.addf %397, %399 : vector<16x96xf32>
    %401 = vector.extract_strided_slice %400 {offsets = [0, 32], sizes = [16, 32], strides = [1, 1]} : vector<16x96xf32> to vector<16x32xf32>
    %402 = vector.extract_strided_slice %400 {offsets = [0, 64], sizes = [16, 32], strides = [1, 1]} : vector<16x96xf32> to vector<16x32xf32>
    %c104_161 = arith.constant 104 : index
    %c0_162 = arith.constant 0 : index
    %403 = vector.load %arg3[%c104_161, %c0_162] : memref<344x128xf32, #tpu.memory_space<vmem>>, vector<64x32xf32>
    %404 = arith.truncf %403 : vector<64x32xf32> to vector<64x32xbf16>
    %405 = arith.truncf %401 : vector<16x32xf32> to vector<16x32xbf16>
    %406 = tpu.concatenate %405, %405, %405, %405 in 0 : vector<16x32xbf16>, vector<16x32xbf16>, vector<16x32xbf16>, vector<16x32xbf16> -> vector<64x32xbf16>
    %407 = arith.mulf %406, %404 : vector<64x32xbf16>
    %408 = arith.truncf %402 : vector<16x32xf32> to vector<16x32xbf16>
    %409 = tpu.concatenate %408, %408, %408, %408 in 0 : vector<16x32xbf16>, vector<16x32xbf16>, vector<16x32xbf16>, vector<16x32xbf16> -> vector<64x32xbf16>
    %410 = arith.mulf %409, %404 : vector<64x32xbf16>
    %411 = vector.extract_strided_slice %400 {offsets = [0, 0], sizes = [16, 32], strides = [1, 1]} : vector<16x96xf32> to vector<16x32xf32>
    %c312_163 = arith.constant 312 : index
    %c0_164 = arith.constant 0 : index
    %412 = vector.load %arg3[%c312_163, %c0_164] : memref<344x128xf32, #tpu.memory_space<vmem>>, vector<16x64xf32>
    %c232_165 = arith.constant 232 : index
    %c0_166 = arith.constant 0 : index
    %413 = vector.load %arg3[%c232_165, %c0_166] : memref<344x128xf32, #tpu.memory_space<vmem>>, vector<64x64xf32>
    %414 = arith.truncf %411 : vector<16x32xf32> to vector<16x32xbf16>
    %cst_167 = arith.constant dense<0.000000e+00> : vector<16x64xf32>
    %415 = tpu.matmul %414, %407, %cst_167 {dimension_numbers = #tpu.dot_dimension_numbers<[1], [1], [0], [0], [0, 0, 1, 0], [], []>} : vector<16x32xbf16>, vector<64x32xbf16>, vector<16x64xf32> -> vector<16x64xf32>
    %416 = arith.addf %415, %412 : vector<16x64xf32>
    %cst_168 = arith.constant dense<0xFF800000> : vector<16xf32>
    %417 = vector.multi_reduction <maximumf>, %416, %cst_168 [1] : vector<16x64xf32> to vector<16xf32>
    %418 = vector.shape_cast %417 : vector<16xf32> to vector<16x1xf32>
    %419 = vector.broadcast %418 : vector<16x1xf32> to vector<16x64xf32>
    %420 = arith.subf %416, %419 : vector<16x64xf32>
    %421 = math.exp %420 : vector<16x64xf32>
    %cst_169 = arith.constant dense<0.000000e+00> : vector<16x64xf32>
    %422 = tpu.matmul %421, %413, %cst_169 {dimension_numbers = #tpu.dot_dimension_numbers<[1], [0], [0], [1], [0, 0, 1, 1], [], []>} : vector<16x64xf32>, vector<64x64xf32>, vector<16x64xf32> -> vector<16x64xf32>
    %cst_170 = arith.constant 1.000000e-30 : f32
    %423 = vector.broadcast %cst_170 : f32 to vector<16x64xf32>
    %424 = arith.maximumf %422, %423 : vector<16x64xf32>
    %425 = tpu.reciprocal %424 {approx = true} : vector<16x64xf32> -> vector<16x64xf32>
    %426 = arith.mulf %421, %425 : vector<16x64xf32>
    %427 = arith.truncf %426 : vector<16x64xf32> to vector<16x64xbf16>
    %cst_171 = arith.constant dense<0.000000e+00> : vector<16x32xf32>
    %428 = tpu.matmul %427, %410, %cst_171 {dimension_numbers = #tpu.dot_dimension_numbers<[1], [0], [0], [1], [0, 0, 1, 1], [], []>} : vector<16x64xbf16>, vector<64x32xbf16>, vector<16x32xf32> -> vector<16x32xf32>
    %c320_172 = arith.constant 320 : index
    %c0_173 = arith.constant 0 : index
    %429 = vector.load %arg1[%c320_172, %c0_173] : memref<544x128xbf16, #tpu.memory_space<vmem>>, vector<32x32xbf16>
    %430 = arith.truncf %428 : vector<16x32xf32> to vector<16x32xbf16>
    %cst_174 = arith.constant dense<0.000000e+00> : vector<16x32xf32>
    %431 = tpu.matmul %430, %429, %cst_174 {dimension_numbers = #tpu.dot_dimension_numbers<[1], [0], [0], [1], [0, 0, 1, 1], [], []>} : vector<16x32xbf16>, vector<32x32xbf16>, vector<16x32xf32> -> vector<16x32xf32>
    %c72_175 = arith.constant 72 : index
    %c0_176 = arith.constant 0 : index
    %432 = vector.load %arg2[%c72_175, %c0_176] : memref<168x128xf32, #tpu.memory_space<vmem>>, vector<1x32xf32>
    %433 = vector.broadcast %432 : vector<1x32xf32> to vector<16x32xf32>
    %434 = arith.addf %431, %433 : vector<16x32xf32>
    %435 = arith.addf %434, %394 : vector<16x32xf32>
    %c80_177 = arith.constant 80 : index
    %c0_178 = arith.constant 0 : index
    %436 = vector.load %arg2[%c80_177, %c0_178] : memref<168x128xf32, #tpu.memory_space<vmem>>, vector<1x32xf32>
    %c88_179 = arith.constant 88 : index
    %c0_180 = arith.constant 0 : index
    %437 = vector.load %arg2[%c88_179, %c0_180] : memref<168x128xf32, #tpu.memory_space<vmem>>, vector<1x32xf32>
    %cst_181 = arith.constant dense<0.000000e+00> : vector<16xf32>
    %438 = vector.multi_reduction <add>, %435, %cst_181 [1] : vector<16x32xf32> to vector<16xf32>
    %439 = vector.shape_cast %438 : vector<16xf32> to vector<16x1xf32>
    %cst_182 = arith.constant 3.200000e+01 : f32
    %440 = vector.broadcast %cst_182 : f32 to vector<16x1xf32>
    %441 = arith.divf %439, %440 : vector<16x1xf32>
    %442 = vector.broadcast %441 : vector<16x1xf32> to vector<16x32xf32>
    %443 = arith.subf %435, %442 : vector<16x32xf32>
    %444 = arith.mulf %443, %443 : vector<16x32xf32>
    %cst_183 = arith.constant dense<0.000000e+00> : vector<16xf32>
    %445 = vector.multi_reduction <add>, %444, %cst_183 [1] : vector<16x32xf32> to vector<16xf32>
    %446 = vector.shape_cast %445 : vector<16xf32> to vector<16x1xf32>
    %cst_184 = arith.constant 3.200000e+01 : f32
    %447 = vector.broadcast %cst_184 : f32 to vector<16x1xf32>
    %448 = arith.divf %446, %447 : vector<16x1xf32>
    %449 = vector.broadcast %441 : vector<16x1xf32> to vector<16x32xf32>
    %450 = arith.subf %435, %449 : vector<16x32xf32>
    %cst_185 = arith.constant 9.99999974E-6 : f32
    %451 = vector.broadcast %cst_185 : f32 to vector<16x1xf32>
    %452 = arith.addf %448, %451 : vector<16x1xf32>
    %453 = math.rsqrt %452 : vector<16x1xf32>
    %454 = vector.broadcast %453 : vector<16x1xf32> to vector<16x32xf32>
    %455 = arith.mulf %450, %454 : vector<16x32xf32>
    %456 = vector.broadcast %436 : vector<1x32xf32> to vector<16x32xf32>
    %457 = arith.mulf %455, %456 : vector<16x32xf32>
    %458 = vector.broadcast %437 : vector<1x32xf32> to vector<16x32xf32>
    %459 = arith.addf %457, %458 : vector<16x32xf32>
    %c352_186 = arith.constant 352 : index
    %c0_187 = arith.constant 0 : index
    %460 = vector.load %arg1[%c352_186, %c0_187] : memref<544x128xbf16, #tpu.memory_space<vmem>>, vector<32x32xbf16>
    %461 = arith.truncf %459 : vector<16x32xf32> to vector<16x32xbf16>
    %cst_188 = arith.constant dense<0.000000e+00> : vector<16x32xf32>
    %462 = tpu.matmul %461, %460, %cst_188 {dimension_numbers = #tpu.dot_dimension_numbers<[1], [0], [0], [1], [0, 0, 1, 1], [], []>} : vector<16x32xbf16>, vector<32x32xbf16>, vector<16x32xf32> -> vector<16x32xf32>
    %c96_189 = arith.constant 96 : index
    %c0_190 = arith.constant 0 : index
    %463 = vector.load %arg2[%c96_189, %c0_190] : memref<168x128xf32, #tpu.memory_space<vmem>>, vector<1x32xf32>
    %464 = vector.broadcast %463 : vector<1x32xf32> to vector<16x32xf32>
    %465 = arith.addf %462, %464 : vector<16x32xf32>
    %c328_191 = arith.constant 328 : index
    %c0_192 = arith.constant 0 : index
    %466 = vector.load %arg3[%c328_191, %c0_192] : memref<344x128xf32, #tpu.memory_space<vmem>>, vector<16x64xf32>
    %c168_193 = arith.constant 168 : index
    %c0_194 = arith.constant 0 : index
    %467 = vector.load %arg3[%c168_193, %c0_194] : memref<344x128xf32, #tpu.memory_space<vmem>>, vector<64x64xf32>
    %468 = arith.truncf %465 : vector<16x32xf32> to vector<16x32xbf16>
    %cst_195 = arith.constant dense<0.000000e+00> : vector<16x64xf32>
    %469 = tpu.matmul %468, %232, %cst_195 {dimension_numbers = #tpu.dot_dimension_numbers<[1], [1], [0], [0], [0, 0, 1, 0], [], []>} : vector<16x32xbf16>, vector<64x32xbf16>, vector<16x64xf32> -> vector<16x64xf32>
    %470 = arith.addf %469, %466 : vector<16x64xf32>
    %cst_196 = arith.constant dense<0xFF800000> : vector<16xf32>
    %471 = vector.multi_reduction <maximumf>, %470, %cst_196 [1] : vector<16x64xf32> to vector<16xf32>
    %472 = vector.shape_cast %471 : vector<16xf32> to vector<16x1xf32>
    %473 = vector.broadcast %472 : vector<16x1xf32> to vector<16x64xf32>
    %474 = arith.subf %470, %473 : vector<16x64xf32>
    %475 = math.exp %474 : vector<16x64xf32>
    %cst_197 = arith.constant dense<0.000000e+00> : vector<16x64xf32>
    %476 = tpu.matmul %475, %467, %cst_197 {dimension_numbers = #tpu.dot_dimension_numbers<[1], [0], [0], [1], [0, 0, 1, 1], [], []>} : vector<16x64xf32>, vector<64x64xf32>, vector<16x64xf32> -> vector<16x64xf32>
    %cst_198 = arith.constant 1.000000e-30 : f32
    %477 = vector.broadcast %cst_198 : f32 to vector<16x64xf32>
    %478 = arith.maximumf %476, %477 : vector<16x64xf32>
    %479 = tpu.reciprocal %478 {approx = true} : vector<16x64xf32> -> vector<16x64xf32>
    %480 = arith.mulf %475, %479 : vector<16x64xf32>
    %481 = arith.truncf %480 : vector<16x64xf32> to vector<16x64xbf16>
    %cst_199 = arith.constant dense<0.000000e+00> : vector<16x32xf32>
    %482 = tpu.matmul %481, %235, %cst_199 {dimension_numbers = #tpu.dot_dimension_numbers<[1], [0], [0], [1], [0, 0, 1, 1], [], []>} : vector<16x64xbf16>, vector<64x32xbf16>, vector<16x32xf32> -> vector<16x32xf32>
    %c416_200 = arith.constant 416 : index
    %c0_201 = arith.constant 0 : index
    %483 = vector.load %arg1[%c416_200, %c0_201] : memref<544x128xbf16, #tpu.memory_space<vmem>>, vector<32x32xbf16>
    %484 = arith.truncf %482 : vector<16x32xf32> to vector<16x32xbf16>
    %cst_202 = arith.constant dense<0.000000e+00> : vector<16x32xf32>
    %485 = tpu.matmul %484, %483, %cst_202 {dimension_numbers = #tpu.dot_dimension_numbers<[1], [0], [0], [1], [0, 0, 1, 1], [], []>} : vector<16x32xbf16>, vector<32x32xbf16>, vector<16x32xf32> -> vector<16x32xf32>
    %c112_203 = arith.constant 112 : index
    %c0_204 = arith.constant 0 : index
    %486 = vector.load %arg2[%c112_203, %c0_204] : memref<168x128xf32, #tpu.memory_space<vmem>>, vector<1x32xf32>
    %487 = vector.broadcast %486 : vector<1x32xf32> to vector<16x32xf32>
    %488 = arith.addf %485, %487 : vector<16x32xf32>
    %489 = arith.addf %488, %459 : vector<16x32xf32>
    %c120_205 = arith.constant 120 : index
    %c0_206 = arith.constant 0 : index
    %490 = vector.load %arg2[%c120_205, %c0_206] : memref<168x128xf32, #tpu.memory_space<vmem>>, vector<1x32xf32>
    %c128_207 = arith.constant 128 : index
    %c0_208 = arith.constant 0 : index
    %491 = vector.load %arg2[%c128_207, %c0_208] : memref<168x128xf32, #tpu.memory_space<vmem>>, vector<1x32xf32>
    %cst_209 = arith.constant dense<0.000000e+00> : vector<16xf32>
    %492 = vector.multi_reduction <add>, %489, %cst_209 [1] : vector<16x32xf32> to vector<16xf32>
    %493 = vector.shape_cast %492 : vector<16xf32> to vector<16x1xf32>
    %cst_210 = arith.constant 3.200000e+01 : f32
    %494 = vector.broadcast %cst_210 : f32 to vector<16x1xf32>
    %495 = arith.divf %493, %494 : vector<16x1xf32>
    %496 = vector.broadcast %495 : vector<16x1xf32> to vector<16x32xf32>
    %497 = arith.subf %489, %496 : vector<16x32xf32>
    %498 = arith.mulf %497, %497 : vector<16x32xf32>
    %cst_211 = arith.constant dense<0.000000e+00> : vector<16xf32>
    %499 = vector.multi_reduction <add>, %498, %cst_211 [1] : vector<16x32xf32> to vector<16xf32>
    %500 = vector.shape_cast %499 : vector<16xf32> to vector<16x1xf32>
    %cst_212 = arith.constant 3.200000e+01 : f32
    %501 = vector.broadcast %cst_212 : f32 to vector<16x1xf32>
    %502 = arith.divf %500, %501 : vector<16x1xf32>
    %503 = vector.broadcast %495 : vector<16x1xf32> to vector<16x32xf32>
    %504 = arith.subf %489, %503 : vector<16x32xf32>
    %cst_213 = arith.constant 9.99999974E-6 : f32
    %505 = vector.broadcast %cst_213 : f32 to vector<16x1xf32>
    %506 = arith.addf %502, %505 : vector<16x1xf32>
    %507 = math.rsqrt %506 : vector<16x1xf32>
    %508 = vector.broadcast %507 : vector<16x1xf32> to vector<16x32xf32>
    %509 = arith.mulf %504, %508 : vector<16x32xf32>
    %510 = vector.broadcast %490 : vector<1x32xf32> to vector<16x32xf32>
    %511 = arith.mulf %509, %510 : vector<16x32xf32>
    %512 = vector.broadcast %491 : vector<1x32xf32> to vector<16x32xf32>
    %513 = arith.addf %511, %512 : vector<16x32xf32>
    %c448_214 = arith.constant 448 : index
    %c0_215 = arith.constant 0 : index
    %514 = vector.load %arg1[%c448_214, %c0_215] : memref<544x128xbf16, #tpu.memory_space<vmem>>, vector<32x64xbf16>
    %515 = arith.truncf %513 : vector<16x32xf32> to vector<16x32xbf16>
    %cst_216 = arith.constant dense<0.000000e+00> : vector<16x64xf32>
    %516 = tpu.matmul %515, %514, %cst_216 {dimension_numbers = #tpu.dot_dimension_numbers<[1], [0], [0], [1], [0, 0, 1, 1], [], []>} : vector<16x32xbf16>, vector<32x64xbf16>, vector<16x64xf32> -> vector<16x64xf32>
    %c136_217 = arith.constant 136 : index
    %c0_218 = arith.constant 0 : index
    %517 = vector.load %arg2[%c136_217, %c0_218] : memref<168x128xf32, #tpu.memory_space<vmem>>, vector<1x64xf32>
    %518 = vector.broadcast %517 : vector<1x64xf32> to vector<16x64xf32>
    %519 = arith.addf %516, %518 : vector<16x64xf32>
    %cst_219 = arith.constant 0.000000e+00 : f32
    %520 = vector.broadcast %cst_219 : f32 to vector<16x64xf32>
    %521 = arith.maximumf %519, %520 : vector<16x64xf32>
    %c480_220 = arith.constant 480 : index
    %c0_221 = arith.constant 0 : index
    %522 = vector.load %arg1[%c480_220, %c0_221] : memref<544x128xbf16, #tpu.memory_space<vmem>>, vector<64x32xbf16>
    %523 = arith.truncf %521 : vector<16x64xf32> to vector<16x64xbf16>
    %cst_222 = arith.constant dense<0.000000e+00> : vector<16x32xf32>
    %524 = tpu.matmul %523, %522, %cst_222 {dimension_numbers = #tpu.dot_dimension_numbers<[1], [0], [0], [1], [0, 0, 1, 1], [], []>} : vector<16x64xbf16>, vector<64x32xbf16>, vector<16x32xf32> -> vector<16x32xf32>
    %c144_223 = arith.constant 144 : index
    %c0_224 = arith.constant 0 : index
    %525 = vector.load %arg2[%c144_223, %c0_224] : memref<168x128xf32, #tpu.memory_space<vmem>>, vector<1x32xf32>
    %526 = vector.broadcast %525 : vector<1x32xf32> to vector<16x32xf32>
    %527 = arith.addf %524, %526 : vector<16x32xf32>
    %528 = arith.addf %527, %513 : vector<16x32xf32>
    %c152_225 = arith.constant 152 : index
    %c0_226 = arith.constant 0 : index
    %529 = vector.load %arg2[%c152_225, %c0_226] : memref<168x128xf32, #tpu.memory_space<vmem>>, vector<1x32xf32>
    %c160_227 = arith.constant 160 : index
    %c0_228 = arith.constant 0 : index
    %530 = vector.load %arg2[%c160_227, %c0_228] : memref<168x128xf32, #tpu.memory_space<vmem>>, vector<1x32xf32>
    %cst_229 = arith.constant dense<0.000000e+00> : vector<16xf32>
    %531 = vector.multi_reduction <add>, %528, %cst_229 [1] : vector<16x32xf32> to vector<16xf32>
    %532 = vector.shape_cast %531 : vector<16xf32> to vector<16x1xf32>
    %cst_230 = arith.constant 3.200000e+01 : f32
    %533 = vector.broadcast %cst_230 : f32 to vector<16x1xf32>
    %534 = arith.divf %532, %533 : vector<16x1xf32>
    %535 = vector.broadcast %534 : vector<16x1xf32> to vector<16x32xf32>
    %536 = arith.subf %528, %535 : vector<16x32xf32>
    %537 = arith.mulf %536, %536 : vector<16x32xf32>
    %cst_231 = arith.constant dense<0.000000e+00> : vector<16xf32>
    %538 = vector.multi_reduction <add>, %537, %cst_231 [1] : vector<16x32xf32> to vector<16xf32>
    %539 = vector.shape_cast %538 : vector<16xf32> to vector<16x1xf32>
    %cst_232 = arith.constant 3.200000e+01 : f32
    %540 = vector.broadcast %cst_232 : f32 to vector<16x1xf32>
    %541 = arith.divf %539, %540 : vector<16x1xf32>
    %542 = vector.broadcast %534 : vector<16x1xf32> to vector<16x32xf32>
    %543 = arith.subf %528, %542 : vector<16x32xf32>
    %cst_233 = arith.constant 9.99999974E-6 : f32
    %544 = vector.broadcast %cst_233 : f32 to vector<16x1xf32>
    %545 = arith.addf %541, %544 : vector<16x1xf32>
    %546 = math.rsqrt %545 : vector<16x1xf32>
    %547 = vector.broadcast %546 : vector<16x1xf32> to vector<16x32xf32>
    %548 = arith.mulf %543, %547 : vector<16x32xf32>
    %549 = vector.broadcast %529 : vector<1x32xf32> to vector<16x32xf32>
    %550 = arith.mulf %548, %549 : vector<16x32xf32>
    %551 = vector.broadcast %530 : vector<1x32xf32> to vector<16x32xf32>
    %552 = arith.addf %550, %551 : vector<16x32xf32>
    %c0_234 = arith.constant 0 : index
    %c0_235 = arith.constant 0 : index
    %553 = vector.load %arg1[%c0_234, %c0_235] : memref<544x128xbf16, #tpu.memory_space<vmem>>, vector<128x32xbf16>
    %554 = arith.truncf %552 : vector<16x32xf32> to vector<16x32xbf16>
    %cst_236 = arith.constant dense<0.000000e+00> : vector<16x128xf32>
    %555 = tpu.matmul %554, %553, %cst_236 {dimension_numbers = #tpu.dot_dimension_numbers<[1], [1], [0], [0], [0, 0, 1, 0], [], []>} : vector<16x32xbf16>, vector<128x32xbf16>, vector<16x128xf32> -> vector<16x128xf32>
    %c32_237 = arith.constant 32 : index
    %c0_238 = arith.constant 0 : index
    %556 = vector.load %arg3[%c32_237, %c0_238] : memref<344x128xf32, #tpu.memory_space<vmem>>, vector<1x128xf32>
    %cst_239 = arith.constant 0.000000e+00 : f32
    %557 = vector.broadcast %cst_239 : f32 to vector<1x128xf32>
    %558 = arith.cmpf ogt, %556, %557 : vector<1x128xf32>
    %cst_240 = arith.constant -1.000000e+09 : f32
    %559 = vector.shape_cast %558 : vector<1x128xi1> to vector<1x128xi1>
    %560 = vector.broadcast %559 : vector<1x128xi1> to vector<16x128xi1>
    %561 = vector.broadcast %cst_240 : f32 to vector<16x128xf32>
    %562 = arith.select %560, %555, %561 : vector<16x128xi1>, vector<16x128xf32>
    %cst_241 = arith.constant dense<0xFF800000> : vector<16xf32>
    %563 = vector.multi_reduction <maximumf>, %562, %cst_241 [1] : vector<16x128xf32> to vector<16xf32>
    %564 = vector.shape_cast %563 : vector<16xf32> to vector<16x1xf32>
    %565 = vector.broadcast %564 : vector<16x1xf32> to vector<16x128xf32>
    %566 = arith.subf %562, %565 : vector<16x128xf32>
    %567 = math.exp %566 : vector<16x128xf32>
    %568 = vector.broadcast %564 : vector<16x1xf32> to vector<16x128xf32>
    %569 = arith.subf %562, %568 : vector<16x128xf32>
    %cst_242 = arith.constant dense<0.000000e+00> : vector<16xf32>
    %570 = vector.multi_reduction <add>, %567, %cst_242 [1] : vector<16x128xf32> to vector<16xf32>
    %571 = vector.shape_cast %570 : vector<16xf32> to vector<16x1xf32>
    %572 = math.log %571 : vector<16x1xf32>
    %573 = vector.broadcast %572 : vector<16x1xf32> to vector<16x128xf32>
    %574 = arith.subf %569, %573 : vector<16x128xf32>
    %c0_243 = arith.constant 0 : index
    %c0_244 = arith.constant 0 : index
    %575 = vector.load %arg4[%c0_243, %c0_244] : memref<16x128xf32, #tpu.memory_space<vmem>>, vector<16x128xf32>
    tpu.vector_store %arg4[%c0_243, %c0_244], %574 {strides = array<i32>} : memref<16x128xf32, #tpu.memory_space<vmem>>, vector<16x128xf32>,
    return
  }
}

</mosaic_0001>

<llo_original>
// kernel: transformer_forward.1
$region0: #{transformer_forward.1}
  #allocation0 [shape = 'u32[]', space=smem, size = 0x4, offset = 0x4, fixed_abs, tag = 'smem constant byte address 0x4 - core index']
  #allocation1 [shape = 'u32[72,128]{1,0:T(1,128)}', space=vmem, size = 0x9000, scoped, tag = 'internal scratch']
  %s0 = inlined_call_operand.vmem [shape: s32[32,1], index: 0, kind: input, shape index: {}]
  %s1 = inlined_call_operand.vmem [shape: bf16[544,128], index: 1, kind: input, shape index: {}]
  %s2 = inlined_call_operand.vmem [shape: f32[168,128], index: 2, kind: input, shape index: {}]
  %s3 = inlined_call_operand.vmem [shape: f32[344,128], index: 3, kind: input, shape index: {}]
  %s4 = inlined_call_operand.vmem [shape: f32[16,128], index: 4, kind: output, shape index: {}]
  %s5 = sld [smem:[#allocation0]]
  $region26: #{transformer_forward.1} parent=0
    _
  %s7 = ssub.s32 1, %s5
  %s8 = scalar_select 0, %s7, %s5
  // Predicated region
  $region2: #{transformer_forward.1} parent=0 // pred_check
    _
  $region3: #{transformer_forward.1} parent=0 // pred_check_branch
    %10 = sbr.rel (0) target = $region5
  $region4: #{transformer_forward.1} parent=0 // pred_region
    _
  $region5: #{transformer_forward.1} parent=0 // pred_fallthru
    _
  // Predicated region
  $region6: #{transformer_forward.1} parent=0 // pred_check
    _
  $region7: #{transformer_forward.1} parent=0 // pred_check_branch
    %12 = sbr.rel (0) target = $region9
  $region8: #{transformer_forward.1} parent=0 // pred_region
    _
  $region9: #{transformer_forward.1} parent=0 // pred_fallthru
    _
  // Predicated region
  $region10: #{transformer_forward.1} parent=0 // pred_check
    _
  $region11: #{transformer_forward.1} parent=0 // pred_check_branch
    %14 = sbr.rel (0) target = $region13
  $region12: #{transformer_forward.1} parent=0 // pred_region
    _
  $region13: #{transformer_forward.1} parent=0 // pred_fallthru
    _
  // Predicated region
  $region14: #{transformer_forward.1} parent=0 // pred_check
    _
  $region15: #{transformer_forward.1} parent=0 // pred_check_branch
    %16 = sbr.rel (0) target = $region17
  $region16: #{transformer_forward.1} parent=0 // pred_region
    _
  $region17: #{transformer_forward.1} parent=0 // pred_fallthru
    _
  %v18 = vld [vmem:[%s0] sm:$0xff]
  %v19 = vld [vmem:[%s0 + $0x8] sm:$0xff]
  %v20 = vld [vmem:[%s0 + $0x10] sm:$0xff]
  %v21 = vld [vmem:[%s0 + $0x18] sm:$0xff]
  %v22 = vlaneseq
  %v23 = vand.u32 %v22, 127
  %24 = vset.pattern.permute.xlu0 0
  %25 = vperm.xlu0 %24, %v18
  %v26 = vpop.permute.xlu0 %25
  %27 = vset.pattern.permute.xlu0 0
  %28 = vperm.xlu0 %27, %v19
  %v29 = vpop.permute.xlu0 %28
  %30 = vset.pattern.permute.xlu0 0
  %31 = vperm.xlu0 %30, %v20
  %v32 = vpop.permute.xlu0 %31
  %33 = vset.pattern.permute.xlu0 0
  %34 = vperm.xlu0 %33, %v21
  %v35 = vpop.permute.xlu0 %34
  %vm36 = vcmp.eq.s32.totalorder %v23, %v26
  %vm37 = vcmp.eq.s32.totalorder %v23, %v29
  %vm38 = vcmp.eq.s32.totalorder %v23, %v32
  %vm39 = vcmp.eq.s32.totalorder %v23, %v35
  %v40 = vsel %vm36, 1, 0
  %v41 = vsel %vm37, 1, 0
  %v42 = vsel %vm38, 1, 0
  %v43 = vsel %vm39, 1, 0
  %v44 = vcvt.s32.f32 %v40
  %v45 = vcvt.s32.f32 %v41
  %v46 = vcvt.s32.f32 %v42
  %v47 = vcvt.s32.f32 %v43
  %v48 = vpack.c.bf16 %v45, %v44
  %v49 = vpack.c.bf16 %v47, %v46
  %v50 = vld [vmem:[%s1] sm:$0xf]
  %v51 = vld [vmem:[%s1 + $0x4] sm:$0xf]
  %v52 = vld [vmem:[%s1 + $0x8] sm:$0xf]
  %v53 = vld [vmem:[%s1 + $0xc] sm:$0xf]
  %v54 = vld [vmem:[%s1 + $0x10] sm:$0xf]
  %v55 = vld [vmem:[%s1 + $0x14] sm:$0xf]
  %v56 = vld [vmem:[%s1 + $0x18] sm:$0xf]
  %v57 = vld [vmem:[%s1 + $0x1c] sm:$0xf]
  %v58 = vld [vmem:[%s1 + $0x20] sm:$0xf]
  %v59 = vld [vmem:[%s1 + $0x24] sm:$0xf]
  %v60 = vld [vmem:[%s1 + $0x28] sm:$0xf]
  %v61 = vld [vmem:[%s1 + $0x2c] sm:$0xf]
  %v62 = vld [vmem:[%s1 + $0x30] sm:$0xf]
  %v63 = vld [vmem:[%s1 + $0x34] sm:$0xf]
  %v64 = vld [vmem:[%s1 + $0x38] sm:$0xf]
  %v65 = vld [vmem:[%s1 + $0x3c] sm:$0xf]
  %v66 = vld [vmem:[%s3] sm:$0xff]
  %v67 = vld [vmem:[%s3 + $0x8] sm:$0xff]
  %v68 = vld [vmem:[%s3 + $0x10] sm:$0xff]
  %v69 = vld [vmem:[%s3 + $0x18] sm:$0xff]
  %v86 = vunpack.c.l.b16 %v50
  %v87 = vunpack.c.l.b16 %v51
  %v88 = vunpack.c.l.b16 %v52
  %v89 = vunpack.c.l.b16 %v53
  %v90 = vunpack.c.l.b16 %v54
  %v91 = vunpack.c.l.b16 %v55
  %v92 = vunpack.c.l.b16 %v56
  %v93 = vunpack.c.l.b16 %v57
  %v94 = vunpack.c.l.b16 %v58
  %v95 = vunpack.c.l.b16 %v59
  %v96 = vunpack.c.l.b16 %v60
  %v97 = vunpack.c.l.b16 %v61
  %v98 = vunpack.c.l.b16 %v62
  %v99 = vunpack.c.l.b16 %v63
  %v100 = vunpack.c.l.b16 %v64
  %v101 = vunpack.c.l.b16 %v65
  %v102 = vpack.c.b16 %v87, %v86
  %v103 = vpack.c.b16 %v89, %v88
  %v104 = vpack.c.b16 %v91, %v90
  %v105 = vpack.c.b16 %v93, %v92
  %v106 = vpack.c.b16 %v95, %v94
  %v107 = vpack.c.b16 %v97, %v96
  %v108 = vpack.c.b16 %v99, %v98
  %v109 = vpack.c.b16 %v101, %v100
  %118 = vmatpush.bf16.msra.mxu0 %v109
  %119 = vmatpush.bf16.msra.mxu0 %v108
  %120 = vmatpush.bf16.msra.mxu0 %v107
  %121 = vmatpush.bf16.msra.mxu0 %v106
  %122 = vmatpush.bf16.msra.mxu0 %v105
  %123 = vmatpush.bf16.msra.mxu0 %v104
  %124 = vmatpush.bf16.msra.mxu0 %v103
  %125 = vmatpush.bf16.msra.mxu0 %v102
  %126 = vmatmul.bf16.gmra.mxu0 %v48
  %v127 = vpop.f32.mrf.mxu0
  %v128 = vadd.f32 %v66, %v127
  %v129 = vpop.f32.mrf.mxu0
  %v130 = vadd.f32 %v67, %v129
  %131 = vmatmul.bf16.gmra.mxu0 %v49
  %v132 = vpop.f32.mrf.mxu0
  %v133 = vadd.f32 %v68, %v132
  %v134 = vpop.f32.mrf.mxu0
  %v135 = vadd.f32 %v69, %v134
  %136 = vdwg.mxu0
  %v137 = vld [vmem:[%s1 + $0x40] sm:$0xf]
  %v138 = vld [vmem:[%s1 + $0x44] sm:$0xf]
  %v139 = vld [vmem:[%s1 + $0x48] sm:$0xf]
  %v140 = vld [vmem:[%s1 + $0x4c] sm:$0xf]
  %v141 = vpack.c.bf16 %v130, %v128
  %v142 = vld [vmem:[%s2] sm:$0x1]
  %v143 = vperm.slane %v142, 0
  %v148 = vunpack.c.l.b16 %v137
  %v149 = vunpack.c.l.b16 %v138
  %v150 = vunpack.c.l.b16 %v139
  %v151 = vunpack.c.l.b16 %v140
  %v152 = vpack.c.b16 %v149, %v148
  %v153 = vpack.c.b16 %v151, %v150
  %vm156 = vcmask 261120
  %v158 = vsel %vm156, %v141, 0
  %160 = vmatpush.bf16.msra.mxu0 0
  %161 = vmatpush.bf16.msra.mxu0 0
  %162 = vmatpush.bf16.msra.mxu0 0
  %163 = vmatpush.bf16.msra.mxu0 0
  %164 = vmatpush.bf16.msra.mxu0 0
  %165 = vmatpush.bf16.msra.mxu0 0
  %166 = vmatpush.bf16.msra.mxu0 %v153
  %167 = vmatpush.bf16.msra.mxu0 %v152
  %168 = vmatmul.bf16.gmra.mxu0 %v158
  %v169 = vpop.f32.mrf.mxu0
  %v170 = vadd.f32 %v143, %v169
  %v171 = vpop.f32.mrf.mxu0
  %v172 = vadd.f32 %v143, %v171
  %173 = vdwg.mxu0
  %v174 = vld [vmem:[%s3 + $0x28] sm:$0xff]
  %v175 = vld [vmem:[%s3 + $0x30] sm:$0xff]
  %v176 = vld [vmem:[%s3 + $0x38] sm:$0xff]
  %v177 = vld [vmem:[%s3 + $0x40] sm:$0xff]
  %v178 = vld [vmem:[%s3 + $0x48] sm:$0xff]
  %v179 = vld [vmem:[%s3 + $0x50] sm:$0xff]
  %v180 = vld [vmem:[%s3 + $0x58] sm:$0xff]
  %v181 = vld [vmem:[%s3 + $0x60] sm:$0xff]
  %v182 = vpack.c.bf16 %v174, %v174
  %v183 = vpack.c.bf16 %v175, %v175
  %v184 = vpack.c.bf16 %v176, %v176
  %v185 = vpack.c.bf16 %v177, %v177
  %v186 = vpack.c.bf16 %v178, %v178
  %v187 = vpack.c.bf16 %v179, %v179
  %v188 = vpack.c.bf16 %v180, %v180
  %v189 = vpack.c.bf16 %v181, %v181
  %v190 = vpack.c.bf16 %v170, %v170
  %v191 = vpack.c.bf16 %v172, %v172
  %v194 = vunpack.c.l.b16 %v190
  %v195 = vunpack.c.l.b16 %v191
  %v196 = vpack.c.b16 %v195, %v194
  %v198 = vunpack.c.l.bf16 %v196
  %v199 = vunpack.c.h.bf16 %v196
  %v200 = vunpack.c.l.bf16 %v182
  %v201 = vunpack.c.l.bf16 %v183
  %v202 = vunpack.c.l.bf16 %v184
  %v203 = vunpack.c.l.bf16 %v185
  %v204 = vunpack.c.l.bf16 %v186
  %v205 = vunpack.c.l.bf16 %v187
  %v206 = vunpack.c.l.bf16 %v188
  %v207 = vunpack.c.l.bf16 %v189
  %216 = vrot.lane.b32.xlu0 %v200, 32
  %v217 = vpop.permute.xlu0 %216
  %218 = vrot.lane.b32.xlu0 %v201, 32
  %v219 = vpop.permute.xlu0 %218
  %220 = vrot.lane.b32.xlu0 %v202, 32
  %v221 = vpop.permute.xlu0 %220
  %222 = vrot.lane.b32.xlu0 %v203, 32
  %v223 = vpop.permute.xlu0 %222
  %224 = vrot.lane.b32.xlu0 %v204, 32
  %v225 = vpop.permute.xlu0 %224
  %226 = vrot.lane.b32.xlu0 %v205, 32
  %v227 = vpop.permute.xlu0 %226
  %228 = vrot.lane.b32.xlu0 %v206, 32
  %v229 = vpop.permute.xlu0 %228
  %230 = vrot.lane.b32.xlu0 %v207, 32
  %v231 = vpop.permute.xlu0 %230
  %v240 = vmul.f32 %v198, %v217
  %v241 = vmul.f32 %v199, %v219
  %v242 = vmul.f32 %v198, %v221
  %v243 = vmul.f32 %v199, %v223
  %v244 = vmul.f32 %v198, %v225
  %v245 = vmul.f32 %v199, %v227
  %v246 = vmul.f32 %v198, %v229
  %v247 = vmul.f32 %v199, %v231
  %v248 = vpack.c.bf16 %v241, %v240
  %v249 = vpack.c.bf16 %v243, %v242
  %v250 = vpack.c.bf16 %v245, %v244
  %v251 = vpack.c.bf16 %v247, %v246
  %252 = vrot.lane.b32.xlu0 %v200, 64
  %v253 = vpop.permute.xlu0 %252
  %254 = vrot.lane.b32.xlu0 %v201, 64
  %v255 = vpop.permute.xlu0 %254
  %256 = vrot.lane.b32.xlu0 %v202, 64
  %v257 = vpop.permute.xlu0 %256
  %258 = vrot.lane.b32.xlu0 %v203, 64
  %v259 = vpop.permute.xlu0 %258
  %260 = vrot.lane.b32.xlu0 %v204, 64
  %v261 = vpop.permute.xlu0 %260
  %262 = vrot.lane.b32.xlu0 %v205, 64
  %v263 = vpop.permute.xlu0 %262
  %264 = vrot.lane.b32.xlu0 %v206, 64
  %v265 = vpop.permute.xlu0 %264
  %266 = vrot.lane.b32.xlu0 %v207, 64
  %v267 = vpop.permute.xlu0 %266
  %v276 = vmul.f32 %v198, %v253
  %v277 = vmul.f32 %v199, %v255
  %v278 = vmul.f32 %v198, %v257
  %v279 = vmul.f32 %v199, %v259
  %v280 = vmul.f32 %v198, %v261
  %v281 = vmul.f32 %v199, %v263
  %v282 = vmul.f32 %v198, %v265
  %v283 = vmul.f32 %v199, %v267
  %v284 = vpack.c.bf16 %v277, %v276
  %v285 = vpack.c.bf16 %v279, %v278
  %v286 = vpack.c.bf16 %v281, %v280
  %v287 = vpack.c.bf16 %v283, %v282
  %v288 = vld [vmem:[%s3 + $0x128] sm:$0xff]
  %v289 = vld [vmem:[%s3 + $0x130] sm:$0xff]
  %v290 = vld [vmem:[%s3 + $0xa8] sm:$0xff]
  %v291 = vld [vmem:[%s3 + $0xb0] sm:$0xff]
  %v292 = vld [vmem:[%s3 + $0xb8] sm:$0xff]
  %v293 = vld [vmem:[%s3 + $0xc0] sm:$0xff]
  %v294 = vld [vmem:[%s3 + $0xc8] sm:$0xff]
  %v295 = vld [vmem:[%s3 + $0xd0] sm:$0xff]
  %v296 = vld [vmem:[%s3 + $0xd8] sm:$0xff]
  %v297 = vld [vmem:[%s3 + $0xe0] sm:$0xff]
  %v298 = vpack.c.bf16 %v172, %v170
  %303 = vrot.lane.b32.xlu0 %v248, 96
  %v304 = vpop.permute.xlu0 %303
  %305 = vrot.lane.b32.xlu0 %v249, 96
  %v306 = vpop.permute.xlu0 %305
  %307 = vrot.lane.b32.xlu0 %v250, 96
  %v308 = vpop.permute.xlu0 %307
  %309 = vrot.lane.b32.xlu0 %v251, 96
  %v310 = vpop.permute.xlu0 %309
  %v312 = vsel %vm156, %v298, 0
  %v315 = vsel %vm156, %v304, 0
  %v318 = vsel %vm156, %v306, 0
  %v321 = vsel %vm156, %v308, 0
  %v324 = vsel %vm156, %v310, 0
  %326 = vmatpush.bf16.xpose.msra.mxu0 0
  %327 = vmatpush.bf16.xpose.msra.mxu0 0
  %328 = vmatpush.bf16.xpose.msra.mxu0 0
  %329 = vmatpush.bf16.xpose.msra.mxu0 0
  %330 = vmatpush.bf16.xpose.msra.mxu0 %v324
  %331 = vmatpush.bf16.xpose.msra.mxu0 %v321
  %332 = vmatpush.bf16.xpose.msra.mxu0 %v318
  %333 = vmatpush.bf16.xpose.msra.mxu0 %v315
  %334 = vmatmul.bf16.gmra.mxu0 %v312
  %v335 = vpop.f32.mrf.mxu0
  %v336 = vadd.f32 %v288, %v335
  %v337 = vpop.f32.mrf.mxu0
  %v338 = vadd.f32 %v289, %v337
  %339 = vdwg.mxu0
  %vm340 = vcmask 523264
  %v341 = vsel %vm340, %v336, -inf
  %342 = vmax.xlane.f32.xlu0 %v341
  %v343 = vpop.xlane.xlu0 %342
  %v344 = vsel %vm340, %v338, -inf
  %345 = vmax.xlane.f32.xlu0 %v344
  %v346 = vpop.xlane.xlu0 %345
  %v347 = vsub.f32 %v336, %v343
  %v348 = vsub.f32 %v338, %v346
  %v349 = vmul.f32 %v347, 1.442695
  %v350 = vpow.pop %v349
  %v351 = vmul.f32 %v348, 1.442695
  %v352 = vpow.pop %v351
  %v354 = vsel %vm340, %v350, 0
  %v357 = vsel %vm340, %v352, 0
  %359 = vmatpush.msra.mxu0 0.0
  %360 = vmatpush.msra.mxu0 0.0
  %361 = vmatpush.msra.mxu0 0.0
  %362 = vmatpush.msra.mxu0 0.0
  %363 = vmatpush.msra.mxu0 0.0
  %364 = vmatpush.msra.mxu0 0.0
  %365 = vmatpush.msra.mxu0 0.0
  %366 = vmatpush.msra.mxu0 0.0
  %367 = vmatpush.msra.mxu0 %v297
  %368 = vmatpush.msra.mxu0 %v296
  %369 = vmatpush.msra.mxu0 %v295
  %370 = vmatpush.msra.mxu0 %v294
  %371 = vmatpush.msra.mxu0 %v293
  %372 = vmatpush.msra.mxu0 %v292
  %373 = vmatpush.msra.mxu0 %v291
  %374 = vmatpush.msra.mxu0 %v290
  %375 = vmatmul.f32.gmra.mxu0 %v354
  %v376 = vpop.f32.mrf.mxu0
  %v377 = vadd.f32 0.0, %v376
  %378 = vmatmul.f32.gmra.mxu0 %v357
  %v379 = vpop.f32.mrf.mxu0
  %v380 = vadd.f32 0.0, %v379
  %381 = vdwg.mxu0
  %v382 = vmax.f32 %v377, 1e-30
  %v383 = vmax.f32 %v380, 1e-30
  %v384 = vrcp.pop %v382
  %v385 = vrcp.pop %v383
  %v386 = vmul.f32 %v350, %v384
  %v387 = vmul.f32 %v352, %v385
  %v388 = vpack.c.bf16 %v387, %v386
  %393 = vrot.lane.b32.xlu0 %v284, 64
  %v394 = vpop.permute.xlu0 %393
  %395 = vrot.lane.b32.xlu0 %v285, 64
  %v396 = vpop.permute.xlu0 %395
  %397 = vrot.lane.b32.xlu0 %v286, 64
  %v398 = vpop.permute.xlu0 %397
  %399 = vrot.lane.b32.xlu0 %v287, 64
  %v400 = vpop.permute.xlu0 %399
  %v406 = vsel %vm340, %v388, 0
  %408 = vmatpush.bf16.msra.mxu0 0
  %409 = vmatpush.bf16.msra.mxu0 0
  %410 = vmatpush.bf16.msra.mxu0 0
  %411 = vmatpush.bf16.msra.mxu0 0
  %412 = vmatpush.bf16.msra.mxu0 %v400
  %413 = vmatpush.bf16.msra.mxu0 %v398
  %414 = vmatpush.bf16.msra.mxu0 %v396
  %415 = vmatpush.bf16.msra.mxu0 %v394
  %416 = vmatmul.bf16.gmra.mxu0 %v406
  %v417 = vpop.f32.mrf.mxu0
  %v418 = vadd.f32 0.0, %v417
  %v419 = vpop.f32.mrf.mxu0
  %v420 = vadd.f32 0.0, %v419
  %421 = vdwg.mxu0
  %v422 = vld [vmem:[%s1 + $0x50] sm:$0xf]
  %v423 = vld [vmem:[%s1 + $0x54] sm:$0xf]
  %v424 = vld [vmem:[%s1 + $0x58] sm:$0xf]
  %v425 = vld [vmem:[%s1 + $0x5c] sm:$0xf]
  %v426 = vpack.c.bf16 %v420, %v418
  %v427 = vld [vmem:[%s2 + $0x8] sm:$0x1]
  %v428 = vperm.slane %v427, 0
  %v433 = vunpack.c.l.b16 %v422
  %v434 = vunpack.c.l.b16 %v423
  %v435 = vunpack.c.l.b16 %v424
  %v436 = vunpack.c.l.b16 %v425
  %v437 = vpack.c.b16 %v434, %v433
  %v438 = vpack.c.b16 %v436, %v435
  %v442 = vsel %vm156, %v426, 0
  %444 = vmatpush.bf16.msra.mxu0 0
  %445 = vmatpush.bf16.msra.mxu0 0
  %446 = vmatpush.bf16.msra.mxu0 0
  %447 = vmatpush.bf16.msra.mxu0 0
  %448 = vmatpush.bf16.msra.mxu0 0
  %449 = vmatpush.bf16.msra.mxu0 0
  %450 = vmatpush.bf16.msra.mxu0 %v438
  %451 = vmatpush.bf16.msra.mxu0 %v437
  %452 = vmatmul.bf16.gmra.mxu0 %v442
  %v453 = vpop.f32.mrf.mxu0
  %v454 = vadd.f32 %v428, %v453
  %v455 = vpop.f32.mrf.mxu0
  %v456 = vadd.f32 %v428, %v455
  %457 = vdwg.mxu0
  %v458 = vadd.f32 %v454, %v128
  %v459 = vadd.f32 %v456, %v130
  %v460 = vld [vmem:[%s2 + $0x10] sm:$0x1]
  %v461 = vld [vmem:[%s2 + $0x18] sm:$0x1]
  %v462 = vsel %vm156, %v458, 0.0
  %463 = vadd.xlane.f32.xlu0 %v462
  %v464 = vpop.xlane.xlu0 %463
  %v465 = vsel %vm156, %v459, 0.0
  %466 = vadd.xlane.f32.xlu0 %v465
  %v467 = vpop.xlane.xlu0 %466
  %v468 = vrcp.pop 32.0
  %v469 = vmul.f32 32.0, %v468
  %v470 = vsub.f32 1.0, %v469
  %v471 = vmul.f32 %v468, %v470
  %v472 = vadd.f32 %v468, %v471
  %vm473 = vweird.f32 %v468
  %v474 = vsel %vm473, %v468, %v472
  %v475 = vmul.f32 %v464, %v474
  %v476 = vmul.f32 %v467, %v474
  %v477 = vsub.f32 %v458, %v475
  %v478 = vsub.f32 %v459, %v476
  %v479 = vmul.f32 %v477, %v477
  %v480 = vmul.f32 %v478, %v478
  %v481 = vsel %vm156, %v479, 0.0
  %482 = vadd.xlane.f32.xlu0 %v481
  %v483 = vpop.xlane.xlu0 %482
  %v484 = vsel %vm156, %v480, 0.0
  %485 = vadd.xlane.f32.xlu0 %v484
  %v486 = vpop.xlane.xlu0 %485
  %v487 = vmul.f32 %v483, %v474
  %v488 = vmul.f32 %v486, %v474
  %v489 = vadd.f32 %v487, 1e-05
  %v490 = vadd.f32 %v488, 1e-05
  %v491 = vrsqrt.pop %v489
  %v492 = vmul.f32 %v491, %v489
  %v493 = vmul.f32 %v492, %v491
  %v494 = vmul.f32 0.5, %v493
  %v495 = vsub.f32 1.5, %v494
  %v496 = vmul.f32 %v491, %v495
  %vm497 = vweird.f32 %v489
  %vm498 = vweird.f32 %v491
  %vm499 = vmor %vm497, %vm498
  %v500 = vsel %vm499, %v491, %v496
  %v501 = vrsqrt.pop %v490
  %v502 = vmul.f32 %v501, %v490
  %v503 = vmul.f32 %v502, %v501
  %v504 = vmul.f32 0.5, %v503
  %v505 = vsub.f32 1.5, %v504
  %v506 = vmul.f32 %v501, %v505
  %vm507 = vweird.f32 %v490
  %vm508 = vweird.f32 %v501
  %vm509 = vmor %vm507, %vm508
  %v510 = vsel %vm509, %v501, %v506
  %v511 = vmul.f32 %v477, %v500
  %v512 = vmul.f32 %v478, %v510
  %v513 = vperm.slane %v460, 0
  %v514 = vmul.f32 %v511, %v513
  %v515 = vmul.f32 %v512, %v513
  %v516 = vperm.slane %v461, 0
  %v517 = vadd.f32 %v514, %v516
  %v518 = vadd.f32 %v515, %v516
  %v519 = vld [vmem:[%s1 + $0x60] sm:$0xf]
  %v520 = vld [vmem:[%s1 + $0x64] sm:$0xf]
  %v521 = vld [vmem:[%s1 + $0x68] sm:$0xf]
  %v522 = vld [vmem:[%s1 + $0x6c] sm:$0xf]
  %v523 = vpack.c.bf16 %v518, %v517
  %v524 = vld [vmem:[%s2 + $0x20] sm:$0x1]
  %v525 = vperm.slane %v524, 0
  %v530 = vunpack.c.l.b16 %v519
  %v531 = vunpack.c.l.b16 %v520
  %v532 = vunpack.c.l.b16 %v521
  %v533 = vunpack.c.l.b16 %v522
  %v534 = vpack.c.b16 %v531, %v530
  %v535 = vpack.c.b16 %v533, %v532
  %v539 = vsel %vm156, %v523, 0
  %541 = vmatpush.bf16.msra.mxu0 0
  %542 = vmatpush.bf16.msra.mxu0 0
  %543 = vmatpush.bf16.msra.mxu0 0
  %544 = vmatpush.bf16.msra.mxu0 0
  %545 = vmatpush.bf16.msra.mxu0 0
  %546 = vmatpush.bf16.msra.mxu0 0
  %547 = vmatpush.bf16.msra.mxu0 %v535
  %548 = vmatpush.bf16.msra.mxu0 %v534
  %549 = vmatmul.bf16.gmra.mxu0 %v539
  %v550 = vpop.f32.mrf.mxu0
  %v551 = vadd.f32 %v525, %v550
  %v552 = vpop.f32.mrf.mxu0
  %v553 = vadd.f32 %v525, %v552
  %554 = vdwg.mxu0
  %v555 = vmax.f32 %v551, 0.0
  %v556 = vmax.f32 %v553, 0.0
  %v557 = vld [vmem:[%s1 + $0x70] sm:$0xf]
  %v558 = vld [vmem:[%s1 + $0x74] sm:$0xf]
  %v559 = vld [vmem:[%s1 + $0x78] sm:$0xf]
  %v560 = vld [vmem:[%s1 + $0x7c] sm:$0xf]
  %v561 = vld [vmem:[%s1 + $0x80] sm:$0xf]
  %v562 = vld [vmem:[%s1 + $0x84] sm:$0xf]
  %v563 = vld [vmem:[%s1 + $0x88] sm:$0xf]
  %v564 = vld [vmem:[%s1 + $0x8c] sm:$0xf]
  %v565 = vpack.c.bf16 %v556, %v555
  %v566 = vld [vmem:[%s2 + $0x28] sm:$0x1]
  %v567 = vperm.slane %v566, 0
  %v576 = vunpack.c.l.b16 %v557
  %v577 = vunpack.c.l.b16 %v558
  %v578 = vunpack.c.l.b16 %v559
  %v579 = vunpack.c.l.b16 %v560
  %v580 = vunpack.c.l.b16 %v561
  %v581 = vunpack.c.l.b16 %v562
  %v582 = vunpack.c.l.b16 %v563
  %v583 = vunpack.c.l.b16 %v564
  %v584 = vpack.c.b16 %v577, %v576
  %v585 = vpack.c.b16 %v579, %v578
  %v586 = vpack.c.b16 %v581, %v580
  %v587 = vpack.c.b16 %v583, %v582
  %v593 = vsel %vm340, %v565, 0
  %595 = vmatpush.bf16.msra.mxu0 0
  %596 = vmatpush.bf16.msra.mxu0 0
  %597 = vmatpush.bf16.msra.mxu0 0
  %598 = vmatpush.bf16.msra.mxu0 0
  %599 = vmatpush.bf16.msra.mxu0 %v587
  %600 = vmatpush.bf16.msra.mxu0 %v586
  %601 = vmatpush.bf16.msra.mxu0 %v585
  %602 = vmatpush.bf16.msra.mxu0 %v584
  %603 = vmatmul.bf16.gmra.mxu0 %v593
  %v604 = vpop.f32.mrf.mxu0
  %v605 = vadd.f32 %v567, %v604
  %v606 = vpop.f32.mrf.mxu0
  %v607 = vadd.f32 %v567, %v606
  %608 = vdwg.mxu0
  %v609 = vadd.f32 %v605, %v517
  %v610 = vadd.f32 %v607, %v518
  %v611 = vld [vmem:[%s2 + $0x30] sm:$0x1]
  %v612 = vld [vmem:[%s2 + $0x38] sm:$0x1]
  %v613 = vsel %vm156, %v609, 0.0
  %614 = vadd.xlane.f32.xlu0 %v613
  %v615 = vpop.xlane.xlu0 %614
  %v616 = vsel %vm156, %v610, 0.0
  %617 = vadd.xlane.f32.xlu0 %v616
  %v618 = vpop.xlane.xlu0 %617
  %v619 = vmul.f32 %v615, %v474
  %v620 = vmul.f32 %v618, %v474
  %v621 = vsub.f32 %v609, %v619
  %v622 = vsub.f32 %v610, %v620
  %v623 = vmul.f32 %v621, %v621
  %v624 = vmul.f32 %v622, %v622
  %v625 = vsel %vm156, %v623, 0.0
  %626 = vadd.xlane.f32.xlu0 %v625
  %v627 = vpop.xlane.xlu0 %626
  %v628 = vsel %vm156, %v624, 0.0
  %629 = vadd.xlane.f32.xlu0 %v628
  %v630 = vpop.xlane.xlu0 %629
  %v631 = vmul.f32 %v627, %v474
  %v632 = vmul.f32 %v630, %v474
  %v633 = vadd.f32 %v631, 1e-05
  %v634 = vadd.f32 %v632, 1e-05
  %v635 = vrsqrt.pop %v633
  %v636 = vmul.f32 %v635, %v633
  %v637 = vmul.f32 %v636, %v635
  %v638 = vmul.f32 0.5, %v637
  %v639 = vsub.f32 1.5, %v638
  %v640 = vmul.f32 %v635, %v639
  %vm641 = vweird.f32 %v633
  %vm642 = vweird.f32 %v635
  %vm643 = vmor %vm641, %vm642
  %v644 = vsel %vm643, %v635, %v640
  %v645 = vrsqrt.pop %v634
  %v646 = vmul.f32 %v645, %v634
  %v647 = vmul.f32 %v646, %v645
  %v648 = vmul.f32 0.5, %v647
  %v649 = vsub.f32 1.5, %v648
  %v650 = vmul.f32 %v645, %v649
  %vm651 = vweird.f32 %v634
  %vm652 = vweird.f32 %v645
  %vm653 = vmor %vm651, %vm652
  %v654 = vsel %vm653, %v645, %v650
  %v655 = vmul.f32 %v621, %v644
  %v656 = vmul.f32 %v622, %v654
  %v657 = vperm.slane %v611, 0
  %v658 = vmul.f32 %v655, %v657
  %v659 = vmul.f32 %v656, %v657
  %v660 = vperm.slane %v612, 0
  %v661 = vadd.f32 %v658, %v660
  %v662 = vadd.f32 %v659, %v660
  %v663 = vpack.c.bf16 %v662, %v661
  %v665 = vsel %vm156, %v663, 0
  %667 = vmatpush.bf16.msra.mxu0 0
  %668 = vmatpush.bf16.msra.mxu0 0
  %669 = vmatpush.bf16.msra.mxu0 0
  %670 = vmatpush.bf16.msra.mxu0 0
  %671 = vmatpush.bf16.msra.mxu0 0
  %672 = vmatpush.bf16.msra.mxu0 0
  %673 = vmatpush.bf16.msra.mxu0 %v153
  %674 = vmatpush.bf16.msra.mxu0 %v152
  %675 = vmatmul.bf16.gmra.mxu0 %v665
  %v676 = vpop.f32.mrf.mxu0
  %v677 = vadd.f32 %v143, %v676
  %v678 = vpop.f32.mrf.mxu0
  %v679 = vadd.f32 %v143, %v678
  %680 = vdwg.mxu0
  %v681 = vpack.c.bf16 %v677, %v677
  %v682 = vpack.c.bf16 %v679, %v679
  %v685 = vunpack.c.l.b16 %v681
  %v686 = vunpack.c.l.b16 %v682
  %v687 = vpack.c.b16 %v686, %v685
  %v689 = vunpack.c.l.bf16 %v687
  %v690 = vunpack.c.h.bf16 %v687
  %v691 = vmul.f32 %v689, %v217
  %v692 = vmul.f32 %v690, %v219
  %v693 = vmul.f32 %v689, %v221
  %v694 = vmul.f32 %v690, %v223
  %v695 = vmul.f32 %v689, %v225
  %v696 = vmul.f32 %v690, %v227
  %v697 = vmul.f32 %v689, %v229
  %v698 = vmul.f32 %v690, %v231
  %v699 = vpack.c.bf16 %v692, %v691
  %v700 = vpack.c.bf16 %v694, %v693
  %v701 = vpack.c.bf16 %v696, %v695
  %v702 = vpack.c.bf16 %v698, %v697
  %v703 = vmul.f32 %v689, %v253
  %v704 = vmul.f32 %v690, %v255
  %v705 = vmul.f32 %v689, %v257
  %v706 = vmul.f32 %v690, %v259
  %v707 = vmul.f32 %v689, %v261
  %v708 = vmul.f32 %v690, %v263
  %v709 = vmul.f32 %v689, %v265
  %v710 = vmul.f32 %v690, %v267
  %v711 = vpack.c.bf16 %v704, %v703
  %v712 = vpack.c.bf16 %v706, %v705
  %v713 = vpack.c.bf16 %v708, %v707
  %v714 = vpack.c.bf16 %v710, %v709
  %v715 = vpack.c.bf16 %v679, %v677
  %720 = vrot.lane.b32.xlu0 %v699, 96
  %v721 = vpop.permute.xlu0 %720
  %722 = vrot.lane.b32.xlu0 %v700, 96
  %v723 = vpop.permute.xlu0 %722
  %724 = vrot.lane.b32.xlu0 %v701, 96
  %v725 = vpop.permute.xlu0 %724
  %726 = vrot.lane.b32.xlu0 %v702, 96
  %v727 = vpop.permute.xlu0 %726
  %v729 = vsel %vm156, %v715, 0
  %v732 = vsel %vm156, %v721, 0
  %v735 = vsel %vm156, %v723, 0
  %v738 = vsel %vm156, %v725, 0
  %v741 = vsel %vm156, %v727, 0
  %743 = vmatpush.bf16.xpose.msra.mxu0 0
  %744 = vmatpush.bf16.xpose.msra.mxu0 0
  %745 = vmatpush.bf16.xpose.msra.mxu0 0
  %746 = vmatpush.bf16.xpose.msra.mxu0 0
  %747 = vmatpush.bf16.xpose.msra.mxu0 %v741
  %748 = vmatpush.bf16.xpose.msra.mxu0 %v738
  %749 = vmatpush.bf16.xpose.msra.mxu0 %v735
  %750 = vmatpush.bf16.xpose.msra.mxu0 %v732
  %751 = vmatmul.bf16.gmra.mxu0 %v729
  %v752 = vpop.f32.mrf.mxu0
  %v753 = vadd.f32 %v288, %v752
  %v754 = vpop.f32.mrf.mxu0
  %v755 = vadd.f32 %v289, %v754
  %756 = vdwg.mxu0
  %v757 = vsel %vm340, %v753, -inf
  %758 = vmax.xlane.f32.xlu0 %v757
  %v759 = vpop.xlane.xlu0 %758
  %v760 = vsel %vm340, %v755, -inf
  %761 = vmax.xlane.f32.xlu0 %v760
  %v762 = vpop.xlane.xlu0 %761
  %v763 = vsub.f32 %v753, %v759
  %v764 = vsub.f32 %v755, %v762
  %v765 = vmul.f32 %v763, 1.442695
  %v766 = vpow.pop %v765
  %v767 = vmul.f32 %v764, 1.442695
  %v768 = vpow.pop %v767
  %v770 = vsel %vm340, %v766, 0
  %v773 = vsel %vm340, %v768, 0
  %775 = vmatpush.msra.mxu0 0.0
  %776 = vmatpush.msra.mxu0 0.0
  %777 = vmatpush.msra.mxu0 0.0
  %778 = vmatpush.msra.mxu0 0.0
  %779 = vmatpush.msra.mxu0 0.0
  %780 = vmatpush.msra.mxu0 0.0
  %781 = vmatpush.msra.mxu0 0.0
  %782 = vmatpush.msra.mxu0 0.0
  %783 = vmatpush.msra.mxu0 %v297
  %784 = vmatpush.msra.mxu0 %v296
  %785 = vmatpush.msra.mxu0 %v295
  %786 = vmatpush.msra.mxu0 %v294
  %787 = vmatpush.msra.mxu0 %v293
  %788 = vmatpush.msra.mxu0 %v292
  %789 = vmatpush.msra.mxu0 %v291
  %790 = vmatpush.msra.mxu0 %v290
  %791 = vmatmul.f32.gmra.mxu0 %v770
  %v792 = vpop.f32.mrf.mxu0
  %v793 = vadd.f32 0.0, %v792
  %794 = vmatmul.f32.gmra.mxu0 %v773
  %v795 = vpop.f32.mrf.mxu0
  %v796 = vadd.f32 0.0, %v795
  %797 = vdwg.mxu0
  %v798 = vmax.f32 %v793, 1e-30
  %v799 = vmax.f32 %v796, 1e-30
  %v800 = vrcp.pop %v798
  %v801 = vrcp.pop %v799
  %v802 = vmul.f32 %v766, %v800
  %v803 = vmul.f32 %v768, %v801
  %v804 = vpack.c.bf16 %v803, %v802
  %809 = vrot.lane.b32.xlu0 %v711, 64
  %v810 = vpop.permute.xlu0 %809
  %811 = vrot.lane.b32.xlu0 %v712, 64
  %v812 = vpop.permute.xlu0 %811
  %813 = vrot.lane.b32.xlu0 %v713, 64
  %v814 = vpop.permute.xlu0 %813
  %815 = vrot.lane.b32.xlu0 %v714, 64
  %v816 = vpop.permute.xlu0 %815
  %v822 = vsel %vm340, %v804, 0
  %824 = vmatpush.bf16.msra.mxu0 0
  %825 = vmatpush.bf16.msra.mxu0 0
  %826 = vmatpush.bf16.msra.mxu0 0
  %827 = vmatpush.bf16.msra.mxu0 0
  %828 = vmatpush.bf16.msra.mxu0 %v816
  %829 = vmatpush.bf16.msra.mxu0 %v814
  %830 = vmatpush.bf16.msra.mxu0 %v812
  %831 = vmatpush.bf16.msra.mxu0 %v810
  %832 = vmatmul.bf16.gmra.mxu0 %v822
  %v833 = vpop.f32.mrf.mxu0
  %v834 = vadd.f32 0.0, %v833
  %v835 = vpop.f32.mrf.mxu0
  %v836 = vadd.f32 0.0, %v835
  %837 = vdwg.mxu0
  %v838 = vpack.c.bf16 %v836, %v834
  %v840 = vsel %vm156, %v838, 0
  %842 = vmatpush.bf16.msra.mxu0 0
  %843 = vmatpush.bf16.msra.mxu0 0
  %844 = vmatpush.bf16.msra.mxu0 0
  %845 = vmatpush.bf16.msra.mxu0 0
  %846 = vmatpush.bf16.msra.mxu0 0
  %847 = vmatpush.bf16.msra.mxu0 0
  %848 = vmatpush.bf16.msra.mxu0 %v438
  %849 = vmatpush.bf16.msra.mxu0 %v437
  %850 = vmatmul.bf16.gmra.mxu0 %v840
  %v851 = vpop.f32.mrf.mxu0
  %v852 = vadd.f32 %v428, %v851
  %v853 = vpop.f32.mrf.mxu0
  %v854 = vadd.f32 %v428, %v853
  %855 = vdwg.mxu0
  %v856 = vadd.f32 %v852, %v661
  %v857 = vadd.f32 %v854, %v662
  %v858 = vsel %vm156, %v856, 0.0
  %859 = vadd.xlane.f32.xlu0 %v858
  %v860 = vpop.xlane.xlu0 %859
  %v861 = vsel %vm156, %v857, 0.0
  %862 = vadd.xlane.f32.xlu0 %v861
  %v863 = vpop.xlane.xlu0 %862
  %v864 = vmul.f32 %v860, %v474
  %v865 = vmul.f32 %v863, %v474
  %v866 = vsub.f32 %v856, %v864
  %v867 = vsub.f32 %v857, %v865
  %v868 = vmul.f32 %v866, %v866
  %v869 = vmul.f32 %v867, %v867
  %v870 = vsel %vm156, %v868, 0.0
  %871 = vadd.xlane.f32.xlu0 %v870
  %v872 = vpop.xlane.xlu0 %871
  %v873 = vsel %vm156, %v869, 0.0
  %874 = vadd.xlane.f32.xlu0 %v873
  %v875 = vpop.xlane.xlu0 %874
  %v876 = vmul.f32 %v872, %v474
  %v877 = vmul.f32 %v875, %v474
  %v878 = vadd.f32 %v876, 1e-05
  %v879 = vadd.f32 %v877, 1e-05
  %v880 = vrsqrt.pop %v878
  %v881 = vmul.f32 %v880, %v878
  %v882 = vmul.f32 %v881, %v880
  %v883 = vmul.f32 0.5, %v882
  %v884 = vsub.f32 1.5, %v883
  %v885 = vmul.f32 %v880, %v884
  %vm886 = vweird.f32 %v878
  %vm887 = vweird.f32 %v880
  %vm888 = vmor %vm886, %vm887
  %v889 = vsel %vm888, %v880, %v885
  %v890 = vrsqrt.pop %v879
  %v891 = vmul.f32 %v890, %v879
  %v892 = vmul.f32 %v891, %v890
  %v893 = vmul.f32 0.5, %v892
  %v894 = vsub.f32 1.5, %v893
  %v895 = vmul.f32 %v890, %v894
  %vm896 = vweird.f32 %v879
  %vm897 = vweird.f32 %v890
  %vm898 = vmor %vm896, %vm897
  %v899 = vsel %vm898, %v890, %v895
  %v900 = vmul.f32 %v866, %v889
  %v901 = vmul.f32 %v867, %v899
  %v902 = vmul.f32 %v900, %v513
  %v903 = vmul.f32 %v901, %v513
  %v904 = vadd.f32 %v902, %v516
  %v905 = vadd.f32 %v903, %v516
  %v906 = vpack.c.bf16 %v905, %v904
  %v908 = vsel %vm156, %v906, 0
  %910 = vmatpush.bf16.msra.mxu0 0
  %911 = vmatpush.bf16.msra.mxu0 0
  %912 = vmatpush.bf16.msra.mxu0 0
  %913 = vmatpush.bf16.msra.mxu0 0
  %914 = vmatpush.bf16.msra.mxu0 0
  %915 = vmatpush.bf16.msra.mxu0 0
  %916 = vmatpush.bf16.msra.mxu0 %v535
  %917 = vmatpush.bf16.msra.mxu0 %v534
  %918 = vmatmul.bf16.gmra.mxu0 %v908
  %v919 = vpop.f32.mrf.mxu0
  %v920 = vadd.f32 %v525, %v919
  %v921 = vpop.f32.mrf.mxu0
  %v922 = vadd.f32 %v525, %v921
  %923 = vdwg.mxu0
  %v924 = vmax.f32 %v920, 0.0
  %v925 = vmax.f32 %v922, 0.0
  %v926 = vpack.c.bf16 %v925, %v924
  %v928 = vsel %vm340, %v926, 0
  %930 = vmatpush.bf16.msra.mxu0 0
  %931 = vmatpush.bf16.msra.mxu0 0
  %932 = vmatpush.bf16.msra.mxu0 0
  %933 = vmatpush.bf16.msra.mxu0 0
  %934 = vmatpush.bf16.msra.mxu0 %v587
  %935 = vmatpush.bf16.msra.mxu0 %v586
  %936 = vmatpush.bf16.msra.mxu0 %v585
  %937 = vmatpush.bf16.msra.mxu0 %v584
  %938 = vmatmul.bf16.gmra.mxu0 %v928
  %v939 = vpop.f32.mrf.mxu0
  %v940 = vadd.f32 %v567, %v939
  %v941 = vpop.f32.mrf.mxu0
  %v942 = vadd.f32 %v567, %v941
  %943 = vdwg.mxu0
  %v944 = vadd.f32 %v940, %v904
  %v945 = vadd.f32 %v942, %v905
  %v946 = vsel %vm156, %v944, 0.0
  %947 = vadd.xlane.f32.xlu0 %v946
  %v948 = vpop.xlane.xlu0 %947
  %v949 = vsel %vm156, %v945, 0.0
  %950 = vadd.xlane.f32.xlu0 %v949
  %v951 = vpop.xlane.xlu0 %950
  %v952 = vmul.f32 %v948, %v474
  %v953 = vmul.f32 %v951, %v474
  %v954 = vsub.f32 %v944, %v952
  %v955 = vsub.f32 %v945, %v953
  %v956 = vmul.f32 %v954, %v954
  %v957 = vmul.f32 %v955, %v955
  %v958 = vsel %vm156, %v956, 0.0
  %959 = vadd.xlane.f32.xlu0 %v958
  %v960 = vpop.xlane.xlu0 %959
  %v961 = vsel %vm156, %v957, 0.0
  %962 = vadd.xlane.f32.xlu0 %v961
  %v963 = vpop.xlane.xlu0 %962
  %v964 = vmul.f32 %v960, %v474
  %v965 = vmul.f32 %v963, %v474
  %v966 = vadd.f32 %v964, 1e-05
  %v967 = vadd.f32 %v965, 1e-05
  %v968 = vrsqrt.pop %v966
  %v969 = vmul.f32 %v968, %v966
  %v970 = vmul.f32 %v969, %v968
  %v971 = vmul.f32 0.5, %v970
  %v972 = vsub.f32 1.5, %v971
  %v973 = vmul.f32 %v968, %v972
  %vm974 = vweird.f32 %v966
  %vm975 = vweird.f32 %v968
  %vm976 = vmor %vm974, %vm975
  %v977 = vsel %vm976, %v968, %v973
  %v978 = vrsqrt.pop %v967
  %v979 = vmul.f32 %v978, %v967
  %v980 = vmul.f32 %v979, %v978
  %v981 = vmul.f32 0.5, %v980
  %v982 = vsub.f32 1.5, %v981
  %v983 = vmul.f32 %v978, %v982
  %vm984 = vweird.f32 %v967
  %vm985 = vweird.f32 %v978
  %vm986 = vmor %vm984, %vm985
  %v987 = vsel %vm986, %v978, %v983
  %v988 = vmul.f32 %v954, %v977
  %v989 = vmul.f32 %v955, %v987
  %v990 = vmul.f32 %v988, %v657
  %v991 = vmul.f32 %v989, %v657
  %v992 = vadd.f32 %v990, %v660
  %v993 = vadd.f32 %v991, %v660
  %v994 = vld [vmem:[%s1 + $0xc0] sm:$0xf]
  %v995 = vld [vmem:[%s1 + $0xc4] sm:$0xf]
  %v996 = vld [vmem:[%s1 + $0xc8] sm:$0xf]
  %v997 = vld [vmem:[%s1 + $0xcc] sm:$0xf]
  %v998 = vpack.c.bf16 %v993, %v992
  %v999 = vld [vmem:[%s2 + $0x68] sm:$0x1]
  %v1000 = vperm.slane %v999, 0
  %v1005 = vunpack.c.l.b16 %v994
  %v1006 = vunpack.c.l.b16 %v995
  %v1007 = vunpack.c.l.b16 %v996
  %v1008 = vunpack.c.l.b16 %v997
  %v1009 = vpack.c.b16 %v1006, %v1005
  %v1010 = vpack.c.b16 %v1008, %v1007
  %v1014 = vsel %vm156, %v998, 0
  %1016 = vmatpush.bf16.msra.mxu0 0
  %1017 = vmatpush.bf16.msra.mxu0 0
  %1018 = vmatpush.bf16.msra.mxu0 0
  %1019 = vmatpush.bf16.msra.mxu0 0
  %1020 = vmatpush.bf16.msra.mxu0 0
  %1021 = vmatpush.bf16.msra.mxu0 0
  %1022 = vmatpush.bf16.msra.mxu0 %v1010
  %1023 = vmatpush.bf16.msra.mxu0 %v1009
  %1024 = vmatmul.bf16.gmra.mxu0 %v1014
  %v1025 = vpop.f32.mrf.mxu0
  %v1026 = vadd.f32 %v1000, %v1025
  %v1027 = vpop.f32.mrf.mxu0
  %v1028 = vadd.f32 %v1000, %v1027
  %1029 = vdwg.mxu0
  %v1030 = vpack.c.bf16 %v1026, %v1026
  %v1031 = vpack.c.bf16 %v1028, %v1028
  %v1034 = vunpack.c.l.b16 %v1030
  %v1035 = vunpack.c.l.b16 %v1031
  %v1036 = vpack.c.b16 %v1035, %v1034
  %v1038 = vunpack.c.l.bf16 %v1036
  %v1039 = vunpack.c.h.bf16 %v1036
  %v1040 = vmul.f32 %v1038, %v200
  %v1041 = vmul.f32 %v1039, %v201
  %v1042 = vmul.f32 %v1038, %v202
  %v1043 = vmul.f32 %v1039, %v203
  %v1044 = vmul.f32 %v1038, %v204
  %v1045 = vmul.f32 %v1039, %v205
  %v1046 = vmul.f32 %v1038, %v206
  %v1047 = vmul.f32 %v1039, %v207
  %v1048 = vpack.c.bf16 %v1041, %v1040
  %v1049 = vpack.c.bf16 %v1043, %v1042
  %v1050 = vpack.c.bf16 %v1045, %v1044
  %v1051 = vpack.c.bf16 %v1047, %v1046
  %v1052 = vmul.f32 %v1038, %v217
  %v1053 = vmul.f32 %v1039, %v219
  %v1054 = vmul.f32 %v1038, %v221
  %v1055 = vmul.f32 %v1039, %v223
  %v1056 = vmul.f32 %v1038, %v225
  %v1057 = vmul.f32 %v1039, %v227
  %v1058 = vmul.f32 %v1038, %v229
  %v1059 = vmul.f32 %v1039, %v231
  %v1060 = vpack.c.bf16 %v1053, %v1052
  %v1061 = vpack.c.bf16 %v1055, %v1054
  %v1062 = vpack.c.bf16 %v1057, %v1056
  %v1063 = vpack.c.bf16 %v1059, %v1058
  %v1064 = vld [vmem:[%s1 + $0x90] sm:$0xf]
  %v1065 = vld [vmem:[%s1 + $0x94] sm:$0xf]
  %v1066 = vld [vmem:[%s1 + $0x98] sm:$0xf]
  %v1067 = vld [vmem:[%s1 + $0x9c] sm:$0xf]
  %v1068 = vpack.c.bf16 %v135, %v133
  %v1069 = vld [vmem:[%s2 + $0x40] sm:$0x1]
  %v1070 = vperm.slane %v1069, 0
  %v1075 = vunpack.c.l.b16 %v1064
  %v1076 = vunpack.c.l.b16 %v1065
  %v1077 = vunpack.c.l.b16 %v1066
  %v1078 = vunpack.c.l.b16 %v1067
  %v1079 = vpack.c.b16 %v1076, %v1075
  %v1080 = vpack.c.b16 %v1078, %v1077
  %v1084 = vsel %vm156, %v1068, 0
  %1086 = vmatpush.bf16.msra.mxu0 0
  %1087 = vmatpush.bf16.msra.mxu0 0
  %1088 = vmatpush.bf16.msra.mxu0 0
  %1089 = vmatpush.bf16.msra.mxu0 0
  %1090 = vmatpush.bf16.msra.mxu0 0
  %1091 = vmatpush.bf16.msra.mxu0 0
  %1092 = vmatpush.bf16.msra.mxu0 %v1080
  %1093 = vmatpush.bf16.msra.mxu0 %v1079
  %1094 = vmatmul.bf16.gmra.mxu0 %v1084
  %v1095 = vpop.f32.mrf.mxu0
  %v1096 = vadd.f32 %v1070, %v1095
  %v1097 = vpop.f32.mrf.mxu0
  %v1098 = vadd.f32 %v1070, %v1097
  %1099 = vdwg.mxu0
  %v1100 = vld [vmem:[%s3 + $0x68] sm:$0xff]
  %v1101 = vld [vmem:[%s3 + $0x70] sm:$0xff]
  %v1102 = vld [vmem:[%s3 + $0x78] sm:$0xff]
  %v1103 = vld [vmem:[%s3 + $0x80] sm:$0xff]
  %v1104 = vld [vmem:[%s3 + $0x88] sm:$0xff]
  %v1105 = vld [vmem:[%s3 + $0x90] sm:$0xff]
  %v1106 = vld [vmem:[%s3 + $0x98] sm:$0xff]
  %v1107 = vld [vmem:[%s3 + $0xa0] sm:$0xff]
  %v1108 = vpack.c.bf16 %v1100, %v1100
  %v1109 = vpack.c.bf16 %v1101, %v1101
  %v1110 = vpack.c.bf16 %v1102, %v1102
  %v1111 = vpack.c.bf16 %v1103, %v1103
  %v1112 = vpack.c.bf16 %v1104, %v1104
  %v1113 = vpack.c.bf16 %v1105, %v1105
  %v1114 = vpack.c.bf16 %v1106, %v1106
  %v1115 = vpack.c.bf16 %v1107, %v1107
  %v1116 = vpack.c.bf16 %v1096, %v1096
  %v1117 = vpack.c.bf16 %v1098, %v1098
  %v1120 = vunpack.c.l.b16 %v1116
  %v1121 = vunpack.c.l.b16 %v1117
  %v1122 = vpack.c.b16 %v1121, %v1120
  %v1124 = vunpack.c.l.bf16 %v1122
  %v1125 = vunpack.c.h.bf16 %v1122
  %v1126 = vunpack.c.l.bf16 %v1108
  %v1127 = vunpack.c.l.bf16 %v1109
  %v1128 = vunpack.c.l.bf16 %v1110
  %v1129 = vunpack.c.l.bf16 %v1111
  %v1130 = vunpack.c.l.bf16 %v1112
  %v1131 = vunpack.c.l.bf16 %v1113
  %v1132 = vunpack.c.l.bf16 %v1114
  %v1133 = vunpack.c.l.bf16 %v1115
  %1142 = vrot.lane.b32.xlu0 %v1126, 32
  %v1143 = vpop.permute.xlu0 %1142
  %1144 = vrot.lane.b32.xlu0 %v1127, 32
  %v1145 = vpop.permute.xlu0 %1144
  %1146 = vrot.lane.b32.xlu0 %v1128, 32
  %v1147 = vpop.permute.xlu0 %1146
  %1148 = vrot.lane.b32.xlu0 %v1129, 32
  %v1149 = vpop.permute.xlu0 %1148
  %1150 = vrot.lane.b32.xlu0 %v1130, 32
  %v1151 = vpop.permute.xlu0 %1150
  %1152 = vrot.lane.b32.xlu0 %v1131, 32
  %v1153 = vpop.permute.xlu0 %1152
  %1154 = vrot.lane.b32.xlu0 %v1132, 32
  %v1155 = vpop.permute.xlu0 %1154
  %1156 = vrot.lane.b32.xlu0 %v1133, 32
  %v1157 = vpop.permute.xlu0 %1156
  %v1166 = vmul.f32 %v1124, %v1143
  %v1167 = vmul.f32 %v1125, %v1145
  %v1168 = vmul.f32 %v1124, %v1147
  %v1169 = vmul.f32 %v1125, %v1149
  %v1170 = vmul.f32 %v1124, %v1151
  %v1171 = vmul.f32 %v1125, %v1153
  %v1172 = vmul.f32 %v1124, %v1155
  %v1173 = vmul.f32 %v1125, %v1157
  %v1174 = vpack.c.bf16 %v1167, %v1166
  %v1175 = vpack.c.bf16 %v1169, %v1168
  %v1176 = vpack.c.bf16 %v1171, %v1170
  %v1177 = vpack.c.bf16 %v1173, %v1172
  %1178 = vrot.lane.b32.xlu0 %v1126, 64
  %v1179 = vpop.permute.xlu0 %1178
  %1180 = vrot.lane.b32.xlu0 %v1127, 64
  %v1181 = vpop.permute.xlu0 %1180
  %1182 = vrot.lane.b32.xlu0 %v1128, 64
  %v1183 = vpop.permute.xlu0 %1182
  %1184 = vrot.lane.b32.xlu0 %v1129, 64
  %v1185 = vpop.permute.xlu0 %1184
  %1186 = vrot.lane.b32.xlu0 %v1130, 64
  %v1187 = vpop.permute.xlu0 %1186
  %1188 = vrot.lane.b32.xlu0 %v1131, 64
  %v1189 = vpop.permute.xlu0 %1188
  %1190 = vrot.lane.b32.xlu0 %v1132, 64
  %v1191 = vpop.permute.xlu0 %1190
  %1192 = vrot.lane.b32.xlu0 %v1133, 64
  %v1193 = vpop.permute.xlu0 %1192
  %v1202 = vmul.f32 %v1124, %v1179
  %v1203 = vmul.f32 %v1125, %v1181
  %v1204 = vmul.f32 %v1124, %v1183
  %v1205 = vmul.f32 %v1125, %v1185
  %v1206 = vmul.f32 %v1124, %v1187
  %v1207 = vmul.f32 %v1125, %v1189
  %v1208 = vmul.f32 %v1124, %v1191
  %v1209 = vmul.f32 %v1125, %v1193
  %v1210 = vpack.c.bf16 %v1203, %v1202
  %v1211 = vpack.c.bf16 %v1205, %v1204
  %v1212 = vpack.c.bf16 %v1207, %v1206
  %v1213 = vpack.c.bf16 %v1209, %v1208
  %v1214 = vld [vmem:[%s3 + $0x138] sm:$0xff]
  %v1215 = vld [vmem:[%s3 + $0x140] sm:$0xff]
  %v1216 = vld [vmem:[%s3 + $0xe8] sm:$0xff]
  %v1217 = vld [vmem:[%s3 + $0xf0] sm:$0xff]
  %v1218 = vld [vmem:[%s3 + $0xf8] sm:$0xff]
  %v1219 = vld [vmem:[%s3 + $0x100] sm:$0xff]
  %v1220 = vld [vmem:[%s3 + $0x108] sm:$0xff]
  %v1221 = vld [vmem:[%s3 + $0x110] sm:$0xff]
  %v1222 = vld [vmem:[%s3 + $0x118] sm:$0xff]
  %v1223 = vld [vmem:[%s3 + $0x120] sm:$0xff]
  %v1224 = vpack.c.bf16 %v1098, %v1096
  %1229 = vrot.lane.b32.xlu0 %v1174, 96
  %v1230 = vpop.permute.xlu0 %1229
  %1231 = vrot.lane.b32.xlu0 %v1175, 96
  %v1232 = vpop.permute.xlu0 %1231
  %1233 = vrot.lane.b32.xlu0 %v1176, 96
  %v1234 = vpop.permute.xlu0 %1233
  %1235 = vrot.lane.b32.xlu0 %v1177, 96
  %v1236 = vpop.permute.xlu0 %1235
  %v1238 = vsel %vm156, %v1224, 0
  %v1241 = vsel %vm156, %v1230, 0
  %v1244 = vsel %vm156, %v1232, 0
  %v1247 = vsel %vm156, %v1234, 0
  %v1250 = vsel %vm156, %v1236, 0
  %1252 = vmatpush.bf16.xpose.msra.mxu0 0
  %1253 = vmatpush.bf16.xpose.msra.mxu0 0
  %1254 = vmatpush.bf16.xpose.msra.mxu0 0
  %1255 = vmatpush.bf16.xpose.msra.mxu0 0
  %1256 = vmatpush.bf16.xpose.msra.mxu0 %v1250
  %1257 = vmatpush.bf16.xpose.msra.mxu0 %v1247
  %1258 = vmatpush.bf16.xpose.msra.mxu0 %v1244
  %1259 = vmatpush.bf16.xpose.msra.mxu0 %v1241
  %1260 = vmatmul.bf16.gmra.mxu0 %v1238
  %v1261 = vpop.f32.mrf.mxu0
  %v1262 = vadd.f32 %v1214, %v1261
  %v1263 = vpop.f32.mrf.mxu0
  %v1264 = vadd.f32 %v1215, %v1263
  %1265 = vdwg.mxu0
  %v1266 = vsel %vm340, %v1262, -inf
  %1267 = vmax.xlane.f32.xlu0 %v1266
  %v1268 = vpop.xlane.xlu0 %1267
  %v1269 = vsel %vm340, %v1264, -inf
  %1270 = vmax.xlane.f32.xlu0 %v1269
  %v1271 = vpop.xlane.xlu0 %1270
  %v1272 = vsub.f32 %v1262, %v1268
  %v1273 = vsub.f32 %v1264, %v1271
  %v1274 = vmul.f32 %v1272, 1.442695
  %v1275 = vpow.pop %v1274
  %v1276 = vmul.f32 %v1273, 1.442695
  %v1277 = vpow.pop %v1276
  %v1279 = vsel %vm340, %v1275, 0
  %v1282 = vsel %vm340, %v1277, 0
  %1284 = vmatpush.msra.mxu0 0.0
  %1285 = vmatpush.msra.mxu0 0.0
  %1286 = vmatpush.msra.mxu0 0.0
  %1287 = vmatpush.msra.mxu0 0.0
  %1288 = vmatpush.msra.mxu0 0.0
  %1289 = vmatpush.msra.mxu0 0.0
  %1290 = vmatpush.msra.mxu0 0.0
  %1291 = vmatpush.msra.mxu0 0.0
  %1292 = vmatpush.msra.mxu0 %v1223
  %1293 = vmatpush.msra.mxu0 %v1222
  %1294 = vmatpush.msra.mxu0 %v1221
  %1295 = vmatpush.msra.mxu0 %v1220
  %1296 = vmatpush.msra.mxu0 %v1219
  %1297 = vmatpush.msra.mxu0 %v1218
  %1298 = vmatpush.msra.mxu0 %v1217
  %1299 = vmatpush.msra.mxu0 %v1216
  %1300 = vmatmul.f32.gmra.mxu0 %v1279
  %v1301 = vpop.f32.mrf.mxu0
  %v1302 = vadd.f32 0.0, %v1301
  %1303 = vmatmul.f32.gmra.mxu0 %v1282
  %v1304 = vpop.f32.mrf.mxu0
  %v1305 = vadd.f32 0.0, %v1304
  %1306 = vdwg.mxu0
  %v1307 = vmax.f32 %v1302, 1e-30
  %v1308 = vmax.f32 %v1305, 1e-30
  %v1309 = vrcp.pop %v1307
  %v1310 = vrcp.pop %v1308
  %v1311 = vmul.f32 %v1275, %v1309
  %v1312 = vmul.f32 %v1277, %v1310
  %v1313 = vpack.c.bf16 %v1312, %v1311
  %1318 = vrot.lane.b32.xlu0 %v1210, 64
  %v1319 = vpop.permute.xlu0 %1318
  %1320 = vrot.lane.b32.xlu0 %v1211, 64
  %v1321 = vpop.permute.xlu0 %1320
  %1322 = vrot.lane.b32.xlu0 %v1212, 64
  %v1323 = vpop.permute.xlu0 %1322
  %1324 = vrot.lane.b32.xlu0 %v1213, 64
  %v1325 = vpop.permute.xlu0 %1324
  %v1331 = vsel %vm340, %v1313, 0
  %1333 = vmatpush.bf16.msra.mxu0 0
  %1334 = vmatpush.bf16.msra.mxu0 0
  %1335 = vmatpush.bf16.msra.mxu0 0
  %1336 = vmatpush.bf16.msra.mxu0 0
  %1337 = vmatpush.bf16.msra.mxu0 %v1325
  %1338 = vmatpush.bf16.msra.mxu0 %v1323
  %1339 = vmatpush.bf16.msra.mxu0 %v1321
  %1340 = vmatpush.bf16.msra.mxu0 %v1319
  %1341 = vmatmul.bf16.gmra.mxu0 %v1331
  %v1342 = vpop.f32.mrf.mxu0
  %v1343 = vadd.f32 0.0, %v1342
  %v1344 = vpop.f32.mrf.mxu0
  %v1345 = vadd.f32 0.0, %v1344
  %1346 = vdwg.mxu0
  %v1347 = vld [vmem:[%s1 + $0xa0] sm:$0xf]
  %v1348 = vld [vmem:[%s1 + $0xa4] sm:$0xf]
  %v1349 = vld [vmem:[%s1 + $0xa8] sm:$0xf]
  %v1350 = vld [vmem:[%s1 + $0xac] sm:$0xf]
  %v1351 = vpack.c.bf16 %v1345, %v1343
  %v1352 = vld [vmem:[%s2 + $0x48] sm:$0x1]
  %v1353 = vperm.slane %v1352, 0
  %v1358 = vunpack.c.l.b16 %v1347
  %v1359 = vunpack.c.l.b16 %v1348
  %v1360 = vunpack.c.l.b16 %v1349
  %v1361 = vunpack.c.l.b16 %v1350
  %v1362 = vpack.c.b16 %v1359, %v1358
  %v1363 = vpack.c.b16 %v1361, %v1360
  %v1367 = vsel %vm156, %v1351, 0
  %1369 = vmatpush.bf16.msra.mxu0 0
  %1370 = vmatpush.bf16.msra.mxu0 0
  %1371 = vmatpush.bf16.msra.mxu0 0
  %1372 = vmatpush.bf16.msra.mxu0 0
  %1373 = vmatpush.bf16.msra.mxu0 0
  %1374 = vmatpush.bf16.msra.mxu0 0
  %1375 = vmatpush.bf16.msra.mxu0 %v1363
  %1376 = vmatpush.bf16.msra.mxu0 %v1362
  %1377 = vmatmul.bf16.gmra.mxu0 %v1367
  %v1378 = vpop.f32.mrf.mxu0
  %v1379 = vadd.f32 %v1353, %v1378
  %v1380 = vpop.f32.mrf.mxu0
  %v1381 = vadd.f32 %v1353, %v1380
  %1382 = vdwg.mxu0
  %v1383 = vadd.f32 %v1379, %v133
  %v1384 = vadd.f32 %v1381, %v135
  %v1385 = vld [vmem:[%s2 + $0x50] sm:$0x1]
  %v1386 = vld [vmem:[%s2 + $0x58] sm:$0x1]
  %v1387 = vsel %vm156, %v1383, 0.0
  %1388 = vadd.xlane.f32.xlu0 %v1387
  %v1389 = vpop.xlane.xlu0 %1388
  %v1390 = vsel %vm156, %v1384, 0.0
  %1391 = vadd.xlane.f32.xlu0 %v1390
  %v1392 = vpop.xlane.xlu0 %1391
  %v1393 = vmul.f32 %v1389, %v474
  %v1394 = vmul.f32 %v1392, %v474
  %v1395 = vsub.f32 %v1383, %v1393
  %v1396 = vsub.f32 %v1384, %v1394
  %v1397 = vmul.f32 %v1395, %v1395
  %v1398 = vmul.f32 %v1396, %v1396
  %v1399 = vsel %vm156, %v1397, 0.0
  %1400 = vadd.xlane.f32.xlu0 %v1399
  %v1401 = vpop.xlane.xlu0 %1400
  %v1402 = vsel %vm156, %v1398, 0.0
  %1403 = vadd.xlane.f32.xlu0 %v1402
  %v1404 = vpop.xlane.xlu0 %1403
  %v1405 = vmul.f32 %v1401, %v474
  %v1406 = vmul.f32 %v1404, %v474
  %v1407 = vadd.f32 %v1405, 1e-05
  %v1408 = vadd.f32 %v1406, 1e-05
  %v1409 = vrsqrt.pop %v1407
  %v1410 = vmul.f32 %v1409, %v1407
  %v1411 = vmul.f32 %v1410, %v1409
  %v1412 = vmul.f32 0.5, %v1411
  %v1413 = vsub.f32 1.5, %v1412
  %v1414 = vmul.f32 %v1409, %v1413
  %vm1415 = vweird.f32 %v1407
  %vm1416 = vweird.f32 %v1409
  %vm1417 = vmor %vm1415, %vm1416
  %v1418 = vsel %vm1417, %v1409, %v1414
  %v1419 = vrsqrt.pop %v1408
  %v1420 = vmul.f32 %v1419, %v1408
  %v1421 = vmul.f32 %v1420, %v1419
  %v1422 = vmul.f32 0.5, %v1421
  %v1423 = vsub.f32 1.5, %v1422
  %v1424 = vmul.f32 %v1419, %v1423
  %vm1425 = vweird.f32 %v1408
  %vm1426 = vweird.f32 %v1419
  %vm1427 = vmor %vm1425, %vm1426
  %v1428 = vsel %vm1427, %v1419, %v1424
  %v1429 = vmul.f32 %v1395, %v1418
  %v1430 = vmul.f32 %v1396, %v1428
  %v1431 = vperm.slane %v1385, 0
  %v1432 = vmul.f32 %v1429, %v1431
  %v1433 = vmul.f32 %v1430, %v1431
  %v1434 = vperm.slane %v1386, 0
  %v1435 = vadd.f32 %v1432, %v1434
  %v1436 = vadd.f32 %v1433, %v1434
  %v1437 = vld [vmem:[%s1 + $0xb0] sm:$0xf]
  %v1438 = vld [vmem:[%s1 + $0xb4] sm:$0xf]
  %v1439 = vld [vmem:[%s1 + $0xb8] sm:$0xf]
  %v1440 = vld [vmem:[%s1 + $0xbc] sm:$0xf]
  %v1441 = vpack.c.bf16 %v1436, %v1435
  %v1442 = vld [vmem:[%s2 + $0x60] sm:$0x1]
  %v1443 = vperm.slane %v1442, 0
  %v1448 = vunpack.c.l.b16 %v1437
  %v1449 = vunpack.c.l.b16 %v1438
  %v1450 = vunpack.c.l.b16 %v1439
  %v1451 = vunpack.c.l.b16 %v1440
  %v1452 = vpack.c.b16 %v1449, %v1448
  %v1453 = vpack.c.b16 %v1451, %v1450
  %v1457 = vsel %vm156, %v1441, 0
  %1459 = vmatpush.bf16.msra.mxu0 0
  %1460 = vmatpush.bf16.msra.mxu0 0
  %1461 = vmatpush.bf16.msra.mxu0 0
  %1462 = vmatpush.bf16.msra.mxu0 0
  %1463 = vmatpush.bf16.msra.mxu0 0
  %1464 = vmatpush.bf16.msra.mxu0 0
  %1465 = vmatpush.bf16.msra.mxu0 %v1453
  %1466 = vmatpush.bf16.msra.mxu0 %v1452
  %1467 = vmatmul.bf16.gmra.mxu0 %v1457
  %v1468 = vpop.f32.mrf.mxu0
  %v1469 = vadd.f32 %v1443, %v1468
  %v1470 = vpop.f32.mrf.mxu0
  %v1471 = vadd.f32 %v1443, %v1470
  %1472 = vdwg.mxu0
  %v1473 = vld [vmem:[%s3 + $0x148] sm:$0xff]
  %v1474 = vld [vmem:[%s3 + $0x150] sm:$0xff]
  %v1475 = vpack.c.bf16 %v1471, %v1469
  %v1477 = vsel %vm156, %v1475, 0
  %v1480 = vsel %vm156, %v1048, 0
  %v1483 = vsel %vm156, %v1049, 0
  %v1486 = vsel %vm156, %v1050, 0
  %v1489 = vsel %vm156, %v1051, 0
  %1491 = vmatpush.bf16.xpose.msra.mxu0 0
  %1492 = vmatpush.bf16.xpose.msra.mxu0 0
  %1493 = vmatpush.bf16.xpose.msra.mxu0 0
  %1494 = vmatpush.bf16.xpose.msra.mxu0 0
  %1495 = vmatpush.bf16.xpose.msra.mxu0 %v1489
  %1496 = vmatpush.bf16.xpose.msra.mxu0 %v1486
  %1497 = vmatpush.bf16.xpose.msra.mxu0 %v1483
  %1498 = vmatpush.bf16.xpose.msra.mxu0 %v1480
  %1499 = vmatmul.bf16.gmra.mxu0 %v1477
  %v1500 = vpop.f32.mrf.mxu0
  %v1501 = vadd.f32 %v1473, %v1500
  %v1502 = vpop.f32.mrf.mxu0
  %v1503 = vadd.f32 %v1474, %v1502
  %1504 = vdwg.mxu0
  %v1505 = vsel %vm340, %v1501, -inf
  %1506 = vmax.xlane.f32.xlu0 %v1505
  %v1507 = vpop.xlane.xlu0 %1506
  %v1508 = vsel %vm340, %v1503, -inf
  %1509 = vmax.xlane.f32.xlu0 %v1508
  %v1510 = vpop.xlane.xlu0 %1509
  %v1511 = vsub.f32 %v1501, %v1507
  %v1512 = vsub.f32 %v1503, %v1510
  %v1513 = vmul.f32 %v1511, 1.442695
  %v1514 = vpow.pop %v1513
  %v1515 = vmul.f32 %v1512, 1.442695
  %v1516 = vpow.pop %v1515
  %v1518 = vsel %vm340, %v1514, 0
  %v1521 = vsel %vm340, %v1516, 0
  %1523 = vmatpush.msra.mxu0 0.0
  %1524 = vmatpush.msra.mxu0 0.0
  %1525 = vmatpush.msra.mxu0 0.0
  %1526 = vmatpush.msra.mxu0 0.0
  %1527 = vmatpush.msra.mxu0 0.0
  %1528 = vmatpush.msra.mxu0 0.0
  %1529 = vmatpush.msra.mxu0 0.0
  %1530 = vmatpush.msra.mxu0 0.0
  %1531 = vmatpush.msra.mxu0 %v297
  %1532 = vmatpush.msra.mxu0 %v296
  %1533 = vmatpush.msra.mxu0 %v295
  %1534 = vmatpush.msra.mxu0 %v294
  %1535 = vmatpush.msra.mxu0 %v293
  %1536 = vmatpush.msra.mxu0 %v292
  %1537 = vmatpush.msra.mxu0 %v291
  %1538 = vmatpush.msra.mxu0 %v290
  %1539 = vmatmul.f32.gmra.mxu0 %v1518
  %v1540 = vpop.f32.mrf.mxu0
  %v1541 = vadd.f32 0.0, %v1540
  %1542 = vmatmul.f32.gmra.mxu0 %v1521
  %v1543 = vpop.f32.mrf.mxu0
  %v1544 = vadd.f32 0.0, %v1543
  %1545 = vdwg.mxu0
  %v1546 = vmax.f32 %v1541, 1e-30
  %v1547 = vmax.f32 %v1544, 1e-30
  %v1548 = vrcp.pop %v1546
  %v1549 = vrcp.pop %v1547
  %v1550 = vmul.f32 %v1514, %v1548
  %v1551 = vmul.f32 %v1516, %v1549
  %v1552 = vpack.c.bf16 %v1551, %v1550
  %1557 = vrot.lane.b32.xlu0 %v1060, 96
  %v1558 = vpop.permute.xlu0 %1557
  %1559 = vrot.lane.b32.xlu0 %v1061, 96
  %v1560 = vpop.permute.xlu0 %1559
  %1561 = vrot.lane.b32.xlu0 %v1062, 96
  %v1562 = vpop.permute.xlu0 %1561
  %1563 = vrot.lane.b32.xlu0 %v1063, 96
  %v1564 = vpop.permute.xlu0 %1563
  %v1570 = vsel %vm340, %v1552, 0
  %1572 = vmatpush.bf16.msra.mxu0 0
  %1573 = vmatpush.bf16.msra.mxu0 0
  %1574 = vmatpush.bf16.msra.mxu0 0
  %1575 = vmatpush.bf16.msra.mxu0 0
  %1576 = vmatpush.bf16.msra.mxu0 %v1564
  %1577 = vmatpush.bf16.msra.mxu0 %v1562
  %1578 = vmatpush.bf16.msra.mxu0 %v1560
  %1579 = vmatpush.bf16.msra.mxu0 %v1558
  %1580 = vmatmul.bf16.gmra.mxu0 %v1570
  %v1581 = vpop.f32.mrf.mxu0
  %v1582 = vadd.f32 0.0, %v1581
  %v1583 = vpop.f32.mrf.mxu0
  %v1584 = vadd.f32 0.0, %v1583
  %1585 = vdwg.mxu0
  %v1586 = vld [vmem:[%s1 + $0xd0] sm:$0xf]
  %v1587 = vld [vmem:[%s1 + $0xd4] sm:$0xf]
  %v1588 = vld [vmem:[%s1 + $0xd8] sm:$0xf]
  %v1589 = vld [vmem:[%s1 + $0xdc] sm:$0xf]
  %v1590 = vpack.c.bf16 %v1584, %v1582
  %v1591 = vld [vmem:[%s2 + $0x70] sm:$0x1]
  %v1592 = vperm.slane %v1591, 0
  %v1597 = vunpack.c.l.b16 %v1586
  %v1598 = vunpack.c.l.b16 %v1587
  %v1599 = vunpack.c.l.b16 %v1588
  %v1600 = vunpack.c.l.b16 %v1589
  %v1601 = vpack.c.b16 %v1598, %v1597
  %v1602 = vpack.c.b16 %v1600, %v1599
  %v1606 = vsel %vm156, %v1590, 0
  %1608 = vmatpush.bf16.msra.mxu0 0
  %1609 = vmatpush.bf16.msra.mxu0 0
  %1610 = vmatpush.bf16.msra.mxu0 0
  %1611 = vmatpush.bf16.msra.mxu0 0
  %1612 = vmatpush.bf16.msra.mxu0 0
  %1613 = vmatpush.bf16.msra.mxu0 0
  %1614 = vmatpush.bf16.msra.mxu0 %v1602
  %1615 = vmatpush.bf16.msra.mxu0 %v1601
  %1616 = vmatmul.bf16.gmra.mxu0 %v1606
  %v1617 = vpop.f32.mrf.mxu0
  %v1618 = vadd.f32 %v1592, %v1617
  %v1619 = vpop.f32.mrf.mxu0
  %v1620 = vadd.f32 %v1592, %v1619
  %1621 = vdwg.mxu0
  %v1622 = vadd.f32 %v1618, %v1435
  %v1623 = vadd.f32 %v1620, %v1436
  %v1624 = vld [vmem:[%s2 + $0x78] sm:$0x1]
  %v1625 = vld [vmem:[%s2 + $0x80] sm:$0x1]
  %v1626 = vsel %vm156, %v1622, 0.0
  %1627 = vadd.xlane.f32.xlu0 %v1626
  %v1628 = vpop.xlane.xlu0 %1627
  %v1629 = vsel %vm156, %v1623, 0.0
  %1630 = vadd.xlane.f32.xlu0 %v1629
  %v1631 = vpop.xlane.xlu0 %1630
  %v1632 = vmul.f32 %v1628, %v474
  %v1633 = vmul.f32 %v1631, %v474
  %v1634 = vsub.f32 %v1622, %v1632
  %v1635 = vsub.f32 %v1623, %v1633
  %v1636 = vmul.f32 %v1634, %v1634
  %v1637 = vmul.f32 %v1635, %v1635
  %v1638 = vsel %vm156, %v1636, 0.0
  %1639 = vadd.xlane.f32.xlu0 %v1638
  %v1640 = vpop.xlane.xlu0 %1639
  %v1641 = vsel %vm156, %v1637, 0.0
  %1642 = vadd.xlane.f32.xlu0 %v1641
  %v1643 = vpop.xlane.xlu0 %1642
  %v1644 = vmul.f32 %v1640, %v474
  %v1645 = vmul.f32 %v1643, %v474
  %v1646 = vadd.f32 %v1644, 1e-05
  %v1647 = vadd.f32 %v1645, 1e-05
  %v1648 = vrsqrt.pop %v1646
  %v1649 = vmul.f32 %v1648, %v1646
  %v1650 = vmul.f32 %v1649, %v1648
  %v1651 = vmul.f32 0.5, %v1650
  %v1652 = vsub.f32 1.5, %v1651
  %v1653 = vmul.f32 %v1648, %v1652
  %vm1654 = vweird.f32 %v1646
  %vm1655 = vweird.f32 %v1648
  %vm1656 = vmor %vm1654, %vm1655
  %v1657 = vsel %vm1656, %v1648, %v1653
  %v1658 = vrsqrt.pop %v1647
  %v1659 = vmul.f32 %v1658, %v1647
  %v1660 = vmul.f32 %v1659, %v1658
  %v1661 = vmul.f32 0.5, %v1660
  %v1662 = vsub.f32 1.5, %v1661
  %v1663 = vmul.f32 %v1658, %v1662
  %vm1664 = vweird.f32 %v1647
  %vm1665 = vweird.f32 %v1658
  %vm1666 = vmor %vm1664, %vm1665
  %v1667 = vsel %vm1666, %v1658, %v1663
  %v1668 = vmul.f32 %v1634, %v1657
  %v1669 = vmul.f32 %v1635, %v1667
  %v1670 = vperm.slane %v1624, 0
  %v1671 = vmul.f32 %v1668, %v1670
  %v1672 = vmul.f32 %v1669, %v1670
  %v1673 = vperm.slane %v1625, 0
  %v1674 = vadd.f32 %v1671, %v1673
  %v1675 = vadd.f32 %v1672, %v1673
  %v1676 = vld [vmem:[%s1 + $0xe0] sm:$0xf]
  %v1677 = vld [vmem:[%s1 + $0xe4] sm:$0xf]
  %v1678 = vld [vmem:[%s1 + $0xe8] sm:$0xf]
  %v1679 = vld [vmem:[%s1 + $0xec] sm:$0xf]
  %v1680 = vpack.c.bf16 %v1675, %v1674
  %v1681 = vld [vmem:[%s2 + $0x88] sm:$0x1]
  %v1682 = vperm.slane %v1681, 0
  %v1687 = vunpack.c.l.b16 %v1676
  %v1688 = vunpack.c.l.b16 %v1677
  %v1689 = vunpack.c.l.b16 %v1678
  %v1690 = vunpack.c.l.b16 %v1679
  %v1691 = vpack.c.b16 %v1688, %v1687
  %v1692 = vpack.c.b16 %v1690, %v1689
  %v1696 = vsel %vm156, %v1680, 0
  %1698 = vmatpush.bf16.msra.mxu0 0
  %1699 = vmatpush.bf16.msra.mxu0 0
  %1700 = vmatpush.bf16.msra.mxu0 0
  %1701 = vmatpush.bf16.msra.mxu0 0
  %1702 = vmatpush.bf16.msra.mxu0 0
  %1703 = vmatpush.bf16.msra.mxu0 0
  %1704 = vmatpush.bf16.msra.mxu0 %v1692
  %1705 = vmatpush.bf16.msra.mxu0 %v1691
  %1706 = vmatmul.bf16.gmra.mxu0 %v1696
  %v1707 = vpop.f32.mrf.mxu0
  %v1708 = vadd.f32 %v1682, %v1707
  %v1709 = vpop.f32.mrf.mxu0
  %v1710 = vadd.f32 %v1682, %v1709
  %1711 = vdwg.mxu0
  %v1712 = vmax.f32 %v1708, 0.0
  %v1713 = vmax.f32 %v1710, 0.0
  %v1714 = vld [vmem:[%s1 + $0xf0] sm:$0xf]
  %v1715 = vld [vmem:[%s1 + $0xf4] sm:$0xf]
  %v1716 = vld [vmem:[%s1 + $0xf8] sm:$0xf]
  %v1717 = vld [vmem:[%s1 + $0xfc] sm:$0xf]
  %v1718 = vld [vmem:[%s1 + $0x100] sm:$0xf]
  %v1719 = vld [vmem:[%s1 + $0x104] sm:$0xf]
  %v1720 = vld [vmem:[%s1 + $0x108] sm:$0xf]
  %v1721 = vld [vmem:[%s1 + $0x10c] sm:$0xf]
  %v1722 = vpack.c.bf16 %v1713, %v1712
  %v1723 = vld [vmem:[%s2 + $0x90] sm:$0x1]
  %v1724 = vperm.slane %v1723, 0
  %v1733 = vunpack.c.l.b16 %v1714
  %v1734 = vunpack.c.l.b16 %v1715
  %v1735 = vunpack.c.l.b16 %v1716
  %v1736 = vunpack.c.l.b16 %v1717
  %v1737 = vunpack.c.l.b16 %v1718
  %v1738 = vunpack.c.l.b16 %v1719
  %v1739 = vunpack.c.l.b16 %v1720
  %v1740 = vunpack.c.l.b16 %v1721
  %v1741 = vpack.c.b16 %v1734, %v1733
  %v1742 = vpack.c.b16 %v1736, %v1735
  %v1743 = vpack.c.b16 %v1738, %v1737
  %v1744 = vpack.c.b16 %v1740, %v1739
  %v1750 = vsel %vm340, %v1722, 0
  %1752 = vmatpush.bf16.msra.mxu0 0
  %1753 = vmatpush.bf16.msra.mxu0 0
  %1754 = vmatpush.bf16.msra.mxu0 0
  %1755 = vmatpush.bf16.msra.mxu0 0
  %1756 = vmatpush.bf16.msra.mxu0 %v1744
  %1757 = vmatpush.bf16.msra.mxu0 %v1743
  %1758 = vmatpush.bf16.msra.mxu0 %v1742
  %1759 = vmatpush.bf16.msra.mxu0 %v1741
  %1760 = vmatmul.bf16.gmra.mxu0 %v1750
  %v1761 = vpop.f32.mrf.mxu0
  %v1762 = vadd.f32 %v1724, %v1761
  %v1763 = vpop.f32.mrf.mxu0
  %v1764 = vadd.f32 %v1724, %v1763
  %1765 = vdwg.mxu0
  %v1766 = vadd.f32 %v1762, %v1674
  %v1767 = vadd.f32 %v1764, %v1675
  %v1768 = vld [vmem:[%s2 + $0x98] sm:$0x1]
  %v1769 = vld [vmem:[%s2 + $0xa0] sm:$0x1]
  %v1770 = vsel %vm156, %v1766, 0.0
  %1771 = vadd.xlane.f32.xlu0 %v1770
  %v1772 = vpop.xlane.xlu0 %1771
  %v1773 = vsel %vm156, %v1767, 0.0
  %1774 = vadd.xlane.f32.xlu0 %v1773
  %v1775 = vpop.xlane.xlu0 %1774
  %v1776 = vmul.f32 %v1772, %v474
  %v1777 = vmul.f32 %v1775, %v474
  %v1778 = vsub.f32 %v1766, %v1776
  %v1779 = vsub.f32 %v1767, %v1777
  %v1780 = vmul.f32 %v1778, %v1778
  %v1781 = vmul.f32 %v1779, %v1779
  %v1782 = vsel %vm156, %v1780, 0.0
  %1783 = vadd.xlane.f32.xlu0 %v1782
  %v1784 = vpop.xlane.xlu0 %1783
  %v1785 = vsel %vm156, %v1781, 0.0
  %1786 = vadd.xlane.f32.xlu0 %v1785
  %v1787 = vpop.xlane.xlu0 %1786
  %v1788 = vmul.f32 %v1784, %v474
  %v1789 = vmul.f32 %v1787, %v474
  %v1790 = vadd.f32 %v1788, 1e-05
  %v1791 = vadd.f32 %v1789, 1e-05
  %v1792 = vrsqrt.pop %v1790
  %v1793 = vmul.f32 %v1792, %v1790
  %v1794 = vmul.f32 %v1793, %v1792
  %v1795 = vmul.f32 0.5, %v1794
  %v1796 = vsub.f32 1.5, %v1795
  %v1797 = vmul.f32 %v1792, %v1796
  %vm1798 = vweird.f32 %v1790
  %vm1799 = vweird.f32 %v1792
  %vm1800 = vmor %vm1798, %vm1799
  %v1801 = vsel %vm1800, %v1792, %v1797
  %v1802 = vrsqrt.pop %v1791
  %v1803 = vmul.f32 %v1802, %v1791
  %v1804 = vmul.f32 %v1803, %v1802
  %v1805 = vmul.f32 0.5, %v1804
  %v1806 = vsub.f32 1.5, %v1805
  %v1807 = vmul.f32 %v1802, %v1806
  %vm1808 = vweird.f32 %v1791
  %vm1809 = vweird.f32 %v1802
  %vm1810 = vmor %vm1808, %vm1809
  %v1811 = vsel %vm1810, %v1802, %v1807
  %v1812 = vmul.f32 %v1778, %v1801
  %v1813 = vmul.f32 %v1779, %v1811
  %v1814 = vperm.slane %v1768, 0
  %v1815 = vmul.f32 %v1812, %v1814
  %v1816 = vmul.f32 %v1813, %v1814
  %v1817 = vperm.slane %v1769, 0
  %v1818 = vadd.f32 %v1815, %v1817
  %v1819 = vadd.f32 %v1816, %v1817
  %v1820 = vpack.c.bf16 %v1819, %v1818
  %v1822 = vsel %vm156, %v1820, 0
  %1824 = vmatpush.bf16.msra.mxu0 0
  %1825 = vmatpush.bf16.msra.mxu0 0
  %1826 = vmatpush.bf16.msra.mxu0 0
  %1827 = vmatpush.bf16.msra.mxu0 0
  %1828 = vmatpush.bf16.msra.mxu0 0
  %1829 = vmatpush.bf16.msra.mxu0 0
  %1830 = vmatpush.bf16.msra.mxu0 %v1080
  %1831 = vmatpush.bf16.msra.mxu0 %v1079
  %1832 = vmatmul.bf16.gmra.mxu0 %v1822
  %v1833 = vpop.f32.mrf.mxu0
  %v1834 = vadd.f32 %v1070, %v1833
  %v1835 = vpop.f32.mrf.mxu0
  %v1836 = vadd.f32 %v1070, %v1835
  %1837 = vdwg.mxu0
  %v1838 = vpack.c.bf16 %v1834, %v1834
  %v1839 = vpack.c.bf16 %v1836, %v1836
  %v1842 = vunpack.c.l.b16 %v1838
  %v1843 = vunpack.c.l.b16 %v1839
  %v1844 = vpack.c.b16 %v1843, %v1842
  %v1846 = vunpack.c.l.bf16 %v1844
  %v1847 = vunpack.c.h.bf16 %v1844
  %v1848 = vmul.f32 %v1846, %v1143
  %v1849 = vmul.f32 %v1847, %v1145
  %v1850 = vmul.f32 %v1846, %v1147
  %v1851 = vmul.f32 %v1847, %v1149
  %v1852 = vmul.f32 %v1846, %v1151
  %v1853 = vmul.f32 %v1847, %v1153
  %v1854 = vmul.f32 %v1846, %v1155
  %v1855 = vmul.f32 %v1847, %v1157
  %v1856 = vpack.c.bf16 %v1849, %v1848
  %v1857 = vpack.c.bf16 %v1851, %v1850
  %v1858 = vpack.c.bf16 %v1853, %v1852
  %v1859 = vpack.c.bf16 %v1855, %v1854
  %v1860 = vmul.f32 %v1846, %v1179
  %v1861 = vmul.f32 %v1847, %v1181
  %v1862 = vmul.f32 %v1846, %v1183
  %v1863 = vmul.f32 %v1847, %v1185
  %v1864 = vmul.f32 %v1846, %v1187
  %v1865 = vmul.f32 %v1847, %v1189
  %v1866 = vmul.f32 %v1846, %v1191
  %v1867 = vmul.f32 %v1847, %v1193
  %v1868 = vpack.c.bf16 %v1861, %v1860
  %v1869 = vpack.c.bf16 %v1863, %v1862
  %v1870 = vpack.c.bf16 %v1865, %v1864
  %v1871 = vpack.c.bf16 %v1867, %v1866
  %v1872 = vpack.c.bf16 %v1836, %v1834
  %1877 = vrot.lane.b32.xlu0 %v1856, 96
  %v1878 = vpop.permute.xlu0 %1877
  %1879 = vrot.lane.b32.xlu0 %v1857, 96
  %v1880 = vpop.permute.xlu0 %1879
  %1881 = vrot.lane.b32.xlu0 %v1858, 96
  %v1882 = vpop.permute.xlu0 %1881
  %1883 = vrot.lane.b32.xlu0 %v1859, 96
  %v1884 = vpop.permute.xlu0 %1883
  %v1886 = vsel %vm156, %v1872, 0
  %v1889 = vsel %vm156, %v1878, 0
  %v1892 = vsel %vm156, %v1880, 0
  %v1895 = vsel %vm156, %v1882, 0
  %v1898 = vsel %vm156, %v1884, 0
  %1900 = vmatpush.bf16.xpose.msra.mxu0 0
  %1901 = vmatpush.bf16.xpose.msra.mxu0 0
  %1902 = vmatpush.bf16.xpose.msra.mxu0 0
  %1903 = vmatpush.bf16.xpose.msra.mxu0 0
  %1904 = vmatpush.bf16.xpose.msra.mxu0 %v1898
  %1905 = vmatpush.bf16.xpose.msra.mxu0 %v1895
  %1906 = vmatpush.bf16.xpose.msra.mxu0 %v1892
  %1907 = vmatpush.bf16.xpose.msra.mxu0 %v1889
  %1908 = vmatmul.bf16.gmra.mxu0 %v1886
  %v1909 = vpop.f32.mrf.mxu0
  %v1910 = vadd.f32 %v1214, %v1909
  %v1911 = vpop.f32.mrf.mxu0
  %v1912 = vadd.f32 %v1215, %v1911
  %1913 = vdwg.mxu0
  %v1914 = vsel %vm340, %v1910, -inf
  %1915 = vmax.xlane.f32.xlu0 %v1914
  %v1916 = vpop.xlane.xlu0 %1915
  %v1917 = vsel %vm340, %v1912, -inf
  %1918 = vmax.xlane.f32.xlu0 %v1917
  %v1919 = vpop.xlane.xlu0 %1918
  %v1920 = vsub.f32 %v1910, %v1916
  %v1921 = vsub.f32 %v1912, %v1919
  %v1922 = vmul.f32 %v1920, 1.442695
  %v1923 = vpow.pop %v1922
  %v1924 = vmul.f32 %v1921, 1.442695
  %v1925 = vpow.pop %v1924
  %v1927 = vsel %vm340, %v1923, 0
  %v1930 = vsel %vm340, %v1925, 0
  %1932 = vmatpush.msra.mxu0 0.0
  %1933 = vmatpush.msra.mxu0 0.0
  %1934 = vmatpush.msra.mxu0 0.0
  %1935 = vmatpush.msra.mxu0 0.0
  %1936 = vmatpush.msra.mxu0 0.0
  %1937 = vmatpush.msra.mxu0 0.0
  %1938 = vmatpush.msra.mxu0 0.0
  %1939 = vmatpush.msra.mxu0 0.0
  %1940 = vmatpush.msra.mxu0 %v1223
  %1941 = vmatpush.msra.mxu0 %v1222
  %1942 = vmatpush.msra.mxu0 %v1221
  %1943 = vmatpush.msra.mxu0 %v1220
  %1944 = vmatpush.msra.mxu0 %v1219
  %1945 = vmatpush.msra.mxu0 %v1218
  %1946 = vmatpush.msra.mxu0 %v1217
  %1947 = vmatpush.msra.mxu0 %v1216
  %1948 = vmatmul.f32.gmra.mxu0 %v1927
  %v1949 = vpop.f32.mrf.mxu0
  %v1950 = vadd.f32 0.0, %v1949
  %1951 = vmatmul.f32.gmra.mxu0 %v1930
  %v1952 = vpop.f32.mrf.mxu0
  %v1953 = vadd.f32 0.0, %v1952
  %1954 = vdwg.mxu0
  %v1955 = vmax.f32 %v1950, 1e-30
  %v1956 = vmax.f32 %v1953, 1e-30
  %v1957 = vrcp.pop %v1955
  %v1958 = vrcp.pop %v1956
  %v1959 = vmul.f32 %v1923, %v1957
  %v1960 = vmul.f32 %v1925, %v1958
  %v1961 = vpack.c.bf16 %v1960, %v1959
  %1966 = vrot.lane.b32.xlu0 %v1868, 64
  %v1967 = vpop.permute.xlu0 %1966
  %1968 = vrot.lane.b32.xlu0 %v1869, 64
  %v1969 = vpop.permute.xlu0 %1968
  %1970 = vrot.lane.b32.xlu0 %v1870, 64
  %v1971 = vpop.permute.xlu0 %1970
  %1972 = vrot.lane.b32.xlu0 %v1871, 64
  %v1973 = vpop.permute.xlu0 %1972
  %v1979 = vsel %vm340, %v1961, 0
  %1981 = vmatpush.bf16.msra.mxu0 0
  %1982 = vmatpush.bf16.msra.mxu0 0
  %1983 = vmatpush.bf16.msra.mxu0 0
  %1984 = vmatpush.bf16.msra.mxu0 0
  %1985 = vmatpush.bf16.msra.mxu0 %v1973
  %1986 = vmatpush.bf16.msra.mxu0 %v1971
  %1987 = vmatpush.bf16.msra.mxu0 %v1969
  %1988 = vmatpush.bf16.msra.mxu0 %v1967
  %1989 = vmatmul.bf16.gmra.mxu0 %v1979
  %v1990 = vpop.f32.mrf.mxu0
  %v1991 = vadd.f32 0.0, %v1990
  %v1992 = vpop.f32.mrf.mxu0
  %v1993 = vadd.f32 0.0, %v1992
  %1994 = vdwg.mxu0
  %v1995 = vpack.c.bf16 %v1993, %v1991
  %v1997 = vsel %vm156, %v1995, 0
  %1999 = vmatpush.bf16.msra.mxu0 0
  %2000 = vmatpush.bf16.msra.mxu0 0
  %2001 = vmatpush.bf16.msra.mxu0 0
  %2002 = vmatpush.bf16.msra.mxu0 0
  %2003 = vmatpush.bf16.msra.mxu0 0
  %2004 = vmatpush.bf16.msra.mxu0 0
  %2005 = vmatpush.bf16.msra.mxu0 %v1363
  %2006 = vmatpush.bf16.msra.mxu0 %v1362
  %2007 = vmatmul.bf16.gmra.mxu0 %v1997
  %v2008 = vpop.f32.mrf.mxu0
  %v2009 = vadd.f32 %v1353, %v2008
  %v2010 = vpop.f32.mrf.mxu0
  %v2011 = vadd.f32 %v1353, %v2010
  %2012 = vdwg.mxu0
  %v2013 = vadd.f32 %v2009, %v1818
  %v2014 = vadd.f32 %v2011, %v1819
  %v2015 = vsel %vm156, %v2013, 0.0
  %2016 = vadd.xlane.f32.xlu0 %v2015
  %v2017 = vpop.xlane.xlu0 %2016
  %v2018 = vsel %vm156, %v2014, 0.0
  %2019 = vadd.xlane.f32.xlu0 %v2018
  %v2020 = vpop.xlane.xlu0 %2019
  %v2021 = vmul.f32 %v2017, %v474
  %v2022 = vmul.f32 %v2020, %v474
  %v2023 = vsub.f32 %v2013, %v2021
  %v2024 = vsub.f32 %v2014, %v2022
  %v2025 = vmul.f32 %v2023, %v2023
  %v2026 = vmul.f32 %v2024, %v2024
  %v2027 = vsel %vm156, %v2025, 0.0
  %2028 = vadd.xlane.f32.xlu0 %v2027
  %v2029 = vpop.xlane.xlu0 %2028
  %v2030 = vsel %vm156, %v2026, 0.0
  %2031 = vadd.xlane.f32.xlu0 %v2030
  %v2032 = vpop.xlane.xlu0 %2031
  %v2033 = vmul.f32 %v2029, %v474
  %v2034 = vmul.f32 %v2032, %v474
  %v2035 = vadd.f32 %v2033, 1e-05
  %v2036 = vadd.f32 %v2034, 1e-05
  %v2037 = vrsqrt.pop %v2035
  %v2038 = vmul.f32 %v2037, %v2035
  %v2039 = vmul.f32 %v2038, %v2037
  %v2040 = vmul.f32 0.5, %v2039
  %v2041 = vsub.f32 1.5, %v2040
  %v2042 = vmul.f32 %v2037, %v2041
  %vm2043 = vweird.f32 %v2035
  %vm2044 = vweird.f32 %v2037
  %vm2045 = vmor %vm2043, %vm2044
  %v2046 = vsel %vm2045, %v2037, %v2042
  %v2047 = vrsqrt.pop %v2036
  %v2048 = vmul.f32 %v2047, %v2036
  %v2049 = vmul.f32 %v2048, %v2047
  %v2050 = vmul.f32 0.5, %v2049
  %v2051 = vsub.f32 1.5, %v2050
  %v2052 = vmul.f32 %v2047, %v2051
  %vm2053 = vweird.f32 %v2036
  %vm2054 = vweird.f32 %v2047
  %vm2055 = vmor %vm2053, %vm2054
  %v2056 = vsel %vm2055, %v2047, %v2052
  %v2057 = vmul.f32 %v2023, %v2046
  %v2058 = vmul.f32 %v2024, %v2056
  %v2059 = vmul.f32 %v2057, %v1431
  %v2060 = vmul.f32 %v2058, %v1431
  %v2061 = vadd.f32 %v2059, %v1434
  %v2062 = vadd.f32 %v2060, %v1434
  %v2063 = vpack.c.bf16 %v2062, %v2061
  %v2065 = vsel %vm156, %v2063, 0
  %2067 = vmatpush.bf16.msra.mxu0 0
  %2068 = vmatpush.bf16.msra.mxu0 0
  %2069 = vmatpush.bf16.msra.mxu0 0
  %2070 = vmatpush.bf16.msra.mxu0 0
  %2071 = vmatpush.bf16.msra.mxu0 0
  %2072 = vmatpush.bf16.msra.mxu0 0
  %2073 = vmatpush.bf16.msra.mxu0 %v1453
  %2074 = vmatpush.bf16.msra.mxu0 %v1452
  %2075 = vmatmul.bf16.gmra.mxu0 %v2065
  %v2076 = vpop.f32.mrf.mxu0
  %v2077 = vadd.f32 %v1443, %v2076
  %v2078 = vpop.f32.mrf.mxu0
  %v2079 = vadd.f32 %v1443, %v2078
  %2080 = vdwg.mxu0
  %v2081 = vpack.c.bf16 %v2079, %v2077
  %v2083 = vsel %vm156, %v2081, 0
  %2085 = vmatpush.bf16.xpose.msra.mxu0 0
  %2086 = vmatpush.bf16.xpose.msra.mxu0 0
  %2087 = vmatpush.bf16.xpose.msra.mxu0 0
  %2088 = vmatpush.bf16.xpose.msra.mxu0 0
  %2089 = vmatpush.bf16.xpose.msra.mxu0 %v1489
  %2090 = vmatpush.bf16.xpose.msra.mxu0 %v1486
  %2091 = vmatpush.bf16.xpose.msra.mxu0 %v1483
  %2092 = vmatpush.bf16.xpose.msra.mxu0 %v1480
  %2093 = vmatmul.bf16.gmra.mxu0 %v2083
  %v2094 = vpop.f32.mrf.mxu0
  %v2095 = vadd.f32 %v1473, %v2094
  %v2096 = vpop.f32.mrf.mxu0
  %v2097 = vadd.f32 %v1474, %v2096
  %2098 = vdwg.mxu0
  %v2099 = vsel %vm340, %v2095, -inf
  %2100 = vmax.xlane.f32.xlu0 %v2099
  %v2101 = vpop.xlane.xlu0 %2100
  %v2102 = vsel %vm340, %v2097, -inf
  %2103 = vmax.xlane.f32.xlu0 %v2102
  %v2104 = vpop.xlane.xlu0 %2103
  %v2105 = vsub.f32 %v2095, %v2101
  %v2106 = vsub.f32 %v2097, %v2104
  %v2107 = vmul.f32 %v2105, 1.442695
  %v2108 = vpow.pop %v2107
  %v2109 = vmul.f32 %v2106, 1.442695
  %v2110 = vpow.pop %v2109
  %v2112 = vsel %vm340, %v2108, 0
  %v2115 = vsel %vm340, %v2110, 0
  %2117 = vmatpush.msra.mxu0 0.0
  %2118 = vmatpush.msra.mxu0 0.0
  %2119 = vmatpush.msra.mxu0 0.0
  %2120 = vmatpush.msra.mxu0 0.0
  %2121 = vmatpush.msra.mxu0 0.0
  %2122 = vmatpush.msra.mxu0 0.0
  %2123 = vmatpush.msra.mxu0 0.0
  %2124 = vmatpush.msra.mxu0 0.0
  %2125 = vmatpush.msra.mxu0 %v297
  %2126 = vmatpush.msra.mxu0 %v296
  %2127 = vmatpush.msra.mxu0 %v295
  %2128 = vmatpush.msra.mxu0 %v294
  %2129 = vmatpush.msra.mxu0 %v293
  %2130 = vmatpush.msra.mxu0 %v292
  %2131 = vmatpush.msra.mxu0 %v291
  %2132 = vmatpush.msra.mxu0 %v290
  %2133 = vmatmul.f32.gmra.mxu0 %v2112
  %v2134 = vpop.f32.mrf.mxu0
  %v2135 = vadd.f32 0.0, %v2134
  %2136 = vmatmul.f32.gmra.mxu0 %v2115
  %v2137 = vpop.f32.mrf.mxu0
  %v2138 = vadd.f32 0.0, %v2137
  %2139 = vdwg.mxu0
  %v2140 = vmax.f32 %v2135, 1e-30
  %v2141 = vmax.f32 %v2138, 1e-30
  %v2142 = vrcp.pop %v2140
  %v2143 = vrcp.pop %v2141
  %v2144 = vmul.f32 %v2108, %v2142
  %v2145 = vmul.f32 %v2110, %v2143
  %v2146 = vpack.c.bf16 %v2145, %v2144
  %v2148 = vsel %vm340, %v2146, 0
  %2150 = vmatpush.bf16.msra.mxu0 0
  %2151 = vmatpush.bf16.msra.mxu0 0
  %2152 = vmatpush.bf16.msra.mxu0 0
  %2153 = vmatpush.bf16.msra.mxu0 0
  %2154 = vmatpush.bf16.msra.mxu0 %v1564
  %2155 = vmatpush.bf16.msra.mxu0 %v1562
  %2156 = vmatpush.bf16.msra.mxu0 %v1560
  %2157 = vmatpush.bf16.msra.mxu0 %v1558
  %2158 = vmatmul.bf16.gmra.mxu0 %v2148
  %v2159 = vpop.f32.mrf.mxu0
  %v2160 = vadd.f32 0.0, %v2159
  %v2161 = vpop.f32.mrf.mxu0
  %v2162 = vadd.f32 0.0, %v2161
  %2163 = vdwg.mxu0
  %v2164 = vpack.c.bf16 %v2162, %v2160
  %v2166 = vsel %vm156, %v2164, 0
  %2168 = vmatpush.bf16.msra.mxu0 0
  %2169 = vmatpush.bf16.msra.mxu0 0
  %2170 = vmatpush.bf16.msra.mxu0 0
  %2171 = vmatpush.bf16.msra.mxu0 0
  %2172 = vmatpush.bf16.msra.mxu0 0
  %2173 = vmatpush.bf16.msra.mxu0 0
  %2174 = vmatpush.bf16.msra.mxu0 %v1602
  %2175 = vmatpush.bf16.msra.mxu0 %v1601
  %2176 = vmatmul.bf16.gmra.mxu0 %v2166
  %v2177 = vpop.f32.mrf.mxu0
  %v2178 = vadd.f32 %v1592, %v2177
  %v2179 = vpop.f32.mrf.mxu0
  %v2180 = vadd.f32 %v1592, %v2179
  %2181 = vdwg.mxu0
  %v2182 = vadd.f32 %v2178, %v2061
  %v2183 = vadd.f32 %v2180, %v2062
  %v2184 = vsel %vm156, %v2182, 0.0
  %2185 = vadd.xlane.f32.xlu0 %v2184
  %v2186 = vpop.xlane.xlu0 %2185
  %v2187 = vsel %vm156, %v2183, 0.0
  %2188 = vadd.xlane.f32.xlu0 %v2187
  %v2189 = vpop.xlane.xlu0 %2188
  %v2190 = vmul.f32 %v2186, %v474
  %v2191 = vmul.f32 %v2189, %v474
  %v2192 = vsub.f32 %v2182, %v2190
  %v2193 = vsub.f32 %v2183, %v2191
  %v2194 = vmul.f32 %v2192, %v2192
  %v2195 = vmul.f32 %v2193, %v2193
  %v2196 = vsel %vm156, %v2194, 0.0
  %2197 = vadd.xlane.f32.xlu0 %v2196
  %v2198 = vpop.xlane.xlu0 %2197
  %v2199 = vsel %vm156, %v2195, 0.0
  %2200 = vadd.xlane.f32.xlu0 %v2199
  %v2201 = vpop.xlane.xlu0 %2200
  %v2202 = vmul.f32 %v2198, %v474
  %v2203 = vmul.f32 %v2201, %v474
  %v2204 = vadd.f32 %v2202, 1e-05
  %v2205 = vadd.f32 %v2203, 1e-05
  %v2206 = vrsqrt.pop %v2204
  %v2207 = vmul.f32 %v2206, %v2204
  %v2208 = vmul.f32 %v2207, %v2206
  %v2209 = vmul.f32 0.5, %v2208
  %v2210 = vsub.f32 1.5, %v2209
  %v2211 = vmul.f32 %v2206, %v2210
  %vm2212 = vweird.f32 %v2204
  %vm2213 = vweird.f32 %v2206
  %vm2214 = vmor %vm2212, %vm2213
  %v2215 = vsel %vm2214, %v2206, %v2211
  %v2216 = vrsqrt.pop %v2205
  %v2217 = vmul.f32 %v2216, %v2205
  %v2218 = vmul.f32 %v2217, %v2216
  %v2219 = vmul.f32 0.5, %v2218
  %v2220 = vsub.f32 1.5, %v2219
  %v2221 = vmul.f32 %v2216, %v2220
  %vm2222 = vweird.f32 %v2205
  %vm2223 = vweird.f32 %v2216
  %vm2224 = vmor %vm2222, %vm2223
  %v2225 = vsel %vm2224, %v2216, %v2221
  %v2226 = vmul.f32 %v2192, %v2215
  %v2227 = vmul.f32 %v2193, %v2225
  %v2228 = vmul.f32 %v2226, %v1670
  %v2229 = vmul.f32 %v2227, %v1670
  %v2230 = vadd.f32 %v2228, %v1673
  %v2231 = vadd.f32 %v2229, %v1673
  %v2232 = vpack.c.bf16 %v2231, %v2230
  %v2234 = vsel %vm156, %v2232, 0
  %2236 = vmatpush.bf16.msra.mxu0 0
  %2237 = vmatpush.bf16.msra.mxu0 0
  %2238 = vmatpush.bf16.msra.mxu0 0
  %2239 = vmatpush.bf16.msra.mxu0 0
  %2240 = vmatpush.bf16.msra.mxu0 0
  %2241 = vmatpush.bf16.msra.mxu0 0
  %2242 = vmatpush.bf16.msra.mxu0 %v1692
  %2243 = vmatpush.bf16.msra.mxu0 %v1691
  %2244 = vmatmul.bf16.gmra.mxu0 %v2234
  %v2245 = vpop.f32.mrf.mxu0
  %v2246 = vadd.f32 %v1682, %v2245
  %v2247 = vpop.f32.mrf.mxu0
  %v2248 = vadd.f32 %v1682, %v2247
  %2249 = vdwg.mxu0
  %v2250 = vmax.f32 %v2246, 0.0
  %v2251 = vmax.f32 %v2248, 0.0
  %v2252 = vpack.c.bf16 %v2251, %v2250
  %v2254 = vsel %vm340, %v2252, 0
  %2256 = vmatpush.bf16.msra.mxu0 0
  %2257 = vmatpush.bf16.msra.mxu0 0
  %2258 = vmatpush.bf16.msra.mxu0 0
  %2259 = vmatpush.bf16.msra.mxu0 0
  %2260 = vmatpush.bf16.msra.mxu0 %v1744
  %2261 = vmatpush.bf16.msra.mxu0 %v1743
  %2262 = vmatpush.bf16.msra.mxu0 %v1742
  %2263 = vmatpush.bf16.msra.mxu0 %v1741
  %2264 = vmatmul.bf16.gmra.mxu0 %v2254
  %v2265 = vpop.f32.mrf.mxu0
  %v2266 = vadd.f32 %v1724, %v2265
  %v2267 = vpop.f32.mrf.mxu0
  %v2268 = vadd.f32 %v1724, %v2267
  %2269 = vdwg.mxu0
  %v2270 = vadd.f32 %v2266, %v2230
  %v2271 = vadd.f32 %v2268, %v2231
  %v2272 = vsel %vm156, %v2270, 0.0
  %2273 = vadd.xlane.f32.xlu0 %v2272
  %v2274 = vpop.xlane.xlu0 %2273
  %v2275 = vsel %vm156, %v2271, 0.0
  %2276 = vadd.xlane.f32.xlu0 %v2275
  %v2277 = vpop.xlane.xlu0 %2276
  %v2278 = vmul.f32 %v2274, %v474
  %v2279 = vmul.f32 %v2277, %v474
  %v2280 = vsub.f32 %v2270, %v2278
  %v2281 = vsub.f32 %v2271, %v2279
  %v2282 = vmul.f32 %v2280, %v2280
  %v2283 = vmul.f32 %v2281, %v2281
  %v2284 = vsel %vm156, %v2282, 0.0
  %2285 = vadd.xlane.f32.xlu0 %v2284
  %v2286 = vpop.xlane.xlu0 %2285
  %v2287 = vsel %vm156, %v2283, 0.0
  %2288 = vadd.xlane.f32.xlu0 %v2287
  %v2289 = vpop.xlane.xlu0 %2288
  %v2290 = vmul.f32 %v2286, %v474
  %v2291 = vmul.f32 %v2289, %v474
  %v2292 = vadd.f32 %v2290, 1e-05
  %v2293 = vadd.f32 %v2291, 1e-05
  %v2294 = vrsqrt.pop %v2292
  %v2295 = vmul.f32 %v2294, %v2292
  %v2296 = vmul.f32 %v2295, %v2294
  %v2297 = vmul.f32 0.5, %v2296
  %v2298 = vsub.f32 1.5, %v2297
  %v2299 = vmul.f32 %v2294, %v2298
  %vm2300 = vweird.f32 %v2292
  %vm2301 = vweird.f32 %v2294
  %vm2302 = vmor %vm2300, %vm2301
  %v2303 = vsel %vm2302, %v2294, %v2299
  %v2304 = vrsqrt.pop %v2293
  %v2305 = vmul.f32 %v2304, %v2293
  %v2306 = vmul.f32 %v2305, %v2304
  %v2307 = vmul.f32 0.5, %v2306
  %v2308 = vsub.f32 1.5, %v2307
  %v2309 = vmul.f32 %v2304, %v2308
  %vm2310 = vweird.f32 %v2293
  %vm2311 = vweird.f32 %v2304
  %vm2312 = vmor %vm2310, %vm2311
  %v2313 = vsel %vm2312, %v2304, %v2309
  %v2314 = vmul.f32 %v2280, %v2303
  %v2315 = vmul.f32 %v2281, %v2313
  %v2316 = vmul.f32 %v2314, %v1814
  %v2317 = vmul.f32 %v2315, %v1814
  %v2318 = vadd.f32 %v2316, %v1817
  %v2319 = vadd.f32 %v2317, %v1817
  %v2320 = vpack.c.bf16 %v2319, %v2318
  %v2322 = vsel %vm156, %v2320, 0
  %v2325 = vsel %vm156, %v102, 0
  %v2328 = vsel %vm156, %v103, 0
  %v2331 = vsel %vm156, %v104, 0
  %v2334 = vsel %vm156, %v105, 0
  %v2337 = vsel %vm156, %v106, 0
  %v2340 = vsel %vm156, %v107, 0
  %v2343 = vsel %vm156, %v108, 0
  %v2346 = vsel %vm156, %v109, 0
  %2348 = vmatpush.bf16.xpose.msra.mxu0 %v2346
  %2349 = vmatpush.bf16.xpose.msra.mxu0 %v2343
  %2350 = vmatpush.bf16.xpose.msra.mxu0 %v2340
  %2351 = vmatpush.bf16.xpose.msra.mxu0 %v2337
  %2352 = vmatpush.bf16.xpose.msra.mxu0 %v2334
  %2353 = vmatpush.bf16.xpose.msra.mxu0 %v2331
  %2354 = vmatpush.bf16.xpose.msra.mxu0 %v2328
  %2355 = vmatpush.bf16.xpose.msra.mxu0 %v2325
  %2356 = vmatmul.bf16.gmra.mxu0 %v2322
  %v2357 = vpop.f32.mrf.mxu0
  %v2358 = vadd.f32 0.0, %v2357
  %v2359 = vpop.f32.mrf.mxu0
  %v2360 = vadd.f32 0.0, %v2359
  %2361 = vdwg.mxu0
  %v2362 = vld [vmem:[%s3 + $0x20] sm:$0x1]
  %vm2363 = vcmp.gt.f32.partialorder %v2362, 0.0
  %v2364 = vsel %vm2363, 1, 0
  %v2365 = vperm.slane %v2364, 0
  %vm2366 = vcmp.eq.s32.totalorder %v2365, 1
  %v2367 = vsel %vm2366, %v2358, -1e+09
  %v2368 = vsel %vm2366, %v2360, -1e+09
  %2369 = vmax.xlane.f32.xlu0 %v2367
  %v2370 = vpop.xlane.xlu0 %2369
  %2371 = vmax.xlane.f32.xlu0 %v2368
  %v2372 = vpop.xlane.xlu0 %2371
  %v2373 = vsub.f32 %v2367, %v2370
  %v2374 = vsub.f32 %v2368, %v2372
  %v2375 = vmul.f32 %v2373, 1.442695
  %v2376 = vpow.pop %v2375
  %v2377 = vmul.f32 %v2374, 1.442695
  %v2378 = vpow.pop %v2377
  %2379 = vadd.xlane.f32.xlu0 %v2376
  %v2380 = vpop.xlane.xlu0 %2379
  %2381 = vadd.xlane.f32.xlu0 %v2378
  %v2382 = vpop.xlane.xlu0 %2381
  %v2383 = vlog2.pop %v2380
  %v2384 = vmul.f32 %v2383, 0.6931472
  %v2385 = vlog2.pop %v2382
  %v2386 = vmul.f32 %v2385, 0.6931472
  %v2387 = vsub.f32 %v2373, %v2384
  %v2388 = vsub.f32 %v2374, %v2386
  %2389 = vst [vmem:[%s4] sm:$0xff] %v2387
  %2390 = vst [vmem:[%s4 + $0x8] sm:$0xff] %v2388
  // Predicated region
  $region18: #{transformer_forward.1} parent=0 // pred_check
    _
  $region19: #{transformer_forward.1} parent=0 // pred_check_branch
    %2392 = sbr.rel (0) target = $region21
  $region20: #{transformer_forward.1} parent=0 // pred_region
    _
  $region21: #{transformer_forward.1} parent=0 // pred_fallthru
    _
  // Predicated region
  $region22: #{transformer_forward.1} parent=0 // pred_check
    _
  $region23: #{transformer_forward.1} parent=0 // pred_check_branch
    %2394 = sbr.rel (0) target = $region25
  $region24: #{transformer_forward.1} parent=0 // pred_region
    _
  $region25: #{transformer_forward.1} parent=0 // pred_fallthru
    _

</llo_original>
